<compile_context>
chip_gen: v6e
topology: v6e:2x2x1
jax: 0.10.0
libtpu: 0.0.40
codegen_flags: <defaults>
</compile_context>

<pallas_src>
import functools

import jax
import jax.numpy as jnp
from jax import lax
from jax.experimental import pallas as pl
from jax.experimental.pallas import tpu as pltpu

TAU = 100.0
EPS = 1e-6


def mug_head_kernel(text_ref, video_ref, out_ref, *, tau):
    """One grid step = one (TA text, TB video) tile of the (A, B) logit matrix.

    text_ref : (TA, Tp, D)  pre-normalised, mask-folded, MXU dtype (bf16/f32)
    video_ref: (V, D, TB)   pre-normalised, frame-major, lanes = video batch
    out_ref  : (TA, TB)     float32
    """
    TA, Tp, D = text_ref.shape
    V = video_ref.shape[0]
    TB = out_ref.shape[1]
    f32 = jnp.float32
    neg_inf = jnp.float32(-jnp.inf)

    # (TA, Tp, D) -> (TA*Tp, D): layout-free because Tp % 8 == 0 (wrapper pads).
    t2 = text_ref[...].reshape(TA * Tp, D)
    dims = (((1,), (0,)), ((), ()))                  # plain (M,K) x (K,N) contraction

    def frame_step(fv, carry):
        m_v, den_v, num_v, m3, den3, num3 = carry

        # One lane-dense MXU matmul per frame: (TA*Tp, D) x (D, TB) -> f32.
        l = lax.dot_general(t2, video_ref[fv], dims,
                            preferred_element_type=f32).reshape(TA, Tp, TB)

        # ---- online softmax over the frame axis for t2v ----------------------
        m_new = jnp.maximum(m_v, l)
        alpha = jnp.exp(tau * (m_v - m_new))
        e = jnp.exp(tau * (l - m_new))
        den_v = den_v * alpha + e
        num_v = num_v * alpha + l * e                # masked positions stay exactly 0

        # ---- per-frame v2t: masked softmax over the token axis ---------------
        masked = jnp.where(l == 0.0, neg_inf, l)     # exact zero == padding
        m_t = jnp.max(masked, axis=1, keepdims=True)                 # (TA, 1, TB)
        e_t = jnp.exp(tau * (masked - m_t))
        v2t_f = jnp.sum(l * e_t, axis=1) / jnp.sum(e_t, axis=1)      # (TA, TB)

        # ---- online softmax over the frame axis for the v2t collapse ---------
        m3_new = jnp.maximum(m3, v2t_f)
        a3 = jnp.exp(tau * (m3 - m3_new))
        e3 = jnp.exp(tau * (v2t_f - m3_new))
        den3 = den3 * a3 + e3
        num3 = num3 * a3 + v2t_f * e3

        return m_new, den_v, num_v, m3_new, den3, num3

    init = (jnp.full((TA, Tp, TB), neg_inf, f32),
            jnp.zeros((TA, Tp, TB), f32),
            jnp.zeros((TA, Tp, TB), f32),
            jnp.full((TA, TB), neg_inf, f32),
            jnp.zeros((TA, TB), f32),
            jnp.zeros((TA, TB), f32))
    _, den_v, num_v, _, den3, num3 = lax.fori_loop(
        0, V, frame_step, init, unroll=V <= 16)

    # t2v per (a, token, b); masked positions stay exactly 0 (num_v == 0 there).
    t2v = num_v * pl.reciprocal(den_v, approx=True)                  # (TA, Tp, TB)

    # Collapse the token axis of t2v (exact zeros -> -inf, i.e. padding).
    masked2 = jnp.where(t2v == 0.0, neg_inf, t2v)
    m2 = jnp.max(masked2, axis=1, keepdims=True)
    e2 = jnp.exp(tau * (masked2 - m2))
    t2v_final = jnp.sum(t2v * e2, axis=1) / jnp.sum(e2, axis=1)      # (TA, TB)

    v2t_final = num3 / den3                                          # (TA, TB)

    out_ref[...] = (0.5 * (t2v_final + v2t_final)).astype(out_ref.dtype)


def _pick_tile(n, unit, cap):
    """Largest multiple of `unit` dividing n, capped at `cap`; else n itself."""
    if n % unit:
        return n
    t = min(cap, n)
    t -= t % unit
    while t > 0 and n % t:
        t -= unit
    return t if t > 0 else n


def mug_head_forward(text_feat, video_feat, text_mask, *, tau=TAU,
                     ta=None, tb=None, mxu_dtype=jnp.bfloat16):
    """text_feat (A,T,D), video_feat (B,V,D), text_mask (A,T) -> (A,B) logits."""
    A, T, D = text_feat.shape
    B, V, _ = video_feat.shape
    if text_mask.ndim >= 3:                          # mirrors the module's reshape
        text_mask = text_mask.reshape((-1,) + text_mask.shape[2:])

    f32 = jnp.float32

    # ---- HBM-side prep (plain JAX, done once; hoisted out of the kernel) -----
    # L2-normalise exactly like the reference (a / max(||a||, eps)), fold the 0/1
    # padding mask into the text rows (exact zeros survive the bf16 cast and the
    # MXU), pad T to a multiple of 8 so in-kernel reshapes are layout-free, and
    # lay video out as (V, D, B) so each per-frame RHS is (D, TB) with the
    # video-batch axis on lanes.
    t = text_feat.astype(f32)
    t = t / jnp.maximum(jnp.sqrt(jnp.sum(t * t, axis=-1, keepdims=True)), EPS)
    t = t * text_mask.astype(f32)[..., None]

    v = video_feat.astype(f32)
    v = v / jnp.maximum(jnp.sqrt(jnp.sum(v * v, axis=-1, keepdims=True)), EPS)

    Tp = ((T + 7) // 8) * 8
    if Tp != T:                                      # padded tokens == masked tokens
        t = jnp.pad(t, ((0, 0), (0, Tp - T), (0, 0)))

    t = t.astype(mxu_dtype)                          # (A, Tp, D)
    v_vdb = jnp.transpose(v, (1, 2, 0)).astype(mxu_dtype)   # (V, D, B)

    if ta is None:
        ta = _pick_tile(A, 8, 64)      # sublane axis of output / matmul-M knob
    if tb is None:
        tb = _pick_tile(B, 128, 256)   # lane axis / matmul-N (use tb<=128 on v5e)
    assert A % ta == 0 and (ta % 8 == 0 or ta == A)
    assert B % tb == 0 and (tb % 128 == 0 or tb == B)

    # Explicit VMEM budget (double-buffered inputs + one live slab + accumulators).
    in_bytes = jnp.dtype(mxu_dtype).itemsize
    vmem_need = (2 * ta * Tp * D * in_bytes          # text block
                 + 2 * V * D * tb * in_bytes         # video block
                 + 2 * ta * tb * 4                   # output block
                 + 6 * ta * Tp * tb * 4              # logits slab + online accumulators
                 + 16 * ta * tb * 4)                 # small (TA, TB) temporaries
    vmem_limit = int(min(100 * 1024 * 1024,
                         max(32 * 1024 * 1024, vmem_need * 5 // 4)))

    grid = (A // ta, B // tb)   # j (video) innermost -> text tile stays resident

    kernel = functools.partial(mug_head_kernel, tau=float(tau))
    return pl.pallas_call(
        kernel,
        out_shape=jax.ShapeDtypeStruct((A, B), jnp.float32),
        grid_spec=pltpu.PrefetchScalarGridSpec(
            num_scalar_prefetch=0,
            grid=grid,
            in_specs=[
                pl.BlockSpec((ta, Tp, D), lambda i, j: (i, 0, 0)),
                pl.BlockSpec((V, D, tb), lambda i, j: (0, 0, j)),
            ],
            out_specs=pl.BlockSpec((ta, tb), lambda i, j: (i, j)),
        ),
        compiler_params=pltpu.CompilerParams(
            dimension_semantics=("parallel", "parallel"),
            vmem_limit_bytes=vmem_limit),
    )(t, v_vdb)


def mug_head_reference(text_feat, video_feat, text_mask, tau=TAU,
                       feat_dtype=jnp.float32):
    """Pure-JAX mirror of the PyTorch forward (eval).  `feat_dtype` rounds the
    normalised features the same way the kernel's MXU-operand cast does."""
    def nrm(a):
        n = jnp.sqrt(jnp.sum(a * a, axis=-1, keepdims=True))
        return a / jnp.maximum(n, EPS)

    t = (nrm(text_feat) * text_mask[..., None]).astype(feat_dtype).astype(jnp.float32)
    v = nrm(video_feat).astype(feat_dtype).astype(jnp.float32)
    logits = jnp.einsum('atd,bvd->abtv', t, v,
                        precision=jax.lax.Precision.HIGHEST)
    logits = logits * text_mask[:, None, :, None]
    neg_inf = -jnp.inf

    sm_v = jax.nn.softmax(logits * tau, axis=-1)
    t2v = jnp.sum(logits * sm_v, axis=-1)
    sm_t = jax.nn.softmax(jnp.where(logits == 0.0, neg_inf, logits) * tau, axis=-2)
    v2t = jnp.sum(logits * sm_t, axis=-2)
    sm2t = jax.nn.softmax(jnp.where(t2v == 0.0, neg_inf, t2v) * tau, axis=-1)
    t2v = jnp.sum(t2v * sm2t, axis=2)
    sm2v = jax.nn.softmax(v2t * tau, axis=-1)
    v2t = jnp.sum(v2t * sm2v, axis=2)
    return (t2v + v2t) / 2.0


if __name__ == "__main__":
    A, B, T, V, D = 16, 8, 7, 6, 32   # T=7 exercises the pad-to-multiple-of-8 path

    key = jax.random.PRNGKey(0)
    k1, k2 = jax.random.split(key)
    text_feat = jax.random.normal(k1, (A, T, D), dtype=jnp.float32)
    video_feat = jax.random.normal(k2, (B, V, D), dtype=jnp.float32)

    # deterministic padding mask: 1..T valid tokens per caption (never empty)
    lengths = (jnp.arange(A, dtype=jnp.int32) % T) + 1
    text_mask = (jnp.arange(T)[None, :] < lengths[:, None]).astype(jnp.float32)

    # Default bf16 MXU operands; ta=8 exercises the tiled grid (2, 1).
    out = mug_head_forward(text_feat, video_feat, text_mask, ta=8)
    out = jax.block_until_ready(out)
    assert out.shape == (A, B)
    assert not bool(jnp.any(jnp.isnan(out)))

    # Validate the kernel's reduction/softmax logic against a reference fed the
    # same bf16-quantised normalised features (the declared precision choice).
    ref_bf16 = mug_head_reference(text_feat, video_feat, text_mask,
                                  feat_dtype=jnp.bfloat16)
    assert bool(jnp.allclose(out, ref_bf16, atol=1e-2, rtol=1e-2)), (out, ref_bf16)

    # f32 MXU operands: check the full module semantics against the f32 reference.
    out_f32 = jax.block_until_ready(
        mug_head_forward(text_feat, video_feat, text_mask, ta=8,
                         mxu_dtype=jnp.float32))
    ref_f32 = mug_head_reference(text_feat, video_feat, text_mask)
    assert bool(jnp.allclose(out_f32, ref_f32, atol=1e-2, rtol=1e-2)), (out_f32, ref_f32)

    print("KERNEL_OK")
</pallas_src>

<mosaic_0001>
module attributes {stable_mosaic.version = 11 : i64} {
  func.func @mug_head_kernel(%arg0: i32, %arg1: i32, %arg2: memref<8x8x32xbf16, #tpu.memory_space<vmem>>, %arg3: memref<6x32x8xbf16, #tpu.memory_space<vmem>>, %arg4: memref<8x8xf32, #tpu.memory_space<vmem>>) attributes {dimension_semantics = [#tpu.dimension_semantics<parallel>, #tpu.dimension_semantics<parallel>], iteration_bounds = array<i64: 2, 1>, scalar_prefetch = 0 : i64, scratch_operands = 0 : i64, tpu.core_type = #tpu.core_type<tc>, window_params = [{transform_indices = @transform_0, window_bounds = array<i64: 8, 8, 32>}, {transform_indices = @transform_1, window_bounds = array<i64: 6, 32, 8>}, {transform_indices = @transform_2, window_bounds = array<i64: 8, 8>}]} {
    %c0 = arith.constant 0 : index
    %c0_0 = arith.constant 0 : index
    %c0_1 = arith.constant 0 : index
    %0 = vector.load %arg2[%c0, %c0_0, %c0_1] : memref<8x8x32xbf16, #tpu.memory_space<vmem>>, vector<8x8x32xbf16>
    %1 = vector.shape_cast %0 : vector<8x8x32xbf16> to vector<64x32xbf16>
    %cst = arith.constant 0xFF800000 : f32
    %2 = vector.broadcast %cst : f32 to vector<8x8x8xf32>
    %cst_2 = arith.constant 0.000000e+00 : f32
    %3 = vector.broadcast %cst_2 : f32 to vector<8x8x8xf32>
    %cst_3 = arith.constant 0.000000e+00 : f32
    %4 = vector.broadcast %cst_3 : f32 to vector<8x8x8xf32>
    %cst_4 = arith.constant 0xFF800000 : f32
    %5 = vector.broadcast %cst_4 : f32 to vector<8x8xf32>
    %cst_5 = arith.constant 0.000000e+00 : f32
    %6 = vector.broadcast %cst_5 : f32 to vector<8x8xf32>
    %cst_6 = arith.constant 0.000000e+00 : f32
    %7 = vector.broadcast %cst_6 : f32 to vector<8x8xf32>
    %cst_7 = arith.constant 0xFF800000 : f32
    %c0_i32 = arith.constant 0 : i32
    %8 = arith.index_cast %c0_i32 : i32 to index
    %c0_8 = arith.constant 0 : index
    %c0_9 = arith.constant 0 : index
    %9 = vector.load %arg3[%8, %c0_8, %c0_9] : memref<6x32x8xbf16, #tpu.memory_space<vmem>>, vector<1x32x8xbf16>
    %10 = vector.shape_cast %9 : vector<1x32x8xbf16> to vector<32x8xbf16>
    %cst_10 = arith.constant dense<0.000000e+00> : vector<64x8xf32>
    %11 = tpu.matmul %1, %10, %cst_10 {dimension_numbers = #tpu.dot_dimension_numbers<[1], [0], [0], [1], [0, 0, 1, 1], [], []>} : vector<64x32xbf16>, vector<32x8xbf16>, vector<64x8xf32> -> vector<64x8xf32>
    %12 = vector.shape_cast %11 : vector<64x8xf32> to vector<8x8x8xf32>
    %13 = arith.maximumf %2, %12 : vector<8x8x8xf32>
    %14 = arith.subf %2, %13 : vector<8x8x8xf32>
    %cst_11 = arith.constant 1.000000e+02 : f32
    %15 = vector.broadcast %cst_11 : f32 to vector<8x8x8xf32>
    %16 = arith.mulf %15, %14 : vector<8x8x8xf32>
    %17 = math.exp %16 : vector<8x8x8xf32>
    %18 = arith.subf %12, %13 : vector<8x8x8xf32>
    %cst_12 = arith.constant 1.000000e+02 : f32
    %19 = vector.broadcast %cst_12 : f32 to vector<8x8x8xf32>
    %20 = arith.mulf %19, %18 : vector<8x8x8xf32>
    %21 = math.exp %20 : vector<8x8x8xf32>
    %22 = arith.mulf %3, %17 : vector<8x8x8xf32>
    %23 = arith.addf %22, %21 : vector<8x8x8xf32>
    %24 = arith.mulf %4, %17 : vector<8x8x8xf32>
    %25 = arith.mulf %12, %21 : vector<8x8x8xf32>
    %26 = arith.addf %24, %25 : vector<8x8x8xf32>
    %cst_13 = arith.constant 0.000000e+00 : f32
    %27 = vector.broadcast %cst_13 : f32 to vector<8x8x8xf32>
    %28 = arith.cmpf oeq, %12, %27 : vector<8x8x8xf32>
    %29 = vector.broadcast %cst_7 : f32 to vector<8x8x8xf32>
    %30 = arith.select %28, %29, %12 : vector<8x8x8xi1>, vector<8x8x8xf32>
    %cst_14 = arith.constant dense<0xFF800000> : vector<8x8xf32>
    %31 = vector.multi_reduction <maximumf>, %30, %cst_14 [1] : vector<8x8x8xf32> to vector<8x8xf32>
    %32 = vector.shape_cast %31 : vector<8x8xf32> to vector<8x1x8xf32>
    %33 = vector.broadcast %32 : vector<8x1x8xf32> to vector<8x8x8xf32>
    %34 = arith.subf %30, %33 : vector<8x8x8xf32>
    %cst_15 = arith.constant 1.000000e+02 : f32
    %35 = vector.broadcast %cst_15 : f32 to vector<8x8x8xf32>
    %36 = arith.mulf %35, %34 : vector<8x8x8xf32>
    %37 = math.exp %36 : vector<8x8x8xf32>
    %38 = arith.mulf %12, %37 : vector<8x8x8xf32>
    %cst_16 = arith.constant dense<0.000000e+00> : vector<8x8xf32>
    %39 = vector.multi_reduction <add>, %38, %cst_16 [1] : vector<8x8x8xf32> to vector<8x8xf32>
    %cst_17 = arith.constant dense<0.000000e+00> : vector<8x8xf32>
    %40 = vector.multi_reduction <add>, %37, %cst_17 [1] : vector<8x8x8xf32> to vector<8x8xf32>
    %41 = arith.divf %39, %40 : vector<8x8xf32>
    %42 = arith.maximumf %5, %41 : vector<8x8xf32>
    %43 = arith.subf %5, %42 : vector<8x8xf32>
    %cst_18 = arith.constant 1.000000e+02 : f32
    %44 = vector.broadcast %cst_18 : f32 to vector<8x8xf32>
    %45 = arith.mulf %44, %43 : vector<8x8xf32>
    %46 = math.exp %45 : vector<8x8xf32>
    %47 = arith.subf %41, %42 : vector<8x8xf32>
    %cst_19 = arith.constant 1.000000e+02 : f32
    %48 = vector.broadcast %cst_19 : f32 to vector<8x8xf32>
    %49 = arith.mulf %48, %47 : vector<8x8xf32>
    %50 = math.exp %49 : vector<8x8xf32>
    %51 = arith.mulf %6, %46 : vector<8x8xf32>
    %52 = arith.addf %51, %50 : vector<8x8xf32>
    %53 = arith.mulf %7, %46 : vector<8x8xf32>
    %54 = arith.mulf %41, %50 : vector<8x8xf32>
    %55 = arith.addf %53, %54 : vector<8x8xf32>
    %c1_i32 = arith.constant 1 : i32
    %56 = arith.index_cast %c1_i32 : i32 to index
    %c0_20 = arith.constant 0 : index
    %c0_21 = arith.constant 0 : index
    %57 = vector.load %arg3[%56, %c0_20, %c0_21] : memref<6x32x8xbf16, #tpu.memory_space<vmem>>, vector<1x32x8xbf16>
    %58 = vector.shape_cast %57 : vector<1x32x8xbf16> to vector<32x8xbf16>
    %cst_22 = arith.constant dense<0.000000e+00> : vector<64x8xf32>
    %59 = tpu.matmul %1, %58, %cst_22 {dimension_numbers = #tpu.dot_dimension_numbers<[1], [0], [0], [1], [0, 0, 1, 1], [], []>} : vector<64x32xbf16>, vector<32x8xbf16>, vector<64x8xf32> -> vector<64x8xf32>
    %60 = vector.shape_cast %59 : vector<64x8xf32> to vector<8x8x8xf32>
    %61 = arith.maximumf %13, %60 : vector<8x8x8xf32>
    %62 = arith.subf %13, %61 : vector<8x8x8xf32>
    %cst_23 = arith.constant 1.000000e+02 : f32
    %63 = vector.broadcast %cst_23 : f32 to vector<8x8x8xf32>
    %64 = arith.mulf %63, %62 : vector<8x8x8xf32>
    %65 = math.exp %64 : vector<8x8x8xf32>
    %66 = arith.subf %60, %61 : vector<8x8x8xf32>
    %cst_24 = arith.constant 1.000000e+02 : f32
    %67 = vector.broadcast %cst_24 : f32 to vector<8x8x8xf32>
    %68 = arith.mulf %67, %66 : vector<8x8x8xf32>
    %69 = math.exp %68 : vector<8x8x8xf32>
    %70 = arith.mulf %23, %65 : vector<8x8x8xf32>
    %71 = arith.addf %70, %69 : vector<8x8x8xf32>
    %72 = arith.mulf %26, %65 : vector<8x8x8xf32>
    %73 = arith.mulf %60, %69 : vector<8x8x8xf32>
    %74 = arith.addf %72, %73 : vector<8x8x8xf32>
    %cst_25 = arith.constant 0.000000e+00 : f32
    %75 = vector.broadcast %cst_25 : f32 to vector<8x8x8xf32>
    %76 = arith.cmpf oeq, %60, %75 : vector<8x8x8xf32>
    %77 = vector.broadcast %cst_7 : f32 to vector<8x8x8xf32>
    %78 = arith.select %76, %77, %60 : vector<8x8x8xi1>, vector<8x8x8xf32>
    %cst_26 = arith.constant dense<0xFF800000> : vector<8x8xf32>
    %79 = vector.multi_reduction <maximumf>, %78, %cst_26 [1] : vector<8x8x8xf32> to vector<8x8xf32>
    %80 = vector.shape_cast %79 : vector<8x8xf32> to vector<8x1x8xf32>
    %81 = vector.broadcast %80 : vector<8x1x8xf32> to vector<8x8x8xf32>
    %82 = arith.subf %78, %81 : vector<8x8x8xf32>
    %cst_27 = arith.constant 1.000000e+02 : f32
    %83 = vector.broadcast %cst_27 : f32 to vector<8x8x8xf32>
    %84 = arith.mulf %83, %82 : vector<8x8x8xf32>
    %85 = math.exp %84 : vector<8x8x8xf32>
    %86 = arith.mulf %60, %85 : vector<8x8x8xf32>
    %cst_28 = arith.constant dense<0.000000e+00> : vector<8x8xf32>
    %87 = vector.multi_reduction <add>, %86, %cst_28 [1] : vector<8x8x8xf32> to vector<8x8xf32>
    %cst_29 = arith.constant dense<0.000000e+00> : vector<8x8xf32>
    %88 = vector.multi_reduction <add>, %85, %cst_29 [1] : vector<8x8x8xf32> to vector<8x8xf32>
    %89 = arith.divf %87, %88 : vector<8x8xf32>
    %90 = arith.maximumf %42, %89 : vector<8x8xf32>
    %91 = arith.subf %42, %90 : vector<8x8xf32>
    %cst_30 = arith.constant 1.000000e+02 : f32
    %92 = vector.broadcast %cst_30 : f32 to vector<8x8xf32>
    %93 = arith.mulf %92, %91 : vector<8x8xf32>
    %94 = math.exp %93 : vector<8x8xf32>
    %95 = arith.subf %89, %90 : vector<8x8xf32>
    %cst_31 = arith.constant 1.000000e+02 : f32
    %96 = vector.broadcast %cst_31 : f32 to vector<8x8xf32>
    %97 = arith.mulf %96, %95 : vector<8x8xf32>
    %98 = math.exp %97 : vector<8x8xf32>
    %99 = arith.mulf %52, %94 : vector<8x8xf32>
    %100 = arith.addf %99, %98 : vector<8x8xf32>
    %101 = arith.mulf %55, %94 : vector<8x8xf32>
    %102 = arith.mulf %89, %98 : vector<8x8xf32>
    %103 = arith.addf %101, %102 : vector<8x8xf32>
    %c2_i32 = arith.constant 2 : i32
    %104 = arith.index_cast %c2_i32 : i32 to index
    %c0_32 = arith.constant 0 : index
    %c0_33 = arith.constant 0 : index
    %105 = vector.load %arg3[%104, %c0_32, %c0_33] : memref<6x32x8xbf16, #tpu.memory_space<vmem>>, vector<1x32x8xbf16>
    %106 = vector.shape_cast %105 : vector<1x32x8xbf16> to vector<32x8xbf16>
    %cst_34 = arith.constant dense<0.000000e+00> : vector<64x8xf32>
    %107 = tpu.matmul %1, %106, %cst_34 {dimension_numbers = #tpu.dot_dimension_numbers<[1], [0], [0], [1], [0, 0, 1, 1], [], []>} : vector<64x32xbf16>, vector<32x8xbf16>, vector<64x8xf32> -> vector<64x8xf32>
    %108 = vector.shape_cast %107 : vector<64x8xf32> to vector<8x8x8xf32>
    %109 = arith.maximumf %61, %108 : vector<8x8x8xf32>
    %110 = arith.subf %61, %109 : vector<8x8x8xf32>
    %cst_35 = arith.constant 1.000000e+02 : f32
    %111 = vector.broadcast %cst_35 : f32 to vector<8x8x8xf32>
    %112 = arith.mulf %111, %110 : vector<8x8x8xf32>
    %113 = math.exp %112 : vector<8x8x8xf32>
    %114 = arith.subf %108, %109 : vector<8x8x8xf32>
    %cst_36 = arith.constant 1.000000e+02 : f32
    %115 = vector.broadcast %cst_36 : f32 to vector<8x8x8xf32>
    %116 = arith.mulf %115, %114 : vector<8x8x8xf32>
    %117 = math.exp %116 : vector<8x8x8xf32>
    %118 = arith.mulf %71, %113 : vector<8x8x8xf32>
    %119 = arith.addf %118, %117 : vector<8x8x8xf32>
    %120 = arith.mulf %74, %113 : vector<8x8x8xf32>
    %121 = arith.mulf %108, %117 : vector<8x8x8xf32>
    %122 = arith.addf %120, %121 : vector<8x8x8xf32>
    %cst_37 = arith.constant 0.000000e+00 : f32
    %123 = vector.broadcast %cst_37 : f32 to vector<8x8x8xf32>
    %124 = arith.cmpf oeq, %108, %123 : vector<8x8x8xf32>
    %125 = vector.broadcast %cst_7 : f32 to vector<8x8x8xf32>
    %126 = arith.select %124, %125, %108 : vector<8x8x8xi1>, vector<8x8x8xf32>
    %cst_38 = arith.constant dense<0xFF800000> : vector<8x8xf32>
    %127 = vector.multi_reduction <maximumf>, %126, %cst_38 [1] : vector<8x8x8xf32> to vector<8x8xf32>
    %128 = vector.shape_cast %127 : vector<8x8xf32> to vector<8x1x8xf32>
    %129 = vector.broadcast %128 : vector<8x1x8xf32> to vector<8x8x8xf32>
    %130 = arith.subf %126, %129 : vector<8x8x8xf32>
    %cst_39 = arith.constant 1.000000e+02 : f32
    %131 = vector.broadcast %cst_39 : f32 to vector<8x8x8xf32>
    %132 = arith.mulf %131, %130 : vector<8x8x8xf32>
    %133 = math.exp %132 : vector<8x8x8xf32>
    %134 = arith.mulf %108, %133 : vector<8x8x8xf32>
    %cst_40 = arith.constant dense<0.000000e+00> : vector<8x8xf32>
    %135 = vector.multi_reduction <add>, %134, %cst_40 [1] : vector<8x8x8xf32> to vector<8x8xf32>
    %cst_41 = arith.constant dense<0.000000e+00> : vector<8x8xf32>
    %136 = vector.multi_reduction <add>, %133, %cst_41 [1] : vector<8x8x8xf32> to vector<8x8xf32>
    %137 = arith.divf %135, %136 : vector<8x8xf32>
    %138 = arith.maximumf %90, %137 : vector<8x8xf32>
    %139 = arith.subf %90, %138 : vector<8x8xf32>
    %cst_42 = arith.constant 1.000000e+02 : f32
    %140 = vector.broadcast %cst_42 : f32 to vector<8x8xf32>
    %141 = arith.mulf %140, %139 : vector<8x8xf32>
    %142 = math.exp %141 : vector<8x8xf32>
    %143 = arith.subf %137, %138 : vector<8x8xf32>
    %cst_43 = arith.constant 1.000000e+02 : f32
    %144 = vector.broadcast %cst_43 : f32 to vector<8x8xf32>
    %145 = arith.mulf %144, %143 : vector<8x8xf32>
    %146 = math.exp %145 : vector<8x8xf32>
    %147 = arith.mulf %100, %142 : vector<8x8xf32>
    %148 = arith.addf %147, %146 : vector<8x8xf32>
    %149 = arith.mulf %103, %142 : vector<8x8xf32>
    %150 = arith.mulf %137, %146 : vector<8x8xf32>
    %151 = arith.addf %149, %150 : vector<8x8xf32>
    %c3_i32 = arith.constant 3 : i32
    %152 = arith.index_cast %c3_i32 : i32 to index
    %c0_44 = arith.constant 0 : index
    %c0_45 = arith.constant 0 : index
    %153 = vector.load %arg3[%152, %c0_44, %c0_45] : memref<6x32x8xbf16, #tpu.memory_space<vmem>>, vector<1x32x8xbf16>
    %154 = vector.shape_cast %153 : vector<1x32x8xbf16> to vector<32x8xbf16>
    %cst_46 = arith.constant dense<0.000000e+00> : vector<64x8xf32>
    %155 = tpu.matmul %1, %154, %cst_46 {dimension_numbers = #tpu.dot_dimension_numbers<[1], [0], [0], [1], [0, 0, 1, 1], [], []>} : vector<64x32xbf16>, vector<32x8xbf16>, vector<64x8xf32> -> vector<64x8xf32>
    %156 = vector.shape_cast %155 : vector<64x8xf32> to vector<8x8x8xf32>
    %157 = arith.maximumf %109, %156 : vector<8x8x8xf32>
    %158 = arith.subf %109, %157 : vector<8x8x8xf32>
    %cst_47 = arith.constant 1.000000e+02 : f32
    %159 = vector.broadcast %cst_47 : f32 to vector<8x8x8xf32>
    %160 = arith.mulf %159, %158 : vector<8x8x8xf32>
    %161 = math.exp %160 : vector<8x8x8xf32>
    %162 = arith.subf %156, %157 : vector<8x8x8xf32>
    %cst_48 = arith.constant 1.000000e+02 : f32
    %163 = vector.broadcast %cst_48 : f32 to vector<8x8x8xf32>
    %164 = arith.mulf %163, %162 : vector<8x8x8xf32>
    %165 = math.exp %164 : vector<8x8x8xf32>
    %166 = arith.mulf %119, %161 : vector<8x8x8xf32>
    %167 = arith.addf %166, %165 : vector<8x8x8xf32>
    %168 = arith.mulf %122, %161 : vector<8x8x8xf32>
    %169 = arith.mulf %156, %165 : vector<8x8x8xf32>
    %170 = arith.addf %168, %169 : vector<8x8x8xf32>
    %cst_49 = arith.constant 0.000000e+00 : f32
    %171 = vector.broadcast %cst_49 : f32 to vector<8x8x8xf32>
    %172 = arith.cmpf oeq, %156, %171 : vector<8x8x8xf32>
    %173 = vector.broadcast %cst_7 : f32 to vector<8x8x8xf32>
    %174 = arith.select %172, %173, %156 : vector<8x8x8xi1>, vector<8x8x8xf32>
    %cst_50 = arith.constant dense<0xFF800000> : vector<8x8xf32>
    %175 = vector.multi_reduction <maximumf>, %174, %cst_50 [1] : vector<8x8x8xf32> to vector<8x8xf32>
    %176 = vector.shape_cast %175 : vector<8x8xf32> to vector<8x1x8xf32>
    %177 = vector.broadcast %176 : vector<8x1x8xf32> to vector<8x8x8xf32>
    %178 = arith.subf %174, %177 : vector<8x8x8xf32>
    %cst_51 = arith.constant 1.000000e+02 : f32
    %179 = vector.broadcast %cst_51 : f32 to vector<8x8x8xf32>
    %180 = arith.mulf %179, %178 : vector<8x8x8xf32>
    %181 = math.exp %180 : vector<8x8x8xf32>
    %182 = arith.mulf %156, %181 : vector<8x8x8xf32>
    %cst_52 = arith.constant dense<0.000000e+00> : vector<8x8xf32>
    %183 = vector.multi_reduction <add>, %182, %cst_52 [1] : vector<8x8x8xf32> to vector<8x8xf32>
    %cst_53 = arith.constant dense<0.000000e+00> : vector<8x8xf32>
    %184 = vector.multi_reduction <add>, %181, %cst_53 [1] : vector<8x8x8xf32> to vector<8x8xf32>
    %185 = arith.divf %183, %184 : vector<8x8xf32>
    %186 = arith.maximumf %138, %185 : vector<8x8xf32>
    %187 = arith.subf %138, %186 : vector<8x8xf32>
    %cst_54 = arith.constant 1.000000e+02 : f32
    %188 = vector.broadcast %cst_54 : f32 to vector<8x8xf32>
    %189 = arith.mulf %188, %187 : vector<8x8xf32>
    %190 = math.exp %189 : vector<8x8xf32>
    %191 = arith.subf %185, %186 : vector<8x8xf32>
    %cst_55 = arith.constant 1.000000e+02 : f32
    %192 = vector.broadcast %cst_55 : f32 to vector<8x8xf32>
    %193 = arith.mulf %192, %191 : vector<8x8xf32>
    %194 = math.exp %193 : vector<8x8xf32>
    %195 = arith.mulf %148, %190 : vector<8x8xf32>
    %196 = arith.addf %195, %194 : vector<8x8xf32>
    %197 = arith.mulf %151, %190 : vector<8x8xf32>
    %198 = arith.mulf %185, %194 : vector<8x8xf32>
    %199 = arith.addf %197, %198 : vector<8x8xf32>
    %c4_i32 = arith.constant 4 : i32
    %200 = arith.index_cast %c4_i32 : i32 to index
    %c0_56 = arith.constant 0 : index
    %c0_57 = arith.constant 0 : index
    %201 = vector.load %arg3[%200, %c0_56, %c0_57] : memref<6x32x8xbf16, #tpu.memory_space<vmem>>, vector<1x32x8xbf16>
    %202 = vector.shape_cast %201 : vector<1x32x8xbf16> to vector<32x8xbf16>
    %cst_58 = arith.constant dense<0.000000e+00> : vector<64x8xf32>
    %203 = tpu.matmul %1, %202, %cst_58 {dimension_numbers = #tpu.dot_dimension_numbers<[1], [0], [0], [1], [0, 0, 1, 1], [], []>} : vector<64x32xbf16>, vector<32x8xbf16>, vector<64x8xf32> -> vector<64x8xf32>
    %204 = vector.shape_cast %203 : vector<64x8xf32> to vector<8x8x8xf32>
    %205 = arith.maximumf %157, %204 : vector<8x8x8xf32>
    %206 = arith.subf %157, %205 : vector<8x8x8xf32>
    %cst_59 = arith.constant 1.000000e+02 : f32
    %207 = vector.broadcast %cst_59 : f32 to vector<8x8x8xf32>
    %208 = arith.mulf %207, %206 : vector<8x8x8xf32>
    %209 = math.exp %208 : vector<8x8x8xf32>
    %210 = arith.subf %204, %205 : vector<8x8x8xf32>
    %cst_60 = arith.constant 1.000000e+02 : f32
    %211 = vector.broadcast %cst_60 : f32 to vector<8x8x8xf32>
    %212 = arith.mulf %211, %210 : vector<8x8x8xf32>
    %213 = math.exp %212 : vector<8x8x8xf32>
    %214 = arith.mulf %167, %209 : vector<8x8x8xf32>
    %215 = arith.addf %214, %213 : vector<8x8x8xf32>
    %216 = arith.mulf %170, %209 : vector<8x8x8xf32>
    %217 = arith.mulf %204, %213 : vector<8x8x8xf32>
    %218 = arith.addf %216, %217 : vector<8x8x8xf32>
    %cst_61 = arith.constant 0.000000e+00 : f32
    %219 = vector.broadcast %cst_61 : f32 to vector<8x8x8xf32>
    %220 = arith.cmpf oeq, %204, %219 : vector<8x8x8xf32>
    %221 = vector.broadcast %cst_7 : f32 to vector<8x8x8xf32>
    %222 = arith.select %220, %221, %204 : vector<8x8x8xi1>, vector<8x8x8xf32>
    %cst_62 = arith.constant dense<0xFF800000> : vector<8x8xf32>
    %223 = vector.multi_reduction <maximumf>, %222, %cst_62 [1] : vector<8x8x8xf32> to vector<8x8xf32>
    %224 = vector.shape_cast %223 : vector<8x8xf32> to vector<8x1x8xf32>
    %225 = vector.broadcast %224 : vector<8x1x8xf32> to vector<8x8x8xf32>
    %226 = arith.subf %222, %225 : vector<8x8x8xf32>
    %cst_63 = arith.constant 1.000000e+02 : f32
    %227 = vector.broadcast %cst_63 : f32 to vector<8x8x8xf32>
    %228 = arith.mulf %227, %226 : vector<8x8x8xf32>
    %229 = math.exp %228 : vector<8x8x8xf32>
    %230 = arith.mulf %204, %229 : vector<8x8x8xf32>
    %cst_64 = arith.constant dense<0.000000e+00> : vector<8x8xf32>
    %231 = vector.multi_reduction <add>, %230, %cst_64 [1] : vector<8x8x8xf32> to vector<8x8xf32>
    %cst_65 = arith.constant dense<0.000000e+00> : vector<8x8xf32>
    %232 = vector.multi_reduction <add>, %229, %cst_65 [1] : vector<8x8x8xf32> to vector<8x8xf32>
    %233 = arith.divf %231, %232 : vector<8x8xf32>
    %234 = arith.maximumf %186, %233 : vector<8x8xf32>
    %235 = arith.subf %186, %234 : vector<8x8xf32>
    %cst_66 = arith.constant 1.000000e+02 : f32
    %236 = vector.broadcast %cst_66 : f32 to vector<8x8xf32>
    %237 = arith.mulf %236, %235 : vector<8x8xf32>
    %238 = math.exp %237 : vector<8x8xf32>
    %239 = arith.subf %233, %234 : vector<8x8xf32>
    %cst_67 = arith.constant 1.000000e+02 : f32
    %240 = vector.broadcast %cst_67 : f32 to vector<8x8xf32>
    %241 = arith.mulf %240, %239 : vector<8x8xf32>
    %242 = math.exp %241 : vector<8x8xf32>
    %243 = arith.mulf %196, %238 : vector<8x8xf32>
    %244 = arith.addf %243, %242 : vector<8x8xf32>
    %245 = arith.mulf %199, %238 : vector<8x8xf32>
    %246 = arith.mulf %233, %242 : vector<8x8xf32>
    %247 = arith.addf %245, %246 : vector<8x8xf32>
    %c5_i32 = arith.constant 5 : i32
    %248 = arith.index_cast %c5_i32 : i32 to index
    %c0_68 = arith.constant 0 : index
    %c0_69 = arith.constant 0 : index
    %249 = vector.load %arg3[%248, %c0_68, %c0_69] : memref<6x32x8xbf16, #tpu.memory_space<vmem>>, vector<1x32x8xbf16>
    %250 = vector.shape_cast %249 : vector<1x32x8xbf16> to vector<32x8xbf16>
    %cst_70 = arith.constant dense<0.000000e+00> : vector<64x8xf32>
    %251 = tpu.matmul %1, %250, %cst_70 {dimension_numbers = #tpu.dot_dimension_numbers<[1], [0], [0], [1], [0, 0, 1, 1], [], []>} : vector<64x32xbf16>, vector<32x8xbf16>, vector<64x8xf32> -> vector<64x8xf32>
    %252 = vector.shape_cast %251 : vector<64x8xf32> to vector<8x8x8xf32>
    %253 = arith.maximumf %205, %252 : vector<8x8x8xf32>
    %254 = arith.subf %205, %253 : vector<8x8x8xf32>
    %cst_71 = arith.constant 1.000000e+02 : f32
    %255 = vector.broadcast %cst_71 : f32 to vector<8x8x8xf32>
    %256 = arith.mulf %255, %254 : vector<8x8x8xf32>
    %257 = math.exp %256 : vector<8x8x8xf32>
    %258 = arith.subf %252, %253 : vector<8x8x8xf32>
    %cst_72 = arith.constant 1.000000e+02 : f32
    %259 = vector.broadcast %cst_72 : f32 to vector<8x8x8xf32>
    %260 = arith.mulf %259, %258 : vector<8x8x8xf32>
    %261 = math.exp %260 : vector<8x8x8xf32>
    %262 = arith.mulf %215, %257 : vector<8x8x8xf32>
    %263 = arith.addf %262, %261 : vector<8x8x8xf32>
    %264 = arith.mulf %218, %257 : vector<8x8x8xf32>
    %265 = arith.mulf %252, %261 : vector<8x8x8xf32>
    %266 = arith.addf %264, %265 : vector<8x8x8xf32>
    %cst_73 = arith.constant 0.000000e+00 : f32
    %267 = vector.broadcast %cst_73 : f32 to vector<8x8x8xf32>
    %268 = arith.cmpf oeq, %252, %267 : vector<8x8x8xf32>
    %269 = vector.broadcast %cst_7 : f32 to vector<8x8x8xf32>
    %270 = arith.select %268, %269, %252 : vector<8x8x8xi1>, vector<8x8x8xf32>
    %cst_74 = arith.constant dense<0xFF800000> : vector<8x8xf32>
    %271 = vector.multi_reduction <maximumf>, %270, %cst_74 [1] : vector<8x8x8xf32> to vector<8x8xf32>
    %272 = vector.shape_cast %271 : vector<8x8xf32> to vector<8x1x8xf32>
    %273 = vector.broadcast %272 : vector<8x1x8xf32> to vector<8x8x8xf32>
    %274 = arith.subf %270, %273 : vector<8x8x8xf32>
    %cst_75 = arith.constant 1.000000e+02 : f32
    %275 = vector.broadcast %cst_75 : f32 to vector<8x8x8xf32>
    %276 = arith.mulf %275, %274 : vector<8x8x8xf32>
    %277 = math.exp %276 : vector<8x8x8xf32>
    %278 = arith.mulf %252, %277 : vector<8x8x8xf32>
    %cst_76 = arith.constant dense<0.000000e+00> : vector<8x8xf32>
    %279 = vector.multi_reduction <add>, %278, %cst_76 [1] : vector<8x8x8xf32> to vector<8x8xf32>
    %cst_77 = arith.constant dense<0.000000e+00> : vector<8x8xf32>
    %280 = vector.multi_reduction <add>, %277, %cst_77 [1] : vector<8x8x8xf32> to vector<8x8xf32>
    %281 = arith.divf %279, %280 : vector<8x8xf32>
    %282 = arith.maximumf %234, %281 : vector<8x8xf32>
    %283 = arith.subf %234, %282 : vector<8x8xf32>
    %cst_78 = arith.constant 1.000000e+02 : f32
    %284 = vector.broadcast %cst_78 : f32 to vector<8x8xf32>
    %285 = arith.mulf %284, %283 : vector<8x8xf32>
    %286 = math.exp %285 : vector<8x8xf32>
    %287 = arith.subf %281, %282 : vector<8x8xf32>
    %cst_79 = arith.constant 1.000000e+02 : f32
    %288 = vector.broadcast %cst_79 : f32 to vector<8x8xf32>
    %289 = arith.mulf %288, %287 : vector<8x8xf32>
    %290 = math.exp %289 : vector<8x8xf32>
    %291 = arith.mulf %244, %286 : vector<8x8xf32>
    %292 = arith.addf %291, %290 : vector<8x8xf32>
    %293 = arith.mulf %247, %286 : vector<8x8xf32>
    %294 = arith.mulf %281, %290 : vector<8x8xf32>
    %295 = arith.addf %293, %294 : vector<8x8xf32>
    %c6_i32 = arith.constant 6 : i32
    %296 = tpu.reciprocal %263 {approx = true} : vector<8x8x8xf32> -> vector<8x8x8xf32>
    %297 = arith.mulf %266, %296 : vector<8x8x8xf32>
    %cst_80 = arith.constant 0.000000e+00 : f32
    %298 = vector.broadcast %cst_80 : f32 to vector<8x8x8xf32>
    %299 = arith.cmpf oeq, %297, %298 : vector<8x8x8xf32>
    %cst_81 = arith.constant 0xFF800000 : f32
    %300 = vector.broadcast %cst_81 : f32 to vector<8x8x8xf32>
    %301 = arith.select %299, %300, %297 : vector<8x8x8xi1>, vector<8x8x8xf32>
    %cst_82 = arith.constant dense<0xFF800000> : vector<8x8xf32>
    %302 = vector.multi_reduction <maximumf>, %301, %cst_82 [1] : vector<8x8x8xf32> to vector<8x8xf32>
    %303 = vector.shape_cast %302 : vector<8x8xf32> to vector<8x1x8xf32>
    %304 = vector.broadcast %303 : vector<8x1x8xf32> to vector<8x8x8xf32>
    %305 = arith.subf %301, %304 : vector<8x8x8xf32>
    %cst_83 = arith.constant 1.000000e+02 : f32
    %306 = vector.broadcast %cst_83 : f32 to vector<8x8x8xf32>
    %307 = arith.mulf %306, %305 : vector<8x8x8xf32>
    %308 = math.exp %307 : vector<8x8x8xf32>
    %309 = arith.mulf %297, %308 : vector<8x8x8xf32>
    %cst_84 = arith.constant dense<0.000000e+00> : vector<8x8xf32>
    %310 = vector.multi_reduction <add>, %309, %cst_84 [1] : vector<8x8x8xf32> to vector<8x8xf32>
    %cst_85 = arith.constant dense<0.000000e+00> : vector<8x8xf32>
    %311 = vector.multi_reduction <add>, %308, %cst_85 [1] : vector<8x8x8xf32> to vector<8x8xf32>
    %312 = arith.divf %310, %311 : vector<8x8xf32>
    %313 = arith.divf %295, %292 : vector<8x8xf32>
    %314 = arith.addf %312, %313 : vector<8x8xf32>
    %cst_86 = arith.constant 5.000000e-01 : f32
    %315 = vector.broadcast %cst_86 : f32 to vector<8x8xf32>
    %316 = arith.mulf %315, %314 : vector<8x8xf32>
    %c0_87 = arith.constant 0 : index
    %c0_88 = arith.constant 0 : index
    %317 = vector.load %arg4[%c0_87, %c0_88] : memref<8x8xf32, #tpu.memory_space<vmem>>, vector<8x8xf32>
    tpu.vector_store %arg4[%c0_87, %c0_88], %316 {strides = array<i32>} : memref<8x8xf32, #tpu.memory_space<vmem>>, vector<8x8xf32>,
    return
  }
  func.func @transform_0(%arg0: i32, %arg1: i32) -> (i32, i32, i32) {
    %c0_i32 = arith.constant 0 : i32
    %c0_i32_0 = arith.constant 0 : i32
    %c0_i32_1 = arith.constant 0 : i32
    return %arg0, %c0_i32, %c0_i32_0 : i32, i32, i32
  }
  func.func @transform_1(%arg0: i32, %arg1: i32) -> (i32, i32, i32) {
    %c0_i32 = arith.constant 0 : i32
    %c0_i32_0 = arith.constant 0 : i32
    %c0_i32_1 = arith.constant 0 : i32
    return %c0_i32, %c0_i32_0, %arg1 : i32, i32, i32
  }
  func.func @transform_2(%arg0: i32, %arg1: i32) -> (i32, i32) {
    %c0_i32 = arith.constant 0 : i32
    return %arg0, %arg1 : i32, i32
  }
}

</mosaic_0001>

<llo_original>
// kernel: tpu_custom_call.1
$region0: #{tpu_custom_call.1}
  #allocation0 [shape = 'u32[]', space=smem, size = 0x4, offset = 0x4, fixed_abs, tag = 'smem constant byte address 0x4 - core index']
  #allocation1 [shape = 'u32[144,128]{1,0:T(1,128)}', space=vmem, size = 0x12000, scoped, tag = 'internal scratch']
  %s0 = inlined_call_operand.vmem [shape: bf16[16,8,32], index: 0, kind: input, shape index: {}]
  %s1 = inlined_call_operand.vmem [shape: bf16[6,32,8], index: 1, kind: input, shape index: {}]
  %s2 = inlined_call_operand.vmem [shape: f32[16,8], index: 2, kind: output, shape index: {}]
  %s3 = sld [smem:[#allocation0]]
  $region41: #{tpu_custom_call.1} parent=0
    _
  %s5 = ssub.s32 1, %s3
  %s6 = scalar_select 0, %s5, %s3
  loop: start=0, step=1, limit=4
  $region2: #{tpu_custom_call.1} parent=0 // loop_pre_header
    _
  $region3: #{tpu_custom_call.1} parent=0 // loop_header
    %s8 = sphi 0, %s12
    %p9 = scmp.ge.s32.totalorder %s8, 4
    %s15 = sphi 0, %s27
    %s16 = sphi 0, %s23
    %s17 = sphi 0, %s15
    %s18 = sphi 0, %s16
    %s19 = sphi 0, %s17
    %s20 = sphi 0, %s18
    %s30 = sphi 0, %s32
    %s33 = sphi 0, %s30
    %s34 = sphi 0, %s33
    %s50 = sphi 0, %s34
    %s56 = sphi 0, %s58
    %s59 = sphi 0, %s56
    %s60 = sphi 0, %s59
    %s76 = sphi 0, %s60
    %s84 = sphi 0, %s86
    %s87 = sphi 0, %s84
    %s88 = sphi 0, %s87
    %s104 = sphi 0, %s88
  $region4: #{tpu_custom_call.1} parent=0 // loop_header_branch
    %11 = sbr.rel (%p9) target = $region8
  $region5: #{tpu_custom_call.1} parent=0 // loop_body
    %s13 = ssub.s32 %s8, 1
    %s14 = ssub.s32 %s8, 2
    %s21 = sadd.s32 1, %s16
    %p22 = scmp.ge.s32.totalorder %s21, 1
    %s23 = scalar_select %p22, 0, %s21
    %s24 = sadd.s32 1, %s15
    %s25 = scalar_select %p22, %s24, %s15
    %p26 = scmp.ge.s32.totalorder %s25, 2
    %s27 = scalar_select %p26, 0, %s25
    %s28 = ssub.s32 %s15, %s27
    %p29 = scmp.eq.s32.totalorder %s28, 0
    %s31 = sadd.s32 %s30, 1
    %s32 = scalar_select %p29, %s30, %s31
    %p35 = pneg %p29
    %p36 = scmp.eq.s32.totalorder %s8, 1
    %p37 = por %p35, %p36
    %p38 = scmp.ne.s32.totalorder %s30, %s33
    %p39 = scmp.eq.s32.totalorder %s8, 0
    %p40 = por %p38, %p39
    %p41 = scmp.ne.s32.totalorder %s30, %s33
    %p42 = scmp.eq.s32.totalorder %s13, 1
    %p43 = por %p41, %p42
    %p44 = scmp.ne.s32.totalorder %s33, %s34
    %p45 = scmp.eq.s32.totalorder %s13, 0
    %p46 = por %p44, %p45
    %p47 = scmp.ne.s32.totalorder %s33, %s34
    %p48 = scmp.eq.s32.totalorder %s14, 1
    %p49 = por %p47, %p48
    %p51 = scmp.ne.s32.totalorder %s34, %s50
    %p52 = scmp.eq.s32.totalorder %s14, 0
    %p53 = por %p51, %p52
    %s54 = ssub.s32 %s16, %s23
    %p55 = scmp.eq.s32.totalorder %s54, 0
    %s57 = sadd.s32 %s56, 1
    %s58 = scalar_select %p55, %s56, %s57
    %p61 = pneg %p55
    %p62 = scmp.eq.s32.totalorder %s8, 1
    %p63 = por %p61, %p62
    %p64 = scmp.ne.s32.totalorder %s56, %s59
    %p65 = scmp.eq.s32.totalorder %s8, 0
    %p66 = por %p64, %p65
    %p67 = scmp.ne.s32.totalorder %s56, %s59
    %p68 = scmp.eq.s32.totalorder %s13, 1
    %p69 = por %p67, %p68
    %p70 = scmp.ne.s32.totalorder %s59, %s60
    %p71 = scmp.eq.s32.totalorder %s13, 0
    %p72 = por %p70, %p71
    %p73 = scmp.ne.s32.totalorder %s59, %s60
    %p74 = scmp.eq.s32.totalorder %s14, 1
    %p75 = por %p73, %p74
    %p77 = scmp.ne.s32.totalorder %s60, %s76
    %p78 = scmp.eq.s32.totalorder %s14, 0
    %p79 = por %p77, %p78
    %s80 = ssub.s32 %s15, %s27
    %s81 = ssub.s32 %s16, %s23
    %s82 = sor.u32 %s80, %s81
    %p83 = scmp.eq.s32.totalorder %s82, 0
    %s85 = sadd.s32 %s84, 1
    %s86 = scalar_select %p83, %s84, %s85
    %p89 = pneg %p83
    %p90 = scmp.eq.s32.totalorder %s8, 1
    %p91 = por %p89, %p90
    %p92 = scmp.ne.s32.totalorder %s84, %s87
    %p93 = scmp.eq.s32.totalorder %s8, 0
    %p94 = por %p92, %p93
    %p95 = scmp.ne.s32.totalorder %s84, %s87
    %p96 = scmp.eq.s32.totalorder %s13, 1
    %p97 = por %p95, %p96
    %p98 = scmp.ne.s32.totalorder %s87, %s88
    %p99 = scmp.eq.s32.totalorder %s13, 0
    %p100 = por %p98, %p99
    %p101 = scmp.ne.s32.totalorder %s87, %s88
    %p102 = scmp.eq.s32.totalorder %s14, 1
    %p103 = por %p101, %p102
    %p105 = scmp.ne.s32.totalorder %s88, %s104
    %p106 = scmp.eq.s32.totalorder %s14, 0
    %p107 = por %p105, %p106
    %p108 = scmp.le.s32.totalorder 1, %s8
    %p109 = scmp.lt.s32.totalorder %s8, 3
    %p110 = pnand %p108, %p109
    %p111 = pneg %p110
    // Predicated region
    $region9: #{tpu_custom_call.1} parent=5 // pred_check
      _
    $region10: #{tpu_custom_call.1} parent=5 // pred_check_branch
      %113 = sbr.rel (%p110) target = $region12
    $region11: #{tpu_custom_call.1} parent=5 // pred_region
      %s114 = ssub.s32 %s8, 1
      // Predicated region
      $region13: #{tpu_custom_call.1} parent=11 // pred_check
        %p115 = pneg %p72
      $region14: #{tpu_custom_call.1} parent=11 // pred_check_branch
        %117 = sbr.rel (%p115) target = $region16
      $region15: #{tpu_custom_call.1} parent=11 // pred_region
        %p118 = scmp.lt.s32.totalorder %s18, 0
        %s119 = scalar_select %p118, %s18, 0
        %s120 = smul.addr %s119, 4
        %s121 = scalar_lea.vmem %s1, %s120
      $region16: #{tpu_custom_call.1} parent=11 // pred_fallthru
        _
    $region12: #{tpu_custom_call.1} parent=5 // pred_fallthru
      _
    %p122 = scmp.lt.s32.totalorder %s8, 2
    // Predicated region
    $region17: #{tpu_custom_call.1} parent=5 // pred_check
      %p123 = pneg %p122
    $region18: #{tpu_custom_call.1} parent=5 // pred_check_branch
      %125 = sbr.rel (%p123) target = $region20
    $region19: #{tpu_custom_call.1} parent=5 // pred_region
      // Predicated region
      $region21: #{tpu_custom_call.1} parent=19 // pred_check
        %p126 = pneg %p40
      $region22: #{tpu_custom_call.1} parent=19 // pred_check_branch
        %128 = sbr.rel (%p126) target = $region24
      $region23: #{tpu_custom_call.1} parent=19 // pred_region
        %s129 = smul.u32 8, %s15
        %p130 = scmp.lt.s32.totalorder %s129, 15
        %s131 = scalar_select %p130, %s129, 15
        %s132 = smul.addr %s131, 4
        %s133 = scalar_lea.vmem %s0, %s132
        %s134 = smul.u32 8, %s15
      $region24: #{tpu_custom_call.1} parent=19 // pred_fallthru
        _
    $region20: #{tpu_custom_call.1} parent=5 // pred_fallthru
      _
    %p135 = scmp.le.s32.totalorder 1, %s8
    %p136 = scmp.lt.s32.totalorder %s8, 3
    %p137 = pnand %p135, %p136
    %p138 = pneg %p137
    // Predicated region
    $region25: #{tpu_custom_call.1} parent=5 // pred_check
      _
    $region26: #{tpu_custom_call.1} parent=5 // pred_check_branch
      %140 = sbr.rel (%p137) target = $region28
    $region27: #{tpu_custom_call.1} parent=5 // pred_region
      %s141 = ssub.s32 %s8, 1
      %s142 = smul.u32 8, %s17
      %p143 = scmp.lt.s32.totalorder %s142, 15
      %s144 = scalar_select %p143, %s142, 15
      %s145 = smul.addr %s144, 4
      %s146 = scalar_lea.vmem %s0, %s145
      %p147 = pneg %p46
      %p148 = pneg %p43
      %p149 = scmp.lt.s32.totalorder %s18, 0
      %s150 = scalar_select %p149, %s18, 0
      %s151 = smul.addr %s150, 4
      %s152 = scalar_lea.vmem %s1, %s151
      %p153 = pneg %p72
      %p154 = pneg %p69
      %p155 = pneg %p100
      %p156 = pneg %p97
      %p157 = scmp.lt.s32.totalorder %s17, 1
      %s158 = scalar_select %p157, %s17, 1
      %p159 = scmp.lt.s32.totalorder %s18, 0
      %s160 = scalar_select %p159, %s18, 0
      %s161 = sadd.s32 %s160, %s158
      %s162 = smul.addr %s161, 8
      %s163 = scalar_lea.vmem %s2, %s162
      %s164 = smul.u32 8, %s17
      %p165 = scmp.lt.s32.totalorder %s164, 15
      %s166 = scalar_select %p165, %s164, 15
      %s167 = smul.addr %s166, 4
      %s168 = scalar_lea.vmem %s0, %s167
      %s169 = smul.u32 8, %s17
      %p170 = scmp.lt.s32.totalorder %s18, 0
      %s171 = scalar_select %p170, %s18, 0
      %s172 = smul.addr %s171, 4
      %s173 = scalar_lea.vmem %s1, %s172
      %p174 = scmp.lt.s32.totalorder %s17, 1
      %s175 = scalar_select %p174, %s17, 1
      %p176 = scmp.lt.s32.totalorder %s18, 0
      %s177 = scalar_select %p176, %s18, 0
      %s178 = sadd.s32 %s177, %s175
      %s179 = smul.addr %s178, 8
      %s180 = scalar_lea.vmem %s2, %s179
      %v182 = vld [vmem:[%s168] sm:$0xf]
      %v183 = vld [vmem:[%s168 + $0x4] sm:$0xf]
      %v184 = vld [vmem:[%s168 + $0x8] sm:$0xf]
      %v185 = vld [vmem:[%s168 + $0xc] sm:$0xf]
      %v186 = vld [vmem:[%s168 + $0x10] sm:$0xf]
      %v187 = vld [vmem:[%s168 + $0x14] sm:$0xf]
      %v188 = vld [vmem:[%s168 + $0x18] sm:$0xf]
      %v189 = vld [vmem:[%s168 + $0x1c] sm:$0xf]
      %v190 = vld [vmem:[%s173] sm:$0xf]
      %v191 = vld [vmem:[%s173 + $0x4] sm:$0xf]
      %v192 = vld [vmem:[%s173 + $0x8] sm:$0xf]
      %v193 = vld [vmem:[%s173 + $0xc] sm:$0xf]
      %v202 = vunpack.c.l.b16 %v182
      %v203 = vunpack.c.l.b16 %v183
      %v204 = vunpack.c.l.b16 %v184
      %v205 = vunpack.c.l.b16 %v185
      %v206 = vunpack.c.l.b16 %v186
      %v207 = vunpack.c.l.b16 %v187
      %v208 = vunpack.c.l.b16 %v188
      %v209 = vunpack.c.l.b16 %v189
      %v210 = vpack.c.b16 %v203, %v202
      %v211 = vpack.c.b16 %v205, %v204
      %v212 = vpack.c.b16 %v207, %v206
      %v213 = vpack.c.b16 %v209, %v208
      %v218 = vunpack.c.l.b16 %v190
      %v219 = vunpack.c.l.b16 %v191
      %v220 = vunpack.c.l.b16 %v192
      %v221 = vunpack.c.l.b16 %v193
      %v222 = vpack.c.b16 %v219, %v218
      %v223 = vpack.c.b16 %v221, %v220
      %vm226 = vcmask 261120
      %v228 = vsel %vm226, %v210, 0
      %v231 = vsel %vm226, %v211, 0
      %v234 = vsel %vm226, %v212, 0
      %v237 = vsel %vm226, %v213, 0
      %239 = vmatprep.subr.bf16.mxu0 0
      %240 = vmatpush1.bf16.msra.mxu0 0
      %241 = vmatprep.subr.bf16.mxu0 0
      %242 = vmatpush1.bf16.msra.mxu0 0
      %243 = vmatprep.subr.bf16.mxu0 0
      %244 = vmatpush1.bf16.msra.mxu0 0
      %245 = vmatprep.subr.bf16.mxu0 0
      %246 = vmatpush1.bf16.msra.mxu0 0
      %247 = vmatprep.subr.bf16.mxu0 0
      %248 = vmatpush1.bf16.msra.mxu0 0
      %249 = vmatprep.subr.bf16.mxu0 0
      %250 = vmatpush1.bf16.msra.mxu0 0
      %251 = vmatprep.subr.bf16.mxu0 0
      %252 = vmatpush1.bf16.msra.mxu0 %v223
      %253 = vmatprep.subr.bf16.mxu0 0
      %254 = vmatpush1.bf16.msra.mxu0 %v222
      %255 = vmatprep.subr.bf16.mxu0 0
      %256 = vmatpush2.bf16.msra.mxu0 0
      %257 = vmatprep.subr.bf16.mxu0 0
      %258 = vmatpush2.bf16.msra.mxu0 0
      %259 = vmatprep.subr.bf16.mxu0 0
      %260 = vmatpush2.bf16.msra.mxu0 0
      %261 = vmatprep.subr.bf16.mxu0 0
      %262 = vmatpush2.bf16.msra.mxu0 0
      %263 = vmatprep.subr.bf16.mxu0 0
      %264 = vmatpush2.bf16.msra.mxu0 0
      %265 = vmatprep.subr.bf16.mxu0 0
      %266 = vmatpush2.bf16.msra.mxu0 0
      %267 = vmatprep.subr.bf16.mxu0 0
      %268 = vmatpush2.bf16.msra.mxu0 0
      %269 = vmatprep.subr.bf16.mxu0 0
      %270 = vmatpush2.bf16.msra.mxu0 0
      %271 = vmatprep.mubr.bf16.mxu0 0
      %272 = vmatmul.mubr.bf16.gmra.mxu0 %v228
      %v273 = vpop.f32.mrf.mxu0
      %v274 = vadd.f32 0.0, %v273
      %v275 = vpop.f32.mrf.mxu0
      %v276 = vpop.f32.mrf.mxu0
      %v277 = vadd.f32 0.0, %v276
      %v278 = vpop.f32.mrf.mxu0
      %279 = vmatprep.mubr.bf16.mxu0 0
      %280 = vmatmul.mubr.bf16.gmra.mxu0 %v231
      %v281 = vpop.f32.mrf.mxu0
      %v282 = vadd.f32 0.0, %v281
      %v283 = vpop.f32.mrf.mxu0
      %v284 = vpop.f32.mrf.mxu0
      %v285 = vadd.f32 0.0, %v284
      %v286 = vpop.f32.mrf.mxu0
      %287 = vmatprep.mubr.bf16.mxu0 0
      %288 = vmatmul.mubr.bf16.gmra.mxu0 %v234
      %v289 = vpop.f32.mrf.mxu0
      %v290 = vadd.f32 0.0, %v289
      %v291 = vpop.f32.mrf.mxu0
      %v292 = vpop.f32.mrf.mxu0
      %v293 = vadd.f32 0.0, %v292
      %v294 = vpop.f32.mrf.mxu0
      %295 = vmatprep.mubr.bf16.mxu0 0
      %296 = vmatmul.mubr.bf16.gmra.mxu0 %v237
      %v297 = vpop.f32.mrf.mxu0
      %v298 = vadd.f32 0.0, %v297
      %v299 = vpop.f32.mrf.mxu0
      %v300 = vpop.f32.mrf.mxu0
      %v301 = vadd.f32 0.0, %v300
      %v302 = vpop.f32.mrf.mxu0
      %303 = vdwg.mxu0
      %v304 = vsub.f32 -inf, %v274
      %v305 = vsub.f32 -inf, %v277
      %v306 = vsub.f32 -inf, %v282
      %v307 = vsub.f32 -inf, %v285
      %v308 = vsub.f32 -inf, %v290
      %v309 = vsub.f32 -inf, %v293
      %v310 = vsub.f32 -inf, %v298
      %v311 = vsub.f32 -inf, %v301
      %v312 = vmul.f32 %v304, 100.0
      %v313 = vmul.f32 %v305, 100.0
      %v314 = vmul.f32 %v306, 100.0
      %v315 = vmul.f32 %v307, 100.0
      %v316 = vmul.f32 %v308, 100.0
      %v317 = vmul.f32 %v309, 100.0
      %v318 = vmul.f32 %v310, 100.0
      %v319 = vmul.f32 %v311, 100.0
      %v320 = vmul.f32 %v312, 1.442695
      %v321 = vpow.pop %v320
      %v322 = vmul.f32 %v313, 1.442695
      %v323 = vpow.pop %v322
      %v324 = vmul.f32 %v314, 1.442695
      %v325 = vpow.pop %v324
      %v326 = vmul.f32 %v315, 1.442695
      %v327 = vpow.pop %v326
      %v328 = vmul.f32 %v316, 1.442695
      %v329 = vpow.pop %v328
      %v330 = vmul.f32 %v317, 1.442695
      %v331 = vpow.pop %v330
      %v332 = vmul.f32 %v318, 1.442695
      %v333 = vpow.pop %v332
      %v334 = vmul.f32 %v319, 1.442695
      %v335 = vpow.pop %v334
      %v336 = vsub.f32 %v274, %v274
      %v337 = vsub.f32 %v277, %v277
      %v338 = vsub.f32 %v282, %v282
      %v339 = vsub.f32 %v285, %v285
      %v340 = vsub.f32 %v290, %v290
      %v341 = vsub.f32 %v293, %v293
      %v342 = vsub.f32 %v298, %v298
      %v343 = vsub.f32 %v301, %v301
      %v344 = vmul.f32 %v336, 100.0
      %v345 = vmul.f32 %v337, 100.0
      %v346 = vmul.f32 %v338, 100.0
      %v347 = vmul.f32 %v339, 100.0
      %v348 = vmul.f32 %v340, 100.0
      %v349 = vmul.f32 %v341, 100.0
      %v350 = vmul.f32 %v342, 100.0
      %v351 = vmul.f32 %v343, 100.0
      %v352 = vmul.f32 %v344, 1.442695
      %v353 = vpow.pop %v352
      %v354 = vmul.f32 %v345, 1.442695
      %v355 = vpow.pop %v354
      %v356 = vmul.f32 %v346, 1.442695
      %v357 = vpow.pop %v356
      %v358 = vmul.f32 %v347, 1.442695
      %v359 = vpow.pop %v358
      %v360 = vmul.f32 %v348, 1.442695
      %v361 = vpow.pop %v360
      %v362 = vmul.f32 %v349, 1.442695
      %v363 = vpow.pop %v362
      %v364 = vmul.f32 %v350, 1.442695
      %v365 = vpow.pop %v364
      %v366 = vmul.f32 %v351, 1.442695
      %v367 = vpow.pop %v366
      %v368 = vmul.f32 %v321, 0.0
      %v369 = vmul.f32 %v323, 0.0
      %v370 = vmul.f32 %v325, 0.0
      %v371 = vmul.f32 %v327, 0.0
      %v372 = vmul.f32 %v329, 0.0
      %v373 = vmul.f32 %v331, 0.0
      %v374 = vmul.f32 %v333, 0.0
      %v375 = vmul.f32 %v335, 0.0
      %v376 = vadd.f32 %v368, %v353
      %v377 = vadd.f32 %v369, %v355
      %v378 = vadd.f32 %v370, %v357
      %v379 = vadd.f32 %v371, %v359
      %v380 = vadd.f32 %v372, %v361
      %v381 = vadd.f32 %v373, %v363
      %v382 = vadd.f32 %v374, %v365
      %v383 = vadd.f32 %v375, %v367
      %v384 = vmul.f32 %v274, %v353
      %v385 = vmul.f32 %v277, %v355
      %v386 = vmul.f32 %v282, %v357
      %v387 = vmul.f32 %v285, %v359
      %v388 = vmul.f32 %v290, %v361
      %v389 = vmul.f32 %v293, %v363
      %v390 = vmul.f32 %v298, %v365
      %v391 = vmul.f32 %v301, %v367
      %v392 = vadd.f32 %v368, %v384
      %v393 = vadd.f32 %v369, %v385
      %v394 = vadd.f32 %v370, %v386
      %v395 = vadd.f32 %v371, %v387
      %v396 = vadd.f32 %v372, %v388
      %v397 = vadd.f32 %v373, %v389
      %v398 = vadd.f32 %v374, %v390
      %v399 = vadd.f32 %v375, %v391
      %vm400 = vcmp.eq.f32.partialorder %v274, 0.0
      %vm401 = vcmp.eq.f32.partialorder %v277, 0.0
      %vm402 = vcmp.eq.f32.partialorder %v282, 0.0
      %vm403 = vcmp.eq.f32.partialorder %v285, 0.0
      %vm404 = vcmp.eq.f32.partialorder %v290, 0.0
      %vm405 = vcmp.eq.f32.partialorder %v293, 0.0
      %vm406 = vcmp.eq.f32.partialorder %v298, 0.0
      %vm407 = vcmp.eq.f32.partialorder %v301, 0.0
      %v408 = vsel %vm400, -inf, %v274
      %v409 = vsel %vm401, -inf, %v277
      %v410 = vsel %vm402, -inf, %v282
      %v411 = vsel %vm403, -inf, %v285
      %v412 = vsel %vm404, -inf, %v290
      %v413 = vsel %vm405, -inf, %v293
      %v414 = vsel %vm406, -inf, %v298
      %v415 = vsel %vm407, -inf, %v301
      %vm416 = vcmask 64512
      %v417 = vsel %vm416, %v408, -inf
      %v418 = vrot.slane %v417, 4
      %v419 = vmax.f32 %v417, %v418
      %v420 = vrot.slane %v419, 2
      %v421 = vmax.f32 %v419, %v420
      %v422 = vrot.slane %v421, 1
      %v423 = vmax.f32 %v421, %v422
      %v424 = vsel %vm416, %v409, -inf
      %v425 = vrot.slane %v424, 4
      %v426 = vmax.f32 %v424, %v425
      %v427 = vrot.slane %v426, 2
      %v428 = vmax.f32 %v426, %v427
      %v429 = vrot.slane %v428, 1
      %v430 = vmax.f32 %v428, %v429
      %v431 = vsel %vm416, %v410, -inf
      %v432 = vrot.slane %v431, 4
      %v433 = vmax.f32 %v431, %v432
      %v434 = vrot.slane %v433, 2
      %v435 = vmax.f32 %v433, %v434
      %v436 = vrot.slane %v435, 1
      %v437 = vmax.f32 %v435, %v436
      %v438 = vsel %vm416, %v411, -inf
      %v439 = vrot.slane %v438, 4
      %v440 = vmax.f32 %v438, %v439
      %v441 = vrot.slane %v440, 2
      %v442 = vmax.f32 %v440, %v441
      %v443 = vrot.slane %v442, 1
      %v444 = vmax.f32 %v442, %v443
      %v445 = vsel %vm416, %v412, -inf
      %v446 = vrot.slane %v445, 4
      %v447 = vmax.f32 %v445, %v446
      %v448 = vrot.slane %v447, 2
      %v449 = vmax.f32 %v447, %v448
      %v450 = vrot.slane %v449, 1
      %v451 = vmax.f32 %v449, %v450
      %v452 = vsel %vm416, %v413, -inf
      %v453 = vrot.slane %v452, 4
      %v454 = vmax.f32 %v452, %v453
      %v455 = vrot.slane %v454, 2
      %v456 = vmax.f32 %v454, %v455
      %v457 = vrot.slane %v456, 1
      %v458 = vmax.f32 %v456, %v457
      %v459 = vsel %vm416, %v414, -inf
      %v460 = vrot.slane %v459, 4
      %v461 = vmax.f32 %v459, %v460
      %v462 = vrot.slane %v461, 2
      %v463 = vmax.f32 %v461, %v462
      %v464 = vrot.slane %v463, 1
      %v465 = vmax.f32 %v463, %v464
      %v466 = vsel %vm416, %v415, -inf
      %v467 = vrot.slane %v466, 4
      %v468 = vmax.f32 %v466, %v467
      %v469 = vrot.slane %v468, 2
      %v470 = vmax.f32 %v468, %v469
      %v471 = vrot.slane %v470, 1
      %v472 = vmax.f32 %v470, %v471
      %v473 = vsub.f32 %v408, %v423
      %v474 = vsub.f32 %v409, %v430
      %v475 = vsub.f32 %v410, %v437
      %v476 = vsub.f32 %v411, %v444
      %v477 = vsub.f32 %v412, %v451
      %v478 = vsub.f32 %v413, %v458
      %v479 = vsub.f32 %v414, %v465
      %v480 = vsub.f32 %v415, %v472
      %v481 = vmul.f32 %v473, 100.0
      %v482 = vmul.f32 %v474, 100.0
      %v483 = vmul.f32 %v475, 100.0
      %v484 = vmul.f32 %v476, 100.0
      %v485 = vmul.f32 %v477, 100.0
      %v486 = vmul.f32 %v478, 100.0
      %v487 = vmul.f32 %v479, 100.0
      %v488 = vmul.f32 %v480, 100.0
      %v489 = vmul.f32 %v481, 1.442695
      %v490 = vpow.pop %v489
      %v491 = vmul.f32 %v482, 1.442695
      %v492 = vpow.pop %v491
      %v493 = vmul.f32 %v483, 1.442695
      %v494 = vpow.pop %v493
      %v495 = vmul.f32 %v484, 1.442695
      %v496 = vpow.pop %v495
      %v497 = vmul.f32 %v485, 1.442695
      %v498 = vpow.pop %v497
      %v499 = vmul.f32 %v486, 1.442695
      %v500 = vpow.pop %v499
      %v501 = vmul.f32 %v487, 1.442695
      %v502 = vpow.pop %v501
      %v503 = vmul.f32 %v488, 1.442695
      %v504 = vpow.pop %v503
      %v505 = vmul.f32 %v274, %v490
      %v506 = vmul.f32 %v277, %v492
      %v507 = vmul.f32 %v282, %v494
      %v508 = vmul.f32 %v285, %v496
      %v509 = vmul.f32 %v290, %v498
      %v510 = vmul.f32 %v293, %v500
      %v511 = vmul.f32 %v298, %v502
      %v512 = vmul.f32 %v301, %v504
      %v513 = vsel %vm416, %v505, 0.0
      %v514 = vrot.slane %v513, 4
      %v515 = vadd.f32 %v513, %v514
      %v516 = vrot.slane %v515, 2
      %v517 = vadd.f32 %v515, %v516
      %v518 = vrot.slane %v517, 1
      %v519 = vadd.f32 %v517, %v518
      %v520 = vsel %vm416, %v506, 0.0
      %v521 = vrot.slane %v520, 4
      %v522 = vadd.f32 %v520, %v521
      %v523 = vrot.slane %v522, 2
      %v524 = vadd.f32 %v522, %v523
      %v525 = vrot.slane %v524, 1
      %v526 = vadd.f32 %v524, %v525
      %v527 = vsel %vm416, %v507, 0.0
      %v528 = vrot.slane %v527, 4
      %v529 = vadd.f32 %v527, %v528
      %v530 = vrot.slane %v529, 2
      %v531 = vadd.f32 %v529, %v530
      %v532 = vrot.slane %v531, 1
      %v533 = vadd.f32 %v531, %v532
      %v534 = vsel %vm416, %v508, 0.0
      %v535 = vrot.slane %v534, 4
      %v536 = vadd.f32 %v534, %v535
      %v537 = vrot.slane %v536, 2
      %v538 = vadd.f32 %v536, %v537
      %v539 = vrot.slane %v538, 1
      %v540 = vadd.f32 %v538, %v539
      %v541 = vsel %vm416, %v509, 0.0
      %v542 = vrot.slane %v541, 4
      %v543 = vadd.f32 %v541, %v542
      %v544 = vrot.slane %v543, 2
      %v545 = vadd.f32 %v543, %v544
      %v546 = vrot.slane %v545, 1
      %v547 = vadd.f32 %v545, %v546
      %v548 = vsel %vm416, %v510, 0.0
      %v549 = vrot.slane %v548, 4
      %v550 = vadd.f32 %v548, %v549
      %v551 = vrot.slane %v550, 2
      %v552 = vadd.f32 %v550, %v551
      %v553 = vrot.slane %v552, 1
      %v554 = vadd.f32 %v552, %v553
      %v555 = vsel %vm416, %v511, 0.0
      %v556 = vrot.slane %v555, 4
      %v557 = vadd.f32 %v555, %v556
      %v558 = vrot.slane %v557, 2
      %v559 = vadd.f32 %v557, %v558
      %v560 = vrot.slane %v559, 1
      %v561 = vadd.f32 %v559, %v560
      %v562 = vsel %vm416, %v512, 0.0
      %v563 = vrot.slane %v562, 4
      %v564 = vadd.f32 %v562, %v563
      %v565 = vrot.slane %v564, 2
      %v566 = vadd.f32 %v564, %v565
      %v567 = vrot.slane %v566, 1
      %v568 = vadd.f32 %v566, %v567
      %v569 = vsel %vm416, %v490, 0.0
      %v570 = vrot.slane %v569, 4
      %v571 = vadd.f32 %v569, %v570
      %v572 = vrot.slane %v571, 2
      %v573 = vadd.f32 %v571, %v572
      %v574 = vrot.slane %v573, 1
      %v575 = vadd.f32 %v573, %v574
      %v576 = vsel %vm416, %v492, 0.0
      %v577 = vrot.slane %v576, 4
      %v578 = vadd.f32 %v576, %v577
      %v579 = vrot.slane %v578, 2
      %v580 = vadd.f32 %v578, %v579
      %v581 = vrot.slane %v580, 1
      %v582 = vadd.f32 %v580, %v581
      %v583 = vsel %vm416, %v494, 0.0
      %v584 = vrot.slane %v583, 4
      %v585 = vadd.f32 %v583, %v584
      %v586 = vrot.slane %v585, 2
      %v587 = vadd.f32 %v585, %v586
      %v588 = vrot.slane %v587, 1
      %v589 = vadd.f32 %v587, %v588
      %v590 = vsel %vm416, %v496, 0.0
      %v591 = vrot.slane %v590, 4
      %v592 = vadd.f32 %v590, %v591
      %v593 = vrot.slane %v592, 2
      %v594 = vadd.f32 %v592, %v593
      %v595 = vrot.slane %v594, 1
      %v596 = vadd.f32 %v594, %v595
      %v597 = vsel %vm416, %v498, 0.0
      %v598 = vrot.slane %v597, 4
      %v599 = vadd.f32 %v597, %v598
      %v600 = vrot.slane %v599, 2
      %v601 = vadd.f32 %v599, %v600
      %v602 = vrot.slane %v601, 1
      %v603 = vadd.f32 %v601, %v602
      %v604 = vsel %vm416, %v500, 0.0
      %v605 = vrot.slane %v604, 4
      %v606 = vadd.f32 %v604, %v605
      %v607 = vrot.slane %v606, 2
      %v608 = vadd.f32 %v606, %v607
      %v609 = vrot.slane %v608, 1
      %v610 = vadd.f32 %v608, %v609
      %v611 = vsel %vm416, %v502, 0.0
      %v612 = vrot.slane %v611, 4
      %v613 = vadd.f32 %v611, %v612
      %v614 = vrot.slane %v613, 2
      %v615 = vadd.f32 %v613, %v614
      %v616 = vrot.slane %v615, 1
      %v617 = vadd.f32 %v615, %v616
      %v618 = vsel %vm416, %v504, 0.0
      %v619 = vrot.slane %v618, 4
      %v620 = vadd.f32 %v618, %v619
      %v621 = vrot.slane %v620, 2
      %v622 = vadd.f32 %v620, %v621
      %v623 = vrot.slane %v622, 1
      %v624 = vadd.f32 %v622, %v623
      %v625 = vrcp.pop %v575
      %v626 = vmul.f32 %v519, %v625
      %v627 = vrcp.pop %v582
      %v628 = vmul.f32 %v526, %v627
      %v629 = vrcp.pop %v589
      %v630 = vmul.f32 %v533, %v629
      %v631 = vrcp.pop %v596
      %v632 = vmul.f32 %v540, %v631
      %v633 = vrcp.pop %v603
      %v634 = vmul.f32 %v547, %v633
      %v635 = vrcp.pop %v610
      %v636 = vmul.f32 %v554, %v635
      %v637 = vrcp.pop %v617
      %v638 = vmul.f32 %v561, %v637
      %v639 = vrcp.pop %v624
      %v640 = vmul.f32 %v568, %v639
      %v641 = vsub.f32 -inf, %v626
      %v642 = vsub.f32 -inf, %v628
      %v643 = vsub.f32 -inf, %v630
      %v644 = vsub.f32 -inf, %v632
      %v645 = vsub.f32 -inf, %v634
      %v646 = vsub.f32 -inf, %v636
      %v647 = vsub.f32 -inf, %v638
      %v648 = vsub.f32 -inf, %v640
      %v649 = vmul.f32 %v641, 100.0
      %v650 = vmul.f32 %v642, 100.0
      %v651 = vmul.f32 %v643, 100.0
      %v652 = vmul.f32 %v644, 100.0
      %v653 = vmul.f32 %v645, 100.0
      %v654 = vmul.f32 %v646, 100.0
      %v655 = vmul.f32 %v647, 100.0
      %v656 = vmul.f32 %v648, 100.0
      %v657 = vmul.f32 %v649, 1.442695
      %v658 = vpow.pop %v657
      %v659 = vmul.f32 %v650, 1.442695
      %v660 = vpow.pop %v659
      %v661 = vmul.f32 %v651, 1.442695
      %v662 = vpow.pop %v661
      %v663 = vmul.f32 %v652, 1.442695
      %v664 = vpow.pop %v663
      %v665 = vmul.f32 %v653, 1.442695
      %v666 = vpow.pop %v665
      %v667 = vmul.f32 %v654, 1.442695
      %v668 = vpow.pop %v667
      %v669 = vmul.f32 %v655, 1.442695
      %v670 = vpow.pop %v669
      %v671 = vmul.f32 %v656, 1.442695
      %v672 = vpow.pop %v671
      %v673 = vsub.f32 %v626, %v626
      %v674 = vsub.f32 %v628, %v628
      %v675 = vsub.f32 %v630, %v630
      %v676 = vsub.f32 %v632, %v632
      %v677 = vsub.f32 %v634, %v634
      %v678 = vsub.f32 %v636, %v636
      %v679 = vsub.f32 %v638, %v638
      %v680 = vsub.f32 %v640, %v640
      %v681 = vmul.f32 %v673, 100.0
      %v682 = vmul.f32 %v674, 100.0
      %v683 = vmul.f32 %v675, 100.0
      %v684 = vmul.f32 %v676, 100.0
      %v685 = vmul.f32 %v677, 100.0
      %v686 = vmul.f32 %v678, 100.0
      %v687 = vmul.f32 %v679, 100.0
      %v688 = vmul.f32 %v680, 100.0
      %v689 = vmul.f32 %v681, 1.442695
      %v690 = vpow.pop %v689
      %v691 = vmul.f32 %v682, 1.442695
      %v692 = vpow.pop %v691
      %v693 = vmul.f32 %v683, 1.442695
      %v694 = vpow.pop %v693
      %v695 = vmul.f32 %v684, 1.442695
      %v696 = vpow.pop %v695
      %v697 = vmul.f32 %v685, 1.442695
      %v698 = vpow.pop %v697
      %v699 = vmul.f32 %v686, 1.442695
      %v700 = vpow.pop %v699
      %v701 = vmul.f32 %v687, 1.442695
      %v702 = vpow.pop %v701
      %v703 = vmul.f32 %v688, 1.442695
      %v704 = vpow.pop %v703
      %v705 = vmul.f32 %v658, 0.0
      %v706 = vmul.f32 %v660, 0.0
      %v707 = vmul.f32 %v662, 0.0
      %v708 = vmul.f32 %v664, 0.0
      %v709 = vmul.f32 %v666, 0.0
      %v710 = vmul.f32 %v668, 0.0
      %v711 = vmul.f32 %v670, 0.0
      %v712 = vmul.f32 %v672, 0.0
      %v713 = vadd.f32 %v705, %v690
      %v714 = vadd.f32 %v706, %v692
      %v715 = vadd.f32 %v707, %v694
      %v716 = vadd.f32 %v708, %v696
      %v717 = vadd.f32 %v709, %v698
      %v718 = vadd.f32 %v710, %v700
      %v719 = vadd.f32 %v711, %v702
      %v720 = vadd.f32 %v712, %v704
      %v721 = vmul.f32 %v626, %v690
      %v722 = vmul.f32 %v628, %v692
      %v723 = vmul.f32 %v630, %v694
      %v724 = vmul.f32 %v632, %v696
      %v725 = vmul.f32 %v634, %v698
      %v726 = vmul.f32 %v636, %v700
      %v727 = vmul.f32 %v638, %v702
      %v728 = vmul.f32 %v640, %v704
      %v729 = vadd.f32 %v705, %v721
      %v730 = vadd.f32 %v706, %v722
      %v731 = vadd.f32 %v707, %v723
      %v732 = vadd.f32 %v708, %v724
      %v733 = vadd.f32 %v709, %v725
      %v734 = vadd.f32 %v710, %v726
      %v735 = vadd.f32 %v711, %v727
      %v736 = vadd.f32 %v712, %v728
      %s737 = scalar_lea.vmem %s173, 16
      %v738 = vld [vmem:[%s737] sm:$0xf]
      %v739 = vld [vmem:[%s737 + $0x4] sm:$0xf]
      %v740 = vld [vmem:[%s737 + $0x8] sm:$0xf]
      %v741 = vld [vmem:[%s737 + $0xc] sm:$0xf]
      %v746 = vunpack.c.l.b16 %v738
      %v747 = vunpack.c.l.b16 %v739
      %v748 = vunpack.c.l.b16 %v740
      %v749 = vunpack.c.l.b16 %v741
      %v750 = vpack.c.b16 %v747, %v746
      %v751 = vpack.c.b16 %v749, %v748
      %754 = vmatprep.subr.bf16.mxu0 0
      %755 = vmatpush1.bf16.msra.mxu0 0
      %756 = vmatprep.subr.bf16.mxu0 0
      %757 = vmatpush1.bf16.msra.mxu0 0
      %758 = vmatprep.subr.bf16.mxu0 0
      %759 = vmatpush1.bf16.msra.mxu0 0
      %760 = vmatprep.subr.bf16.mxu0 0
      %761 = vmatpush1.bf16.msra.mxu0 0
      %762 = vmatprep.subr.bf16.mxu0 0
      %763 = vmatpush1.bf16.msra.mxu0 0
      %764 = vmatprep.subr.bf16.mxu0 0
      %765 = vmatpush1.bf16.msra.mxu0 0
      %766 = vmatprep.subr.bf16.mxu0 0
      %767 = vmatpush1.bf16.msra.mxu0 %v751
      %768 = vmatprep.subr.bf16.mxu0 0
      %769 = vmatpush1.bf16.msra.mxu0 %v750
      %770 = vmatprep.subr.bf16.mxu0 0
      %771 = vmatpush2.bf16.msra.mxu0 0
      %772 = vmatprep.subr.bf16.mxu0 0
      %773 = vmatpush2.bf16.msra.mxu0 0
      %774 = vmatprep.subr.bf16.mxu0 0
      %775 = vmatpush2.bf16.msra.mxu0 0
      %776 = vmatprep.subr.bf16.mxu0 0
      %777 = vmatpush2.bf16.msra.mxu0 0
      %778 = vmatprep.subr.bf16.mxu0 0
      %779 = vmatpush2.bf16.msra.mxu0 0
      %780 = vmatprep.subr.bf16.mxu0 0
      %781 = vmatpush2.bf16.msra.mxu0 0
      %782 = vmatprep.subr.bf16.mxu0 0
      %783 = vmatpush2.bf16.msra.mxu0 0
      %784 = vmatprep.subr.bf16.mxu0 0
      %785 = vmatpush2.bf16.msra.mxu0 0
      %786 = vmatprep.mubr.bf16.mxu0 0
      %787 = vmatmul.mubr.bf16.gmra.mxu0 %v228
      %v788 = vpop.f32.mrf.mxu0
      %v789 = vadd.f32 0.0, %v788
      %v790 = vpop.f32.mrf.mxu0
      %v791 = vpop.f32.mrf.mxu0
      %v792 = vadd.f32 0.0, %v791
      %v793 = vpop.f32.mrf.mxu0
      %794 = vmatprep.mubr.bf16.mxu0 0
      %795 = vmatmul.mubr.bf16.gmra.mxu0 %v231
      %v796 = vpop.f32.mrf.mxu0
      %v797 = vadd.f32 0.0, %v796
      %v798 = vpop.f32.mrf.mxu0
      %v799 = vpop.f32.mrf.mxu0
      %v800 = vadd.f32 0.0, %v799
      %v801 = vpop.f32.mrf.mxu0
      %802 = vmatprep.mubr.bf16.mxu0 0
      %803 = vmatmul.mubr.bf16.gmra.mxu0 %v234
      %v804 = vpop.f32.mrf.mxu0
      %v805 = vadd.f32 0.0, %v804
      %v806 = vpop.f32.mrf.mxu0
      %v807 = vpop.f32.mrf.mxu0
      %v808 = vadd.f32 0.0, %v807
      %v809 = vpop.f32.mrf.mxu0
      %810 = vmatprep.mubr.bf16.mxu0 0
      %811 = vmatmul.mubr.bf16.gmra.mxu0 %v237
      %v812 = vpop.f32.mrf.mxu0
      %v813 = vadd.f32 0.0, %v812
      %v814 = vpop.f32.mrf.mxu0
      %v815 = vpop.f32.mrf.mxu0
      %v816 = vadd.f32 0.0, %v815
      %v817 = vpop.f32.mrf.mxu0
      %818 = vdwg.mxu0
      %v819 = vmax.f32 %v274, %v789
      %v820 = vmax.f32 %v277, %v792
      %v821 = vmax.f32 %v282, %v797
      %v822 = vmax.f32 %v285, %v800
      %v823 = vmax.f32 %v290, %v805
      %v824 = vmax.f32 %v293, %v808
      %v825 = vmax.f32 %v298, %v813
      %v826 = vmax.f32 %v301, %v816
      %v827 = vsub.f32 %v274, %v819
      %v828 = vsub.f32 %v277, %v820
      %v829 = vsub.f32 %v282, %v821
      %v830 = vsub.f32 %v285, %v822
      %v831 = vsub.f32 %v290, %v823
      %v832 = vsub.f32 %v293, %v824
      %v833 = vsub.f32 %v298, %v825
      %v834 = vsub.f32 %v301, %v826
      %v835 = vmul.f32 %v827, 100.0
      %v836 = vmul.f32 %v828, 100.0
      %v837 = vmul.f32 %v829, 100.0
      %v838 = vmul.f32 %v830, 100.0
      %v839 = vmul.f32 %v831, 100.0
      %v840 = vmul.f32 %v832, 100.0
      %v841 = vmul.f32 %v833, 100.0
      %v842 = vmul.f32 %v834, 100.0
      %v843 = vmul.f32 %v835, 1.442695
      %v844 = vpow.pop %v843
      %v845 = vmul.f32 %v836, 1.442695
      %v846 = vpow.pop %v845
      %v847 = vmul.f32 %v837, 1.442695
      %v848 = vpow.pop %v847
      %v849 = vmul.f32 %v838, 1.442695
      %v850 = vpow.pop %v849
      %v851 = vmul.f32 %v839, 1.442695
      %v852 = vpow.pop %v851
      %v853 = vmul.f32 %v840, 1.442695
      %v854 = vpow.pop %v853
      %v855 = vmul.f32 %v841, 1.442695
      %v856 = vpow.pop %v855
      %v857 = vmul.f32 %v842, 1.442695
      %v858 = vpow.pop %v857
      %v859 = vsub.f32 %v789, %v819
      %v860 = vsub.f32 %v792, %v820
      %v861 = vsub.f32 %v797, %v821
      %v862 = vsub.f32 %v800, %v822
      %v863 = vsub.f32 %v805, %v823
      %v864 = vsub.f32 %v808, %v824
      %v865 = vsub.f32 %v813, %v825
      %v866 = vsub.f32 %v816, %v826
      %v867 = vmul.f32 %v859, 100.0
      %v868 = vmul.f32 %v860, 100.0
      %v869 = vmul.f32 %v861, 100.0
      %v870 = vmul.f32 %v862, 100.0
      %v871 = vmul.f32 %v863, 100.0
      %v872 = vmul.f32 %v864, 100.0
      %v873 = vmul.f32 %v865, 100.0
      %v874 = vmul.f32 %v866, 100.0
      %v875 = vmul.f32 %v867, 1.442695
      %v876 = vpow.pop %v875
      %v877 = vmul.f32 %v868, 1.442695
      %v878 = vpow.pop %v877
      %v879 = vmul.f32 %v869, 1.442695
      %v880 = vpow.pop %v879
      %v881 = vmul.f32 %v870, 1.442695
      %v882 = vpow.pop %v881
      %v883 = vmul.f32 %v871, 1.442695
      %v884 = vpow.pop %v883
      %v885 = vmul.f32 %v872, 1.442695
      %v886 = vpow.pop %v885
      %v887 = vmul.f32 %v873, 1.442695
      %v888 = vpow.pop %v887
      %v889 = vmul.f32 %v874, 1.442695
      %v890 = vpow.pop %v889
      %v891 = vmul.f32 %v376, %v844
      %v892 = vmul.f32 %v377, %v846
      %v893 = vmul.f32 %v378, %v848
      %v894 = vmul.f32 %v379, %v850
      %v895 = vmul.f32 %v380, %v852
      %v896 = vmul.f32 %v381, %v854
      %v897 = vmul.f32 %v382, %v856
      %v898 = vmul.f32 %v383, %v858
      %v899 = vadd.f32 %v891, %v876
      %v900 = vadd.f32 %v892, %v878
      %v901 = vadd.f32 %v893, %v880
      %v902 = vadd.f32 %v894, %v882
      %v903 = vadd.f32 %v895, %v884
      %v904 = vadd.f32 %v896, %v886
      %v905 = vadd.f32 %v897, %v888
      %v906 = vadd.f32 %v898, %v890
      %v907 = vmul.f32 %v392, %v844
      %v908 = vmul.f32 %v393, %v846
      %v909 = vmul.f32 %v394, %v848
      %v910 = vmul.f32 %v395, %v850
      %v911 = vmul.f32 %v396, %v852
      %v912 = vmul.f32 %v397, %v854
      %v913 = vmul.f32 %v398, %v856
      %v914 = vmul.f32 %v399, %v858
      %v915 = vmul.f32 %v789, %v876
      %v916 = vmul.f32 %v792, %v878
      %v917 = vmul.f32 %v797, %v880
      %v918 = vmul.f32 %v800, %v882
      %v919 = vmul.f32 %v805, %v884
      %v920 = vmul.f32 %v808, %v886
      %v921 = vmul.f32 %v813, %v888
      %v922 = vmul.f32 %v816, %v890
      %v923 = vadd.f32 %v907, %v915
      %v924 = vadd.f32 %v908, %v916
      %v925 = vadd.f32 %v909, %v917
      %v926 = vadd.f32 %v910, %v918
      %v927 = vadd.f32 %v911, %v919
      %v928 = vadd.f32 %v912, %v920
      %v929 = vadd.f32 %v913, %v921
      %v930 = vadd.f32 %v914, %v922
      %vm931 = vcmp.eq.f32.partialorder %v789, 0.0
      %vm932 = vcmp.eq.f32.partialorder %v792, 0.0
      %vm933 = vcmp.eq.f32.partialorder %v797, 0.0
      %vm934 = vcmp.eq.f32.partialorder %v800, 0.0
      %vm935 = vcmp.eq.f32.partialorder %v805, 0.0
      %vm936 = vcmp.eq.f32.partialorder %v808, 0.0
      %vm937 = vcmp.eq.f32.partialorder %v813, 0.0
      %vm938 = vcmp.eq.f32.partialorder %v816, 0.0
      %v939 = vsel %vm931, -inf, %v789
      %v940 = vsel %vm932, -inf, %v792
      %v941 = vsel %vm933, -inf, %v797
      %v942 = vsel %vm934, -inf, %v800
      %v943 = vsel %vm935, -inf, %v805
      %v944 = vsel %vm936, -inf, %v808
      %v945 = vsel %vm937, -inf, %v813
      %v946 = vsel %vm938, -inf, %v816
      %v947 = vsel %vm416, %v939, -inf
      %v948 = vrot.slane %v947, 4
      %v949 = vmax.f32 %v947, %v948
      %v950 = vrot.slane %v949, 2
      %v951 = vmax.f32 %v949, %v950
      %v952 = vrot.slane %v951, 1
      %v953 = vmax.f32 %v951, %v952
      %v954 = vsel %vm416, %v940, -inf
      %v955 = vrot.slane %v954, 4
      %v956 = vmax.f32 %v954, %v955
      %v957 = vrot.slane %v956, 2
      %v958 = vmax.f32 %v956, %v957
      %v959 = vrot.slane %v958, 1
      %v960 = vmax.f32 %v958, %v959
      %v961 = vsel %vm416, %v941, -inf
      %v962 = vrot.slane %v961, 4
      %v963 = vmax.f32 %v961, %v962
      %v964 = vrot.slane %v963, 2
      %v965 = vmax.f32 %v963, %v964
      %v966 = vrot.slane %v965, 1
      %v967 = vmax.f32 %v965, %v966
      %v968 = vsel %vm416, %v942, -inf
      %v969 = vrot.slane %v968, 4
      %v970 = vmax.f32 %v968, %v969
      %v971 = vrot.slane %v970, 2
      %v972 = vmax.f32 %v970, %v971
      %v973 = vrot.slane %v972, 1
      %v974 = vmax.f32 %v972, %v973
      %v975 = vsel %vm416, %v943, -inf
      %v976 = vrot.slane %v975, 4
      %v977 = vmax.f32 %v975, %v976
      %v978 = vrot.slane %v977, 2
      %v979 = vmax.f32 %v977, %v978
      %v980 = vrot.slane %v979, 1
      %v981 = vmax.f32 %v979, %v980
      %v982 = vsel %vm416, %v944, -inf
      %v983 = vrot.slane %v982, 4
      %v984 = vmax.f32 %v982, %v983
      %v985 = vrot.slane %v984, 2
      %v986 = vmax.f32 %v984, %v985
      %v987 = vrot.slane %v986, 1
      %v988 = vmax.f32 %v986, %v987
      %v989 = vsel %vm416, %v945, -inf
      %v990 = vrot.slane %v989, 4
      %v991 = vmax.f32 %v989, %v990
      %v992 = vrot.slane %v991, 2
      %v993 = vmax.f32 %v991, %v992
      %v994 = vrot.slane %v993, 1
      %v995 = vmax.f32 %v993, %v994
      %v996 = vsel %vm416, %v946, -inf
      %v997 = vrot.slane %v996, 4
      %v998 = vmax.f32 %v996, %v997
      %v999 = vrot.slane %v998, 2
      %v1000 = vmax.f32 %v998, %v999
      %v1001 = vrot.slane %v1000, 1
      %v1002 = vmax.f32 %v1000, %v1001
      %v1003 = vsub.f32 %v939, %v953
      %v1004 = vsub.f32 %v940, %v960
      %v1005 = vsub.f32 %v941, %v967
      %v1006 = vsub.f32 %v942, %v974
      %v1007 = vsub.f32 %v943, %v981
      %v1008 = vsub.f32 %v944, %v988
      %v1009 = vsub.f32 %v945, %v995
      %v1010 = vsub.f32 %v946, %v1002
      %v1011 = vmul.f32 %v1003, 100.0
      %v1012 = vmul.f32 %v1004, 100.0
      %v1013 = vmul.f32 %v1005, 100.0
      %v1014 = vmul.f32 %v1006, 100.0
      %v1015 = vmul.f32 %v1007, 100.0
      %v1016 = vmul.f32 %v1008, 100.0
      %v1017 = vmul.f32 %v1009, 100.0
      %v1018 = vmul.f32 %v1010, 100.0
      %v1019 = vmul.f32 %v1011, 1.442695
      %v1020 = vpow.pop %v1019
      %v1021 = vmul.f32 %v1012, 1.442695
      %v1022 = vpow.pop %v1021
      %v1023 = vmul.f32 %v1013, 1.442695
      %v1024 = vpow.pop %v1023
      %v1025 = vmul.f32 %v1014, 1.442695
      %v1026 = vpow.pop %v1025
      %v1027 = vmul.f32 %v1015, 1.442695
      %v1028 = vpow.pop %v1027
      %v1029 = vmul.f32 %v1016, 1.442695
      %v1030 = vpow.pop %v1029
      %v1031 = vmul.f32 %v1017, 1.442695
      %v1032 = vpow.pop %v1031
      %v1033 = vmul.f32 %v1018, 1.442695
      %v1034 = vpow.pop %v1033
      %v1035 = vmul.f32 %v789, %v1020
      %v1036 = vmul.f32 %v792, %v1022
      %v1037 = vmul.f32 %v797, %v1024
      %v1038 = vmul.f32 %v800, %v1026
      %v1039 = vmul.f32 %v805, %v1028
      %v1040 = vmul.f32 %v808, %v1030
      %v1041 = vmul.f32 %v813, %v1032
      %v1042 = vmul.f32 %v816, %v1034
      %v1043 = vsel %vm416, %v1035, 0.0
      %v1044 = vrot.slane %v1043, 4
      %v1045 = vadd.f32 %v1043, %v1044
      %v1046 = vrot.slane %v1045, 2
      %v1047 = vadd.f32 %v1045, %v1046
      %v1048 = vrot.slane %v1047, 1
      %v1049 = vadd.f32 %v1047, %v1048
      %v1050 = vsel %vm416, %v1036, 0.0
      %v1051 = vrot.slane %v1050, 4
      %v1052 = vadd.f32 %v1050, %v1051
      %v1053 = vrot.slane %v1052, 2
      %v1054 = vadd.f32 %v1052, %v1053
      %v1055 = vrot.slane %v1054, 1
      %v1056 = vadd.f32 %v1054, %v1055
      %v1057 = vsel %vm416, %v1037, 0.0
      %v1058 = vrot.slane %v1057, 4
      %v1059 = vadd.f32 %v1057, %v1058
      %v1060 = vrot.slane %v1059, 2
      %v1061 = vadd.f32 %v1059, %v1060
      %v1062 = vrot.slane %v1061, 1
      %v1063 = vadd.f32 %v1061, %v1062
      %v1064 = vsel %vm416, %v1038, 0.0
      %v1065 = vrot.slane %v1064, 4
      %v1066 = vadd.f32 %v1064, %v1065
      %v1067 = vrot.slane %v1066, 2
      %v1068 = vadd.f32 %v1066, %v1067
      %v1069 = vrot.slane %v1068, 1
      %v1070 = vadd.f32 %v1068, %v1069
      %v1071 = vsel %vm416, %v1039, 0.0
      %v1072 = vrot.slane %v1071, 4
      %v1073 = vadd.f32 %v1071, %v1072
      %v1074 = vrot.slane %v1073, 2
      %v1075 = vadd.f32 %v1073, %v1074
      %v1076 = vrot.slane %v1075, 1
      %v1077 = vadd.f32 %v1075, %v1076
      %v1078 = vsel %vm416, %v1040, 0.0
      %v1079 = vrot.slane %v1078, 4
      %v1080 = vadd.f32 %v1078, %v1079
      %v1081 = vrot.slane %v1080, 2
      %v1082 = vadd.f32 %v1080, %v1081
      %v1083 = vrot.slane %v1082, 1
      %v1084 = vadd.f32 %v1082, %v1083
      %v1085 = vsel %vm416, %v1041, 0.0
      %v1086 = vrot.slane %v1085, 4
      %v1087 = vadd.f32 %v1085, %v1086
      %v1088 = vrot.slane %v1087, 2
      %v1089 = vadd.f32 %v1087, %v1088
      %v1090 = vrot.slane %v1089, 1
      %v1091 = vadd.f32 %v1089, %v1090
      %v1092 = vsel %vm416, %v1042, 0.0
      %v1093 = vrot.slane %v1092, 4
      %v1094 = vadd.f32 %v1092, %v1093
      %v1095 = vrot.slane %v1094, 2
      %v1096 = vadd.f32 %v1094, %v1095
      %v1097 = vrot.slane %v1096, 1
      %v1098 = vadd.f32 %v1096, %v1097
      %v1099 = vsel %vm416, %v1020, 0.0
      %v1100 = vrot.slane %v1099, 4
      %v1101 = vadd.f32 %v1099, %v1100
      %v1102 = vrot.slane %v1101, 2
      %v1103 = vadd.f32 %v1101, %v1102
      %v1104 = vrot.slane %v1103, 1
      %v1105 = vadd.f32 %v1103, %v1104
      %v1106 = vsel %vm416, %v1022, 0.0
      %v1107 = vrot.slane %v1106, 4
      %v1108 = vadd.f32 %v1106, %v1107
      %v1109 = vrot.slane %v1108, 2
      %v1110 = vadd.f32 %v1108, %v1109
      %v1111 = vrot.slane %v1110, 1
      %v1112 = vadd.f32 %v1110, %v1111
      %v1113 = vsel %vm416, %v1024, 0.0
      %v1114 = vrot.slane %v1113, 4
      %v1115 = vadd.f32 %v1113, %v1114
      %v1116 = vrot.slane %v1115, 2
      %v1117 = vadd.f32 %v1115, %v1116
      %v1118 = vrot.slane %v1117, 1
      %v1119 = vadd.f32 %v1117, %v1118
      %v1120 = vsel %vm416, %v1026, 0.0
      %v1121 = vrot.slane %v1120, 4
      %v1122 = vadd.f32 %v1120, %v1121
      %v1123 = vrot.slane %v1122, 2
      %v1124 = vadd.f32 %v1122, %v1123
      %v1125 = vrot.slane %v1124, 1
      %v1126 = vadd.f32 %v1124, %v1125
      %v1127 = vsel %vm416, %v1028, 0.0
      %v1128 = vrot.slane %v1127, 4
      %v1129 = vadd.f32 %v1127, %v1128
      %v1130 = vrot.slane %v1129, 2
      %v1131 = vadd.f32 %v1129, %v1130
      %v1132 = vrot.slane %v1131, 1
      %v1133 = vadd.f32 %v1131, %v1132
      %v1134 = vsel %vm416, %v1030, 0.0
      %v1135 = vrot.slane %v1134, 4
      %v1136 = vadd.f32 %v1134, %v1135
      %v1137 = vrot.slane %v1136, 2
      %v1138 = vadd.f32 %v1136, %v1137
      %v1139 = vrot.slane %v1138, 1
      %v1140 = vadd.f32 %v1138, %v1139
      %v1141 = vsel %vm416, %v1032, 0.0
      %v1142 = vrot.slane %v1141, 4
      %v1143 = vadd.f32 %v1141, %v1142
      %v1144 = vrot.slane %v1143, 2
      %v1145 = vadd.f32 %v1143, %v1144
      %v1146 = vrot.slane %v1145, 1
      %v1147 = vadd.f32 %v1145, %v1146
      %v1148 = vsel %vm416, %v1034, 0.0
      %v1149 = vrot.slane %v1148, 4
      %v1150 = vadd.f32 %v1148, %v1149
      %v1151 = vrot.slane %v1150, 2
      %v1152 = vadd.f32 %v1150, %v1151
      %v1153 = vrot.slane %v1152, 1
      %v1154 = vadd.f32 %v1152, %v1153
      %v1155 = vrcp.pop %v1105
      %v1156 = vmul.f32 %v1049, %v1155
      %v1157 = vrcp.pop %v1112
      %v1158 = vmul.f32 %v1056, %v1157
      %v1159 = vrcp.pop %v1119
      %v1160 = vmul.f32 %v1063, %v1159
      %v1161 = vrcp.pop %v1126
      %v1162 = vmul.f32 %v1070, %v1161
      %v1163 = vrcp.pop %v1133
      %v1164 = vmul.f32 %v1077, %v1163
      %v1165 = vrcp.pop %v1140
      %v1166 = vmul.f32 %v1084, %v1165
      %v1167 = vrcp.pop %v1147
      %v1168 = vmul.f32 %v1091, %v1167
      %v1169 = vrcp.pop %v1154
      %v1170 = vmul.f32 %v1098, %v1169
      %v1171 = vmax.f32 %v626, %v1156
      %v1172 = vmax.f32 %v628, %v1158
      %v1173 = vmax.f32 %v630, %v1160
      %v1174 = vmax.f32 %v632, %v1162
      %v1175 = vmax.f32 %v634, %v1164
      %v1176 = vmax.f32 %v636, %v1166
      %v1177 = vmax.f32 %v638, %v1168
      %v1178 = vmax.f32 %v640, %v1170
      %v1179 = vsub.f32 %v626, %v1171
      %v1180 = vsub.f32 %v628, %v1172
      %v1181 = vsub.f32 %v630, %v1173
      %v1182 = vsub.f32 %v632, %v1174
      %v1183 = vsub.f32 %v634, %v1175
      %v1184 = vsub.f32 %v636, %v1176
      %v1185 = vsub.f32 %v638, %v1177
      %v1186 = vsub.f32 %v640, %v1178
      %v1187 = vmul.f32 %v1179, 100.0
      %v1188 = vmul.f32 %v1180, 100.0
      %v1189 = vmul.f32 %v1181, 100.0
      %v1190 = vmul.f32 %v1182, 100.0
      %v1191 = vmul.f32 %v1183, 100.0
      %v1192 = vmul.f32 %v1184, 100.0
      %v1193 = vmul.f32 %v1185, 100.0
      %v1194 = vmul.f32 %v1186, 100.0
      %v1195 = vmul.f32 %v1187, 1.442695
      %v1196 = vpow.pop %v1195
      %v1197 = vmul.f32 %v1188, 1.442695
      %v1198 = vpow.pop %v1197
      %v1199 = vmul.f32 %v1189, 1.442695
      %v1200 = vpow.pop %v1199
      %v1201 = vmul.f32 %v1190, 1.442695
      %v1202 = vpow.pop %v1201
      %v1203 = vmul.f32 %v1191, 1.442695
      %v1204 = vpow.pop %v1203
      %v1205 = vmul.f32 %v1192, 1.442695
      %v1206 = vpow.pop %v1205
      %v1207 = vmul.f32 %v1193, 1.442695
      %v1208 = vpow.pop %v1207
      %v1209 = vmul.f32 %v1194, 1.442695
      %v1210 = vpow.pop %v1209
      %v1211 = vsub.f32 %v1156, %v1171
      %v1212 = vsub.f32 %v1158, %v1172
      %v1213 = vsub.f32 %v1160, %v1173
      %v1214 = vsub.f32 %v1162, %v1174
      %v1215 = vsub.f32 %v1164, %v1175
      %v1216 = vsub.f32 %v1166, %v1176
      %v1217 = vsub.f32 %v1168, %v1177
      %v1218 = vsub.f32 %v1170, %v1178
      %v1219 = vmul.f32 %v1211, 100.0
      %v1220 = vmul.f32 %v1212, 100.0
      %v1221 = vmul.f32 %v1213, 100.0
      %v1222 = vmul.f32 %v1214, 100.0
      %v1223 = vmul.f32 %v1215, 100.0
      %v1224 = vmul.f32 %v1216, 100.0
      %v1225 = vmul.f32 %v1217, 100.0
      %v1226 = vmul.f32 %v1218, 100.0
      %v1227 = vmul.f32 %v1219, 1.442695
      %v1228 = vpow.pop %v1227
      %v1229 = vmul.f32 %v1220, 1.442695
      %v1230 = vpow.pop %v1229
      %v1231 = vmul.f32 %v1221, 1.442695
      %v1232 = vpow.pop %v1231
      %v1233 = vmul.f32 %v1222, 1.442695
      %v1234 = vpow.pop %v1233
      %v1235 = vmul.f32 %v1223, 1.442695
      %v1236 = vpow.pop %v1235
      %v1237 = vmul.f32 %v1224, 1.442695
      %v1238 = vpow.pop %v1237
      %v1239 = vmul.f32 %v1225, 1.442695
      %v1240 = vpow.pop %v1239
      %v1241 = vmul.f32 %v1226, 1.442695
      %v1242 = vpow.pop %v1241
      %v1243 = vmul.f32 %v713, %v1196
      %v1244 = vmul.f32 %v714, %v1198
      %v1245 = vmul.f32 %v715, %v1200
      %v1246 = vmul.f32 %v716, %v1202
      %v1247 = vmul.f32 %v717, %v1204
      %v1248 = vmul.f32 %v718, %v1206
      %v1249 = vmul.f32 %v719, %v1208
      %v1250 = vmul.f32 %v720, %v1210
      %v1251 = vadd.f32 %v1243, %v1228
      %v1252 = vadd.f32 %v1244, %v1230
      %v1253 = vadd.f32 %v1245, %v1232
      %v1254 = vadd.f32 %v1246, %v1234
      %v1255 = vadd.f32 %v1247, %v1236
      %v1256 = vadd.f32 %v1248, %v1238
      %v1257 = vadd.f32 %v1249, %v1240
      %v1258 = vadd.f32 %v1250, %v1242
      %v1259 = vmul.f32 %v729, %v1196
      %v1260 = vmul.f32 %v730, %v1198
      %v1261 = vmul.f32 %v731, %v1200
      %v1262 = vmul.f32 %v732, %v1202
      %v1263 = vmul.f32 %v733, %v1204
      %v1264 = vmul.f32 %v734, %v1206
      %v1265 = vmul.f32 %v735, %v1208
      %v1266 = vmul.f32 %v736, %v1210
      %v1267 = vmul.f32 %v1156, %v1228
      %v1268 = vmul.f32 %v1158, %v1230
      %v1269 = vmul.f32 %v1160, %v1232
      %v1270 = vmul.f32 %v1162, %v1234
      %v1271 = vmul.f32 %v1164, %v1236
      %v1272 = vmul.f32 %v1166, %v1238
      %v1273 = vmul.f32 %v1168, %v1240
      %v1274 = vmul.f32 %v1170, %v1242
      %v1275 = vadd.f32 %v1259, %v1267
      %v1276 = vadd.f32 %v1260, %v1268
      %v1277 = vadd.f32 %v1261, %v1269
      %v1278 = vadd.f32 %v1262, %v1270
      %v1279 = vadd.f32 %v1263, %v1271
      %v1280 = vadd.f32 %v1264, %v1272
      %v1281 = vadd.f32 %v1265, %v1273
      %v1282 = vadd.f32 %v1266, %v1274
      %s1283 = scalar_lea.vmem %s173, 32
      %v1284 = vld [vmem:[%s1283] sm:$0xf]
      %v1285 = vld [vmem:[%s1283 + $0x4] sm:$0xf]
      %v1286 = vld [vmem:[%s1283 + $0x8] sm:$0xf]
      %v1287 = vld [vmem:[%s1283 + $0xc] sm:$0xf]
      %v1292 = vunpack.c.l.b16 %v1284
      %v1293 = vunpack.c.l.b16 %v1285
      %v1294 = vunpack.c.l.b16 %v1286
      %v1295 = vunpack.c.l.b16 %v1287
      %v1296 = vpack.c.b16 %v1293, %v1292
      %v1297 = vpack.c.b16 %v1295, %v1294
      %1300 = vmatprep.subr.bf16.mxu0 0
      %1301 = vmatpush1.bf16.msra.mxu0 0
      %1302 = vmatprep.subr.bf16.mxu0 0
      %1303 = vmatpush1.bf16.msra.mxu0 0
      %1304 = vmatprep.subr.bf16.mxu0 0
      %1305 = vmatpush1.bf16.msra.mxu0 0
      %1306 = vmatprep.subr.bf16.mxu0 0
      %1307 = vmatpush1.bf16.msra.mxu0 0
      %1308 = vmatprep.subr.bf16.mxu0 0
      %1309 = vmatpush1.bf16.msra.mxu0 0
      %1310 = vmatprep.subr.bf16.mxu0 0
      %1311 = vmatpush1.bf16.msra.mxu0 0
      %1312 = vmatprep.subr.bf16.mxu0 0
      %1313 = vmatpush1.bf16.msra.mxu0 %v1297
      %1314 = vmatprep.subr.bf16.mxu0 0
      %1315 = vmatpush1.bf16.msra.mxu0 %v1296
      %1316 = vmatprep.subr.bf16.mxu0 0
      %1317 = vmatpush2.bf16.msra.mxu0 0
      %1318 = vmatprep.subr.bf16.mxu0 0
      %1319 = vmatpush2.bf16.msra.mxu0 0
      %1320 = vmatprep.subr.bf16.mxu0 0
      %1321 = vmatpush2.bf16.msra.mxu0 0
      %1322 = vmatprep.subr.bf16.mxu0 0
      %1323 = vmatpush2.bf16.msra.mxu0 0
      %1324 = vmatprep.subr.bf16.mxu0 0
      %1325 = vmatpush2.bf16.msra.mxu0 0
      %1326 = vmatprep.subr.bf16.mxu0 0
      %1327 = vmatpush2.bf16.msra.mxu0 0
      %1328 = vmatprep.subr.bf16.mxu0 0
      %1329 = vmatpush2.bf16.msra.mxu0 0
      %1330 = vmatprep.subr.bf16.mxu0 0
      %1331 = vmatpush2.bf16.msra.mxu0 0
      %1332 = vmatprep.mubr.bf16.mxu0 0
      %1333 = vmatmul.mubr.bf16.gmra.mxu0 %v228
      %v1334 = vpop.f32.mrf.mxu0
      %v1335 = vadd.f32 0.0, %v1334
      %v1336 = vpop.f32.mrf.mxu0
      %v1337 = vpop.f32.mrf.mxu0
      %v1338 = vadd.f32 0.0, %v1337
      %v1339 = vpop.f32.mrf.mxu0
      %1340 = vmatprep.mubr.bf16.mxu0 0
      %1341 = vmatmul.mubr.bf16.gmra.mxu0 %v231
      %v1342 = vpop.f32.mrf.mxu0
      %v1343 = vadd.f32 0.0, %v1342
      %v1344 = vpop.f32.mrf.mxu0
      %v1345 = vpop.f32.mrf.mxu0
      %v1346 = vadd.f32 0.0, %v1345
      %v1347 = vpop.f32.mrf.mxu0
      %1348 = vmatprep.mubr.bf16.mxu0 0
      %1349 = vmatmul.mubr.bf16.gmra.mxu0 %v234
      %v1350 = vpop.f32.mrf.mxu0
      %v1351 = vadd.f32 0.0, %v1350
      %v1352 = vpop.f32.mrf.mxu0
      %v1353 = vpop.f32.mrf.mxu0
      %v1354 = vadd.f32 0.0, %v1353
      %v1355 = vpop.f32.mrf.mxu0
      %1356 = vmatprep.mubr.bf16.mxu0 0
      %1357 = vmatmul.mubr.bf16.gmra.mxu0 %v237
      %v1358 = vpop.f32.mrf.mxu0
      %v1359 = vadd.f32 0.0, %v1358
      %v1360 = vpop.f32.mrf.mxu0
      %v1361 = vpop.f32.mrf.mxu0
      %v1362 = vadd.f32 0.0, %v1361
      %v1363 = vpop.f32.mrf.mxu0
      %1364 = vdwg.mxu0
      %v1365 = vmax.f32 %v819, %v1335
      %v1366 = vmax.f32 %v820, %v1338
      %v1367 = vmax.f32 %v821, %v1343
      %v1368 = vmax.f32 %v822, %v1346
      %v1369 = vmax.f32 %v823, %v1351
      %v1370 = vmax.f32 %v824, %v1354
      %v1371 = vmax.f32 %v825, %v1359
      %v1372 = vmax.f32 %v826, %v1362
      %v1373 = vsub.f32 %v819, %v1365
      %v1374 = vsub.f32 %v820, %v1366
      %v1375 = vsub.f32 %v821, %v1367
      %v1376 = vsub.f32 %v822, %v1368
      %v1377 = vsub.f32 %v823, %v1369
      %v1378 = vsub.f32 %v824, %v1370
      %v1379 = vsub.f32 %v825, %v1371
      %v1380 = vsub.f32 %v826, %v1372
      %v1381 = vmul.f32 %v1373, 100.0
      %v1382 = vmul.f32 %v1374, 100.0
      %v1383 = vmul.f32 %v1375, 100.0
      %v1384 = vmul.f32 %v1376, 100.0
      %v1385 = vmul.f32 %v1377, 100.0
      %v1386 = vmul.f32 %v1378, 100.0
      %v1387 = vmul.f32 %v1379, 100.0
      %v1388 = vmul.f32 %v1380, 100.0
      %v1389 = vmul.f32 %v1381, 1.442695
      %v1390 = vpow.pop %v1389
      %v1391 = vmul.f32 %v1382, 1.442695
      %v1392 = vpow.pop %v1391
      %v1393 = vmul.f32 %v1383, 1.442695
      %v1394 = vpow.pop %v1393
      %v1395 = vmul.f32 %v1384, 1.442695
      %v1396 = vpow.pop %v1395
      %v1397 = vmul.f32 %v1385, 1.442695
      %v1398 = vpow.pop %v1397
      %v1399 = vmul.f32 %v1386, 1.442695
      %v1400 = vpow.pop %v1399
      %v1401 = vmul.f32 %v1387, 1.442695
      %v1402 = vpow.pop %v1401
      %v1403 = vmul.f32 %v1388, 1.442695
      %v1404 = vpow.pop %v1403
      %v1405 = vsub.f32 %v1335, %v1365
      %v1406 = vsub.f32 %v1338, %v1366
      %v1407 = vsub.f32 %v1343, %v1367
      %v1408 = vsub.f32 %v1346, %v1368
      %v1409 = vsub.f32 %v1351, %v1369
      %v1410 = vsub.f32 %v1354, %v1370
      %v1411 = vsub.f32 %v1359, %v1371
      %v1412 = vsub.f32 %v1362, %v1372
      %v1413 = vmul.f32 %v1405, 100.0
      %v1414 = vmul.f32 %v1406, 100.0
      %v1415 = vmul.f32 %v1407, 100.0
      %v1416 = vmul.f32 %v1408, 100.0
      %v1417 = vmul.f32 %v1409, 100.0
      %v1418 = vmul.f32 %v1410, 100.0
      %v1419 = vmul.f32 %v1411, 100.0
      %v1420 = vmul.f32 %v1412, 100.0
      %v1421 = vmul.f32 %v1413, 1.442695
      %v1422 = vpow.pop %v1421
      %v1423 = vmul.f32 %v1414, 1.442695
      %v1424 = vpow.pop %v1423
      %v1425 = vmul.f32 %v1415, 1.442695
      %v1426 = vpow.pop %v1425
      %v1427 = vmul.f32 %v1416, 1.442695
      %v1428 = vpow.pop %v1427
      %v1429 = vmul.f32 %v1417, 1.442695
      %v1430 = vpow.pop %v1429
      %v1431 = vmul.f32 %v1418, 1.442695
      %v1432 = vpow.pop %v1431
      %v1433 = vmul.f32 %v1419, 1.442695
      %v1434 = vpow.pop %v1433
      %v1435 = vmul.f32 %v1420, 1.442695
      %v1436 = vpow.pop %v1435
      %v1437 = vmul.f32 %v899, %v1390
      %v1438 = vmul.f32 %v900, %v1392
      %v1439 = vmul.f32 %v901, %v1394
      %v1440 = vmul.f32 %v902, %v1396
      %v1441 = vmul.f32 %v903, %v1398
      %v1442 = vmul.f32 %v904, %v1400
      %v1443 = vmul.f32 %v905, %v1402
      %v1444 = vmul.f32 %v906, %v1404
      %v1445 = vadd.f32 %v1437, %v1422
      %v1446 = vadd.f32 %v1438, %v1424
      %v1447 = vadd.f32 %v1439, %v1426
      %v1448 = vadd.f32 %v1440, %v1428
      %v1449 = vadd.f32 %v1441, %v1430
      %v1450 = vadd.f32 %v1442, %v1432
      %v1451 = vadd.f32 %v1443, %v1434
      %v1452 = vadd.f32 %v1444, %v1436
      %v1453 = vmul.f32 %v923, %v1390
      %v1454 = vmul.f32 %v924, %v1392
      %v1455 = vmul.f32 %v925, %v1394
      %v1456 = vmul.f32 %v926, %v1396
      %v1457 = vmul.f32 %v927, %v1398
      %v1458 = vmul.f32 %v928, %v1400
      %v1459 = vmul.f32 %v929, %v1402
      %v1460 = vmul.f32 %v930, %v1404
      %v1461 = vmul.f32 %v1335, %v1422
      %v1462 = vmul.f32 %v1338, %v1424
      %v1463 = vmul.f32 %v1343, %v1426
      %v1464 = vmul.f32 %v1346, %v1428
      %v1465 = vmul.f32 %v1351, %v1430
      %v1466 = vmul.f32 %v1354, %v1432
      %v1467 = vmul.f32 %v1359, %v1434
      %v1468 = vmul.f32 %v1362, %v1436
      %v1469 = vadd.f32 %v1453, %v1461
      %v1470 = vadd.f32 %v1454, %v1462
      %v1471 = vadd.f32 %v1455, %v1463
      %v1472 = vadd.f32 %v1456, %v1464
      %v1473 = vadd.f32 %v1457, %v1465
      %v1474 = vadd.f32 %v1458, %v1466
      %v1475 = vadd.f32 %v1459, %v1467
      %v1476 = vadd.f32 %v1460, %v1468
      %vm1477 = vcmp.eq.f32.partialorder %v1335, 0.0
      %vm1478 = vcmp.eq.f32.partialorder %v1338, 0.0
      %vm1479 = vcmp.eq.f32.partialorder %v1343, 0.0
      %vm1480 = vcmp.eq.f32.partialorder %v1346, 0.0
      %vm1481 = vcmp.eq.f32.partialorder %v1351, 0.0
      %vm1482 = vcmp.eq.f32.partialorder %v1354, 0.0
      %vm1483 = vcmp.eq.f32.partialorder %v1359, 0.0
      %vm1484 = vcmp.eq.f32.partialorder %v1362, 0.0
      %v1485 = vsel %vm1477, -inf, %v1335
      %v1486 = vsel %vm1478, -inf, %v1338
      %v1487 = vsel %vm1479, -inf, %v1343
      %v1488 = vsel %vm1480, -inf, %v1346
      %v1489 = vsel %vm1481, -inf, %v1351
      %v1490 = vsel %vm1482, -inf, %v1354
      %v1491 = vsel %vm1483, -inf, %v1359
      %v1492 = vsel %vm1484, -inf, %v1362
      %v1493 = vsel %vm416, %v1485, -inf
      %v1494 = vrot.slane %v1493, 4
      %v1495 = vmax.f32 %v1493, %v1494
      %v1496 = vrot.slane %v1495, 2
      %v1497 = vmax.f32 %v1495, %v1496
      %v1498 = vrot.slane %v1497, 1
      %v1499 = vmax.f32 %v1497, %v1498
      %v1500 = vsel %vm416, %v1486, -inf
      %v1501 = vrot.slane %v1500, 4
      %v1502 = vmax.f32 %v1500, %v1501
      %v1503 = vrot.slane %v1502, 2
      %v1504 = vmax.f32 %v1502, %v1503
      %v1505 = vrot.slane %v1504, 1
      %v1506 = vmax.f32 %v1504, %v1505
      %v1507 = vsel %vm416, %v1487, -inf
      %v1508 = vrot.slane %v1507, 4
      %v1509 = vmax.f32 %v1507, %v1508
      %v1510 = vrot.slane %v1509, 2
      %v1511 = vmax.f32 %v1509, %v1510
      %v1512 = vrot.slane %v1511, 1
      %v1513 = vmax.f32 %v1511, %v1512
      %v1514 = vsel %vm416, %v1488, -inf
      %v1515 = vrot.slane %v1514, 4
      %v1516 = vmax.f32 %v1514, %v1515
      %v1517 = vrot.slane %v1516, 2
      %v1518 = vmax.f32 %v1516, %v1517
      %v1519 = vrot.slane %v1518, 1
      %v1520 = vmax.f32 %v1518, %v1519
      %v1521 = vsel %vm416, %v1489, -inf
      %v1522 = vrot.slane %v1521, 4
      %v1523 = vmax.f32 %v1521, %v1522
      %v1524 = vrot.slane %v1523, 2
      %v1525 = vmax.f32 %v1523, %v1524
      %v1526 = vrot.slane %v1525, 1
      %v1527 = vmax.f32 %v1525, %v1526
      %v1528 = vsel %vm416, %v1490, -inf
      %v1529 = vrot.slane %v1528, 4
      %v1530 = vmax.f32 %v1528, %v1529
      %v1531 = vrot.slane %v1530, 2
      %v1532 = vmax.f32 %v1530, %v1531
      %v1533 = vrot.slane %v1532, 1
      %v1534 = vmax.f32 %v1532, %v1533
      %v1535 = vsel %vm416, %v1491, -inf
      %v1536 = vrot.slane %v1535, 4
      %v1537 = vmax.f32 %v1535, %v1536
      %v1538 = vrot.slane %v1537, 2
      %v1539 = vmax.f32 %v1537, %v1538
      %v1540 = vrot.slane %v1539, 1
      %v1541 = vmax.f32 %v1539, %v1540
      %v1542 = vsel %vm416, %v1492, -inf
      %v1543 = vrot.slane %v1542, 4
      %v1544 = vmax.f32 %v1542, %v1543
      %v1545 = vrot.slane %v1544, 2
      %v1546 = vmax.f32 %v1544, %v1545
      %v1547 = vrot.slane %v1546, 1
      %v1548 = vmax.f32 %v1546, %v1547
      %v1549 = vsub.f32 %v1485, %v1499
      %v1550 = vsub.f32 %v1486, %v1506
      %v1551 = vsub.f32 %v1487, %v1513
      %v1552 = vsub.f32 %v1488, %v1520
      %v1553 = vsub.f32 %v1489, %v1527
      %v1554 = vsub.f32 %v1490, %v1534
      %v1555 = vsub.f32 %v1491, %v1541
      %v1556 = vsub.f32 %v1492, %v1548
      %v1557 = vmul.f32 %v1549, 100.0
      %v1558 = vmul.f32 %v1550, 100.0
      %v1559 = vmul.f32 %v1551, 100.0
      %v1560 = vmul.f32 %v1552, 100.0
      %v1561 = vmul.f32 %v1553, 100.0
      %v1562 = vmul.f32 %v1554, 100.0
      %v1563 = vmul.f32 %v1555, 100.0
      %v1564 = vmul.f32 %v1556, 100.0
      %v1565 = vmul.f32 %v1557, 1.442695
      %v1566 = vpow.pop %v1565
      %v1567 = vmul.f32 %v1558, 1.442695
      %v1568 = vpow.pop %v1567
      %v1569 = vmul.f32 %v1559, 1.442695
      %v1570 = vpow.pop %v1569
      %v1571 = vmul.f32 %v1560, 1.442695
      %v1572 = vpow.pop %v1571
      %v1573 = vmul.f32 %v1561, 1.442695
      %v1574 = vpow.pop %v1573
      %v1575 = vmul.f32 %v1562, 1.442695
      %v1576 = vpow.pop %v1575
      %v1577 = vmul.f32 %v1563, 1.442695
      %v1578 = vpow.pop %v1577
      %v1579 = vmul.f32 %v1564, 1.442695
      %v1580 = vpow.pop %v1579
      %v1581 = vmul.f32 %v1335, %v1566
      %v1582 = vmul.f32 %v1338, %v1568
      %v1583 = vmul.f32 %v1343, %v1570
      %v1584 = vmul.f32 %v1346, %v1572
      %v1585 = vmul.f32 %v1351, %v1574
      %v1586 = vmul.f32 %v1354, %v1576
      %v1587 = vmul.f32 %v1359, %v1578
      %v1588 = vmul.f32 %v1362, %v1580
      %v1589 = vsel %vm416, %v1581, 0.0
      %v1590 = vrot.slane %v1589, 4
      %v1591 = vadd.f32 %v1589, %v1590
      %v1592 = vrot.slane %v1591, 2
      %v1593 = vadd.f32 %v1591, %v1592
      %v1594 = vrot.slane %v1593, 1
      %v1595 = vadd.f32 %v1593, %v1594
      %v1596 = vsel %vm416, %v1582, 0.0
      %v1597 = vrot.slane %v1596, 4
      %v1598 = vadd.f32 %v1596, %v1597
      %v1599 = vrot.slane %v1598, 2
      %v1600 = vadd.f32 %v1598, %v1599
      %v1601 = vrot.slane %v1600, 1
      %v1602 = vadd.f32 %v1600, %v1601
      %v1603 = vsel %vm416, %v1583, 0.0
      %v1604 = vrot.slane %v1603, 4
      %v1605 = vadd.f32 %v1603, %v1604
      %v1606 = vrot.slane %v1605, 2
      %v1607 = vadd.f32 %v1605, %v1606
      %v1608 = vrot.slane %v1607, 1
      %v1609 = vadd.f32 %v1607, %v1608
      %v1610 = vsel %vm416, %v1584, 0.0
      %v1611 = vrot.slane %v1610, 4
      %v1612 = vadd.f32 %v1610, %v1611
      %v1613 = vrot.slane %v1612, 2
      %v1614 = vadd.f32 %v1612, %v1613
      %v1615 = vrot.slane %v1614, 1
      %v1616 = vadd.f32 %v1614, %v1615
      %v1617 = vsel %vm416, %v1585, 0.0
      %v1618 = vrot.slane %v1617, 4
      %v1619 = vadd.f32 %v1617, %v1618
      %v1620 = vrot.slane %v1619, 2
      %v1621 = vadd.f32 %v1619, %v1620
      %v1622 = vrot.slane %v1621, 1
      %v1623 = vadd.f32 %v1621, %v1622
      %v1624 = vsel %vm416, %v1586, 0.0
      %v1625 = vrot.slane %v1624, 4
      %v1626 = vadd.f32 %v1624, %v1625
      %v1627 = vrot.slane %v1626, 2
      %v1628 = vadd.f32 %v1626, %v1627
      %v1629 = vrot.slane %v1628, 1
      %v1630 = vadd.f32 %v1628, %v1629
      %v1631 = vsel %vm416, %v1587, 0.0
      %v1632 = vrot.slane %v1631, 4
      %v1633 = vadd.f32 %v1631, %v1632
      %v1634 = vrot.slane %v1633, 2
      %v1635 = vadd.f32 %v1633, %v1634
      %v1636 = vrot.slane %v1635, 1
      %v1637 = vadd.f32 %v1635, %v1636
      %v1638 = vsel %vm416, %v1588, 0.0
      %v1639 = vrot.slane %v1638, 4
      %v1640 = vadd.f32 %v1638, %v1639
      %v1641 = vrot.slane %v1640, 2
      %v1642 = vadd.f32 %v1640, %v1641
      %v1643 = vrot.slane %v1642, 1
      %v1644 = vadd.f32 %v1642, %v1643
      %v1645 = vsel %vm416, %v1566, 0.0
      %v1646 = vrot.slane %v1645, 4
      %v1647 = vadd.f32 %v1645, %v1646
      %v1648 = vrot.slane %v1647, 2
      %v1649 = vadd.f32 %v1647, %v1648
      %v1650 = vrot.slane %v1649, 1
      %v1651 = vadd.f32 %v1649, %v1650
      %v1652 = vsel %vm416, %v1568, 0.0
      %v1653 = vrot.slane %v1652, 4
      %v1654 = vadd.f32 %v1652, %v1653
      %v1655 = vrot.slane %v1654, 2
      %v1656 = vadd.f32 %v1654, %v1655
      %v1657 = vrot.slane %v1656, 1
      %v1658 = vadd.f32 %v1656, %v1657
      %v1659 = vsel %vm416, %v1570, 0.0
      %v1660 = vrot.slane %v1659, 4
      %v1661 = vadd.f32 %v1659, %v1660
      %v1662 = vrot.slane %v1661, 2
      %v1663 = vadd.f32 %v1661, %v1662
      %v1664 = vrot.slane %v1663, 1
      %v1665 = vadd.f32 %v1663, %v1664
      %v1666 = vsel %vm416, %v1572, 0.0
      %v1667 = vrot.slane %v1666, 4
      %v1668 = vadd.f32 %v1666, %v1667
      %v1669 = vrot.slane %v1668, 2
      %v1670 = vadd.f32 %v1668, %v1669
      %v1671 = vrot.slane %v1670, 1
      %v1672 = vadd.f32 %v1670, %v1671
      %v1673 = vsel %vm416, %v1574, 0.0
      %v1674 = vrot.slane %v1673, 4
      %v1675 = vadd.f32 %v1673, %v1674
      %v1676 = vrot.slane %v1675, 2
      %v1677 = vadd.f32 %v1675, %v1676
      %v1678 = vrot.slane %v1677, 1
      %v1679 = vadd.f32 %v1677, %v1678
      %v1680 = vsel %vm416, %v1576, 0.0
      %v1681 = vrot.slane %v1680, 4
      %v1682 = vadd.f32 %v1680, %v1681
      %v1683 = vrot.slane %v1682, 2
      %v1684 = vadd.f32 %v1682, %v1683
      %v1685 = vrot.slane %v1684, 1
      %v1686 = vadd.f32 %v1684, %v1685
      %v1687 = vsel %vm416, %v1578, 0.0
      %v1688 = vrot.slane %v1687, 4
      %v1689 = vadd.f32 %v1687, %v1688
      %v1690 = vrot.slane %v1689, 2
      %v1691 = vadd.f32 %v1689, %v1690
      %v1692 = vrot.slane %v1691, 1
      %v1693 = vadd.f32 %v1691, %v1692
      %v1694 = vsel %vm416, %v1580, 0.0
      %v1695 = vrot.slane %v1694, 4
      %v1696 = vadd.f32 %v1694, %v1695
      %v1697 = vrot.slane %v1696, 2
      %v1698 = vadd.f32 %v1696, %v1697
      %v1699 = vrot.slane %v1698, 1
      %v1700 = vadd.f32 %v1698, %v1699
      %v1701 = vrcp.pop %v1651
      %v1702 = vmul.f32 %v1595, %v1701
      %v1703 = vrcp.pop %v1658
      %v1704 = vmul.f32 %v1602, %v1703
      %v1705 = vrcp.pop %v1665
      %v1706 = vmul.f32 %v1609, %v1705
      %v1707 = vrcp.pop %v1672
      %v1708 = vmul.f32 %v1616, %v1707
      %v1709 = vrcp.pop %v1679
      %v1710 = vmul.f32 %v1623, %v1709
      %v1711 = vrcp.pop %v1686
      %v1712 = vmul.f32 %v1630, %v1711
      %v1713 = vrcp.pop %v1693
      %v1714 = vmul.f32 %v1637, %v1713
      %v1715 = vrcp.pop %v1700
      %v1716 = vmul.f32 %v1644, %v1715
      %v1717 = vmax.f32 %v1171, %v1702
      %v1718 = vmax.f32 %v1172, %v1704
      %v1719 = vmax.f32 %v1173, %v1706
      %v1720 = vmax.f32 %v1174, %v1708
      %v1721 = vmax.f32 %v1175, %v1710
      %v1722 = vmax.f32 %v1176, %v1712
      %v1723 = vmax.f32 %v1177, %v1714
      %v1724 = vmax.f32 %v1178, %v1716
      %v1725 = vsub.f32 %v1171, %v1717
      %v1726 = vsub.f32 %v1172, %v1718
      %v1727 = vsub.f32 %v1173, %v1719
      %v1728 = vsub.f32 %v1174, %v1720
      %v1729 = vsub.f32 %v1175, %v1721
      %v1730 = vsub.f32 %v1176, %v1722
      %v1731 = vsub.f32 %v1177, %v1723
      %v1732 = vsub.f32 %v1178, %v1724
      %v1733 = vmul.f32 %v1725, 100.0
      %v1734 = vmul.f32 %v1726, 100.0
      %v1735 = vmul.f32 %v1727, 100.0
      %v1736 = vmul.f32 %v1728, 100.0
      %v1737 = vmul.f32 %v1729, 100.0
      %v1738 = vmul.f32 %v1730, 100.0
      %v1739 = vmul.f32 %v1731, 100.0
      %v1740 = vmul.f32 %v1732, 100.0
      %v1741 = vmul.f32 %v1733, 1.442695
      %v1742 = vpow.pop %v1741
      %v1743 = vmul.f32 %v1734, 1.442695
      %v1744 = vpow.pop %v1743
      %v1745 = vmul.f32 %v1735, 1.442695
      %v1746 = vpow.pop %v1745
      %v1747 = vmul.f32 %v1736, 1.442695
      %v1748 = vpow.pop %v1747
      %v1749 = vmul.f32 %v1737, 1.442695
      %v1750 = vpow.pop %v1749
      %v1751 = vmul.f32 %v1738, 1.442695
      %v1752 = vpow.pop %v1751
      %v1753 = vmul.f32 %v1739, 1.442695
      %v1754 = vpow.pop %v1753
      %v1755 = vmul.f32 %v1740, 1.442695
      %v1756 = vpow.pop %v1755
      %v1757 = vsub.f32 %v1702, %v1717
      %v1758 = vsub.f32 %v1704, %v1718
      %v1759 = vsub.f32 %v1706, %v1719
      %v1760 = vsub.f32 %v1708, %v1720
      %v1761 = vsub.f32 %v1710, %v1721
      %v1762 = vsub.f32 %v1712, %v1722
      %v1763 = vsub.f32 %v1714, %v1723
      %v1764 = vsub.f32 %v1716, %v1724
      %v1765 = vmul.f32 %v1757, 100.0
      %v1766 = vmul.f32 %v1758, 100.0
      %v1767 = vmul.f32 %v1759, 100.0
      %v1768 = vmul.f32 %v1760, 100.0
      %v1769 = vmul.f32 %v1761, 100.0
      %v1770 = vmul.f32 %v1762, 100.0
      %v1771 = vmul.f32 %v1763, 100.0
      %v1772 = vmul.f32 %v1764, 100.0
      %v1773 = vmul.f32 %v1765, 1.442695
      %v1774 = vpow.pop %v1773
      %v1775 = vmul.f32 %v1766, 1.442695
      %v1776 = vpow.pop %v1775
      %v1777 = vmul.f32 %v1767, 1.442695
      %v1778 = vpow.pop %v1777
      %v1779 = vmul.f32 %v1768, 1.442695
      %v1780 = vpow.pop %v1779
      %v1781 = vmul.f32 %v1769, 1.442695
      %v1782 = vpow.pop %v1781
      %v1783 = vmul.f32 %v1770, 1.442695
      %v1784 = vpow.pop %v1783
      %v1785 = vmul.f32 %v1771, 1.442695
      %v1786 = vpow.pop %v1785
      %v1787 = vmul.f32 %v1772, 1.442695
      %v1788 = vpow.pop %v1787
      %v1789 = vmul.f32 %v1251, %v1742
      %v1790 = vmul.f32 %v1252, %v1744
      %v1791 = vmul.f32 %v1253, %v1746
      %v1792 = vmul.f32 %v1254, %v1748
      %v1793 = vmul.f32 %v1255, %v1750
      %v1794 = vmul.f32 %v1256, %v1752
      %v1795 = vmul.f32 %v1257, %v1754
      %v1796 = vmul.f32 %v1258, %v1756
      %v1797 = vadd.f32 %v1789, %v1774
      %v1798 = vadd.f32 %v1790, %v1776
      %v1799 = vadd.f32 %v1791, %v1778
      %v1800 = vadd.f32 %v1792, %v1780
      %v1801 = vadd.f32 %v1793, %v1782
      %v1802 = vadd.f32 %v1794, %v1784
      %v1803 = vadd.f32 %v1795, %v1786
      %v1804 = vadd.f32 %v1796, %v1788
      %v1805 = vmul.f32 %v1275, %v1742
      %v1806 = vmul.f32 %v1276, %v1744
      %v1807 = vmul.f32 %v1277, %v1746
      %v1808 = vmul.f32 %v1278, %v1748
      %v1809 = vmul.f32 %v1279, %v1750
      %v1810 = vmul.f32 %v1280, %v1752
      %v1811 = vmul.f32 %v1281, %v1754
      %v1812 = vmul.f32 %v1282, %v1756
      %v1813 = vmul.f32 %v1702, %v1774
      %v1814 = vmul.f32 %v1704, %v1776
      %v1815 = vmul.f32 %v1706, %v1778
      %v1816 = vmul.f32 %v1708, %v1780
      %v1817 = vmul.f32 %v1710, %v1782
      %v1818 = vmul.f32 %v1712, %v1784
      %v1819 = vmul.f32 %v1714, %v1786
      %v1820 = vmul.f32 %v1716, %v1788
      %v1821 = vadd.f32 %v1805, %v1813
      %v1822 = vadd.f32 %v1806, %v1814
      %v1823 = vadd.f32 %v1807, %v1815
      %v1824 = vadd.f32 %v1808, %v1816
      %v1825 = vadd.f32 %v1809, %v1817
      %v1826 = vadd.f32 %v1810, %v1818
      %v1827 = vadd.f32 %v1811, %v1819
      %v1828 = vadd.f32 %v1812, %v1820
      %s1829 = scalar_lea.vmem %s173, 48
      %v1830 = vld [vmem:[%s1829] sm:$0xf]
      %v1831 = vld [vmem:[%s1829 + $0x4] sm:$0xf]
      %v1832 = vld [vmem:[%s1829 + $0x8] sm:$0xf]
      %v1833 = vld [vmem:[%s1829 + $0xc] sm:$0xf]
      %v1838 = vunpack.c.l.b16 %v1830
      %v1839 = vunpack.c.l.b16 %v1831
      %v1840 = vunpack.c.l.b16 %v1832
      %v1841 = vunpack.c.l.b16 %v1833
      %v1842 = vpack.c.b16 %v1839, %v1838
      %v1843 = vpack.c.b16 %v1841, %v1840
      %1846 = vmatprep.subr.bf16.mxu0 0
      %1847 = vmatpush1.bf16.msra.mxu0 0
      %1848 = vmatprep.subr.bf16.mxu0 0
      %1849 = vmatpush1.bf16.msra.mxu0 0
      %1850 = vmatprep.subr.bf16.mxu0 0
      %1851 = vmatpush1.bf16.msra.mxu0 0
      %1852 = vmatprep.subr.bf16.mxu0 0
      %1853 = vmatpush1.bf16.msra.mxu0 0
      %1854 = vmatprep.subr.bf16.mxu0 0
      %1855 = vmatpush1.bf16.msra.mxu0 0
      %1856 = vmatprep.subr.bf16.mxu0 0
      %1857 = vmatpush1.bf16.msra.mxu0 0
      %1858 = vmatprep.subr.bf16.mxu0 0
      %1859 = vmatpush1.bf16.msra.mxu0 %v1843
      %1860 = vmatprep.subr.bf16.mxu0 0
      %1861 = vmatpush1.bf16.msra.mxu0 %v1842
      %1862 = vmatprep.subr.bf16.mxu0 0
      %1863 = vmatpush2.bf16.msra.mxu0 0
      %1864 = vmatprep.subr.bf16.mxu0 0
      %1865 = vmatpush2.bf16.msra.mxu0 0
      %1866 = vmatprep.subr.bf16.mxu0 0
      %1867 = vmatpush2.bf16.msra.mxu0 0
      %1868 = vmatprep.subr.bf16.mxu0 0
      %1869 = vmatpush2.bf16.msra.mxu0 0
      %1870 = vmatprep.subr.bf16.mxu0 0
      %1871 = vmatpush2.bf16.msra.mxu0 0
      %1872 = vmatprep.subr.bf16.mxu0 0
      %1873 = vmatpush2.bf16.msra.mxu0 0
      %1874 = vmatprep.subr.bf16.mxu0 0
      %1875 = vmatpush2.bf16.msra.mxu0 0
      %1876 = vmatprep.subr.bf16.mxu0 0
      %1877 = vmatpush2.bf16.msra.mxu0 0
      %1878 = vmatprep.mubr.bf16.mxu0 0
      %1879 = vmatmul.mubr.bf16.gmra.mxu0 %v228
      %v1880 = vpop.f32.mrf.mxu0
      %v1881 = vadd.f32 0.0, %v1880
      %v1882 = vpop.f32.mrf.mxu0
      %v1883 = vpop.f32.mrf.mxu0
      %v1884 = vadd.f32 0.0, %v1883
      %v1885 = vpop.f32.mrf.mxu0
      %1886 = vmatprep.mubr.bf16.mxu0 0
      %1887 = vmatmul.mubr.bf16.gmra.mxu0 %v231
      %v1888 = vpop.f32.mrf.mxu0
      %v1889 = vadd.f32 0.0, %v1888
      %v1890 = vpop.f32.mrf.mxu0
      %v1891 = vpop.f32.mrf.mxu0
      %v1892 = vadd.f32 0.0, %v1891
      %v1893 = vpop.f32.mrf.mxu0
      %1894 = vmatprep.mubr.bf16.mxu0 0
      %1895 = vmatmul.mubr.bf16.gmra.mxu0 %v234
      %v1896 = vpop.f32.mrf.mxu0
      %v1897 = vadd.f32 0.0, %v1896
      %v1898 = vpop.f32.mrf.mxu0
      %v1899 = vpop.f32.mrf.mxu0
      %v1900 = vadd.f32 0.0, %v1899
      %v1901 = vpop.f32.mrf.mxu0
      %1902 = vmatprep.mubr.bf16.mxu0 0
      %1903 = vmatmul.mubr.bf16.gmra.mxu0 %v237
      %v1904 = vpop.f32.mrf.mxu0
      %v1905 = vadd.f32 0.0, %v1904
      %v1906 = vpop.f32.mrf.mxu0
      %v1907 = vpop.f32.mrf.mxu0
      %v1908 = vadd.f32 0.0, %v1907
      %v1909 = vpop.f32.mrf.mxu0
      %1910 = vdwg.mxu0
      %v1911 = vmax.f32 %v1365, %v1881
      %v1912 = vmax.f32 %v1366, %v1884
      %v1913 = vmax.f32 %v1367, %v1889
      %v1914 = vmax.f32 %v1368, %v1892
      %v1915 = vmax.f32 %v1369, %v1897
      %v1916 = vmax.f32 %v1370, %v1900
      %v1917 = vmax.f32 %v1371, %v1905
      %v1918 = vmax.f32 %v1372, %v1908
      %v1919 = vsub.f32 %v1365, %v1911
      %v1920 = vsub.f32 %v1366, %v1912
      %v1921 = vsub.f32 %v1367, %v1913
      %v1922 = vsub.f32 %v1368, %v1914
      %v1923 = vsub.f32 %v1369, %v1915
      %v1924 = vsub.f32 %v1370, %v1916
      %v1925 = vsub.f32 %v1371, %v1917
      %v1926 = vsub.f32 %v1372, %v1918
      %v1927 = vmul.f32 %v1919, 100.0
      %v1928 = vmul.f32 %v1920, 100.0
      %v1929 = vmul.f32 %v1921, 100.0
      %v1930 = vmul.f32 %v1922, 100.0
      %v1931 = vmul.f32 %v1923, 100.0
      %v1932 = vmul.f32 %v1924, 100.0
      %v1933 = vmul.f32 %v1925, 100.0
      %v1934 = vmul.f32 %v1926, 100.0
      %v1935 = vmul.f32 %v1927, 1.442695
      %v1936 = vpow.pop %v1935
      %v1937 = vmul.f32 %v1928, 1.442695
      %v1938 = vpow.pop %v1937
      %v1939 = vmul.f32 %v1929, 1.442695
      %v1940 = vpow.pop %v1939
      %v1941 = vmul.f32 %v1930, 1.442695
      %v1942 = vpow.pop %v1941
      %v1943 = vmul.f32 %v1931, 1.442695
      %v1944 = vpow.pop %v1943
      %v1945 = vmul.f32 %v1932, 1.442695
      %v1946 = vpow.pop %v1945
      %v1947 = vmul.f32 %v1933, 1.442695
      %v1948 = vpow.pop %v1947
      %v1949 = vmul.f32 %v1934, 1.442695
      %v1950 = vpow.pop %v1949
      %v1951 = vsub.f32 %v1881, %v1911
      %v1952 = vsub.f32 %v1884, %v1912
      %v1953 = vsub.f32 %v1889, %v1913
      %v1954 = vsub.f32 %v1892, %v1914
      %v1955 = vsub.f32 %v1897, %v1915
      %v1956 = vsub.f32 %v1900, %v1916
      %v1957 = vsub.f32 %v1905, %v1917
      %v1958 = vsub.f32 %v1908, %v1918
      %v1959 = vmul.f32 %v1951, 100.0
      %v1960 = vmul.f32 %v1952, 100.0
      %v1961 = vmul.f32 %v1953, 100.0
      %v1962 = vmul.f32 %v1954, 100.0
      %v1963 = vmul.f32 %v1955, 100.0
      %v1964 = vmul.f32 %v1956, 100.0
      %v1965 = vmul.f32 %v1957, 100.0
      %v1966 = vmul.f32 %v1958, 100.0
      %v1967 = vmul.f32 %v1959, 1.442695
      %v1968 = vpow.pop %v1967
      %v1969 = vmul.f32 %v1960, 1.442695
      %v1970 = vpow.pop %v1969
      %v1971 = vmul.f32 %v1961, 1.442695
      %v1972 = vpow.pop %v1971
      %v1973 = vmul.f32 %v1962, 1.442695
      %v1974 = vpow.pop %v1973
      %v1975 = vmul.f32 %v1963, 1.442695
      %v1976 = vpow.pop %v1975
      %v1977 = vmul.f32 %v1964, 1.442695
      %v1978 = vpow.pop %v1977
      %v1979 = vmul.f32 %v1965, 1.442695
      %v1980 = vpow.pop %v1979
      %v1981 = vmul.f32 %v1966, 1.442695
      %v1982 = vpow.pop %v1981
      %v1983 = vmul.f32 %v1445, %v1936
      %v1984 = vmul.f32 %v1446, %v1938
      %v1985 = vmul.f32 %v1447, %v1940
      %v1986 = vmul.f32 %v1448, %v1942
      %v1987 = vmul.f32 %v1449, %v1944
      %v1988 = vmul.f32 %v1450, %v1946
      %v1989 = vmul.f32 %v1451, %v1948
      %v1990 = vmul.f32 %v1452, %v1950
      %v1991 = vadd.f32 %v1983, %v1968
      %v1992 = vadd.f32 %v1984, %v1970
      %v1993 = vadd.f32 %v1985, %v1972
      %v1994 = vadd.f32 %v1986, %v1974
      %v1995 = vadd.f32 %v1987, %v1976
      %v1996 = vadd.f32 %v1988, %v1978
      %v1997 = vadd.f32 %v1989, %v1980
      %v1998 = vadd.f32 %v1990, %v1982
      %v1999 = vmul.f32 %v1469, %v1936
      %v2000 = vmul.f32 %v1470, %v1938
      %v2001 = vmul.f32 %v1471, %v1940
      %v2002 = vmul.f32 %v1472, %v1942
      %v2003 = vmul.f32 %v1473, %v1944
      %v2004 = vmul.f32 %v1474, %v1946
      %v2005 = vmul.f32 %v1475, %v1948
      %v2006 = vmul.f32 %v1476, %v1950
      %v2007 = vmul.f32 %v1881, %v1968
      %v2008 = vmul.f32 %v1884, %v1970
      %v2009 = vmul.f32 %v1889, %v1972
      %v2010 = vmul.f32 %v1892, %v1974
      %v2011 = vmul.f32 %v1897, %v1976
      %v2012 = vmul.f32 %v1900, %v1978
      %v2013 = vmul.f32 %v1905, %v1980
      %v2014 = vmul.f32 %v1908, %v1982
      %v2015 = vadd.f32 %v1999, %v2007
      %v2016 = vadd.f32 %v2000, %v2008
      %v2017 = vadd.f32 %v2001, %v2009
      %v2018 = vadd.f32 %v2002, %v2010
      %v2019 = vadd.f32 %v2003, %v2011
      %v2020 = vadd.f32 %v2004, %v2012
      %v2021 = vadd.f32 %v2005, %v2013
      %v2022 = vadd.f32 %v2006, %v2014
      %vm2023 = vcmp.eq.f32.partialorder %v1881, 0.0
      %vm2024 = vcmp.eq.f32.partialorder %v1884, 0.0
      %vm2025 = vcmp.eq.f32.partialorder %v1889, 0.0
      %vm2026 = vcmp.eq.f32.partialorder %v1892, 0.0
      %vm2027 = vcmp.eq.f32.partialorder %v1897, 0.0
      %vm2028 = vcmp.eq.f32.partialorder %v1900, 0.0
      %vm2029 = vcmp.eq.f32.partialorder %v1905, 0.0
      %vm2030 = vcmp.eq.f32.partialorder %v1908, 0.0
      %v2031 = vsel %vm2023, -inf, %v1881
      %v2032 = vsel %vm2024, -inf, %v1884
      %v2033 = vsel %vm2025, -inf, %v1889
      %v2034 = vsel %vm2026, -inf, %v1892
      %v2035 = vsel %vm2027, -inf, %v1897
      %v2036 = vsel %vm2028, -inf, %v1900
      %v2037 = vsel %vm2029, -inf, %v1905
      %v2038 = vsel %vm2030, -inf, %v1908
      %v2039 = vsel %vm416, %v2031, -inf
      %v2040 = vrot.slane %v2039, 4
      %v2041 = vmax.f32 %v2039, %v2040
      %v2042 = vrot.slane %v2041, 2
      %v2043 = vmax.f32 %v2041, %v2042
      %v2044 = vrot.slane %v2043, 1
      %v2045 = vmax.f32 %v2043, %v2044
      %v2046 = vsel %vm416, %v2032, -inf
      %v2047 = vrot.slane %v2046, 4
      %v2048 = vmax.f32 %v2046, %v2047
      %v2049 = vrot.slane %v2048, 2
      %v2050 = vmax.f32 %v2048, %v2049
      %v2051 = vrot.slane %v2050, 1
      %v2052 = vmax.f32 %v2050, %v2051
      %v2053 = vsel %vm416, %v2033, -inf
      %v2054 = vrot.slane %v2053, 4
      %v2055 = vmax.f32 %v2053, %v2054
      %v2056 = vrot.slane %v2055, 2
      %v2057 = vmax.f32 %v2055, %v2056
      %v2058 = vrot.slane %v2057, 1
      %v2059 = vmax.f32 %v2057, %v2058
      %v2060 = vsel %vm416, %v2034, -inf
      %v2061 = vrot.slane %v2060, 4
      %v2062 = vmax.f32 %v2060, %v2061
      %v2063 = vrot.slane %v2062, 2
      %v2064 = vmax.f32 %v2062, %v2063
      %v2065 = vrot.slane %v2064, 1
      %v2066 = vmax.f32 %v2064, %v2065
      %v2067 = vsel %vm416, %v2035, -inf
      %v2068 = vrot.slane %v2067, 4
      %v2069 = vmax.f32 %v2067, %v2068
      %v2070 = vrot.slane %v2069, 2
      %v2071 = vmax.f32 %v2069, %v2070
      %v2072 = vrot.slane %v2071, 1
      %v2073 = vmax.f32 %v2071, %v2072
      %v2074 = vsel %vm416, %v2036, -inf
      %v2075 = vrot.slane %v2074, 4
      %v2076 = vmax.f32 %v2074, %v2075
      %v2077 = vrot.slane %v2076, 2
      %v2078 = vmax.f32 %v2076, %v2077
      %v2079 = vrot.slane %v2078, 1
      %v2080 = vmax.f32 %v2078, %v2079
      %v2081 = vsel %vm416, %v2037, -inf
      %v2082 = vrot.slane %v2081, 4
      %v2083 = vmax.f32 %v2081, %v2082
      %v2084 = vrot.slane %v2083, 2
      %v2085 = vmax.f32 %v2083, %v2084
      %v2086 = vrot.slane %v2085, 1
      %v2087 = vmax.f32 %v2085, %v2086
      %v2088 = vsel %vm416, %v2038, -inf
      %v2089 = vrot.slane %v2088, 4
      %v2090 = vmax.f32 %v2088, %v2089
      %v2091 = vrot.slane %v2090, 2
      %v2092 = vmax.f32 %v2090, %v2091
      %v2093 = vrot.slane %v2092, 1
      %v2094 = vmax.f32 %v2092, %v2093
      %v2095 = vsub.f32 %v2031, %v2045
      %v2096 = vsub.f32 %v2032, %v2052
      %v2097 = vsub.f32 %v2033, %v2059
      %v2098 = vsub.f32 %v2034, %v2066
      %v2099 = vsub.f32 %v2035, %v2073
      %v2100 = vsub.f32 %v2036, %v2080
      %v2101 = vsub.f32 %v2037, %v2087
      %v2102 = vsub.f32 %v2038, %v2094
      %v2103 = vmul.f32 %v2095, 100.0
      %v2104 = vmul.f32 %v2096, 100.0
      %v2105 = vmul.f32 %v2097, 100.0
      %v2106 = vmul.f32 %v2098, 100.0
      %v2107 = vmul.f32 %v2099, 100.0
      %v2108 = vmul.f32 %v2100, 100.0
      %v2109 = vmul.f32 %v2101, 100.0
      %v2110 = vmul.f32 %v2102, 100.0
      %v2111 = vmul.f32 %v2103, 1.442695
      %v2112 = vpow.pop %v2111
      %v2113 = vmul.f32 %v2104, 1.442695
      %v2114 = vpow.pop %v2113
      %v2115 = vmul.f32 %v2105, 1.442695
      %v2116 = vpow.pop %v2115
      %v2117 = vmul.f32 %v2106, 1.442695
      %v2118 = vpow.pop %v2117
      %v2119 = vmul.f32 %v2107, 1.442695
      %v2120 = vpow.pop %v2119
      %v2121 = vmul.f32 %v2108, 1.442695
      %v2122 = vpow.pop %v2121
      %v2123 = vmul.f32 %v2109, 1.442695
      %v2124 = vpow.pop %v2123
      %v2125 = vmul.f32 %v2110, 1.442695
      %v2126 = vpow.pop %v2125
      %v2127 = vmul.f32 %v1881, %v2112
      %v2128 = vmul.f32 %v1884, %v2114
      %v2129 = vmul.f32 %v1889, %v2116
      %v2130 = vmul.f32 %v1892, %v2118
      %v2131 = vmul.f32 %v1897, %v2120
      %v2132 = vmul.f32 %v1900, %v2122
      %v2133 = vmul.f32 %v1905, %v2124
      %v2134 = vmul.f32 %v1908, %v2126
      %v2135 = vsel %vm416, %v2127, 0.0
      %v2136 = vrot.slane %v2135, 4
      %v2137 = vadd.f32 %v2135, %v2136
      %v2138 = vrot.slane %v2137, 2
      %v2139 = vadd.f32 %v2137, %v2138
      %v2140 = vrot.slane %v2139, 1
      %v2141 = vadd.f32 %v2139, %v2140
      %v2142 = vsel %vm416, %v2128, 0.0
      %v2143 = vrot.slane %v2142, 4
      %v2144 = vadd.f32 %v2142, %v2143
      %v2145 = vrot.slane %v2144, 2
      %v2146 = vadd.f32 %v2144, %v2145
      %v2147 = vrot.slane %v2146, 1
      %v2148 = vadd.f32 %v2146, %v2147
      %v2149 = vsel %vm416, %v2129, 0.0
      %v2150 = vrot.slane %v2149, 4
      %v2151 = vadd.f32 %v2149, %v2150
      %v2152 = vrot.slane %v2151, 2
      %v2153 = vadd.f32 %v2151, %v2152
      %v2154 = vrot.slane %v2153, 1
      %v2155 = vadd.f32 %v2153, %v2154
      %v2156 = vsel %vm416, %v2130, 0.0
      %v2157 = vrot.slane %v2156, 4
      %v2158 = vadd.f32 %v2156, %v2157
      %v2159 = vrot.slane %v2158, 2
      %v2160 = vadd.f32 %v2158, %v2159
      %v2161 = vrot.slane %v2160, 1
      %v2162 = vadd.f32 %v2160, %v2161
      %v2163 = vsel %vm416, %v2131, 0.0
      %v2164 = vrot.slane %v2163, 4
      %v2165 = vadd.f32 %v2163, %v2164
      %v2166 = vrot.slane %v2165, 2
      %v2167 = vadd.f32 %v2165, %v2166
      %v2168 = vrot.slane %v2167, 1
      %v2169 = vadd.f32 %v2167, %v2168
      %v2170 = vsel %vm416, %v2132, 0.0
      %v2171 = vrot.slane %v2170, 4
      %v2172 = vadd.f32 %v2170, %v2171
      %v2173 = vrot.slane %v2172, 2
      %v2174 = vadd.f32 %v2172, %v2173
      %v2175 = vrot.slane %v2174, 1
      %v2176 = vadd.f32 %v2174, %v2175
      %v2177 = vsel %vm416, %v2133, 0.0
      %v2178 = vrot.slane %v2177, 4
      %v2179 = vadd.f32 %v2177, %v2178
      %v2180 = vrot.slane %v2179, 2
      %v2181 = vadd.f32 %v2179, %v2180
      %v2182 = vrot.slane %v2181, 1
      %v2183 = vadd.f32 %v2181, %v2182
      %v2184 = vsel %vm416, %v2134, 0.0
      %v2185 = vrot.slane %v2184, 4
      %v2186 = vadd.f32 %v2184, %v2185
      %v2187 = vrot.slane %v2186, 2
      %v2188 = vadd.f32 %v2186, %v2187
      %v2189 = vrot.slane %v2188, 1
      %v2190 = vadd.f32 %v2188, %v2189
      %v2191 = vsel %vm416, %v2112, 0.0
      %v2192 = vrot.slane %v2191, 4
      %v2193 = vadd.f32 %v2191, %v2192
      %v2194 = vrot.slane %v2193, 2
      %v2195 = vadd.f32 %v2193, %v2194
      %v2196 = vrot.slane %v2195, 1
      %v2197 = vadd.f32 %v2195, %v2196
      %v2198 = vsel %vm416, %v2114, 0.0
      %v2199 = vrot.slane %v2198, 4
      %v2200 = vadd.f32 %v2198, %v2199
      %v2201 = vrot.slane %v2200, 2
      %v2202 = vadd.f32 %v2200, %v2201
      %v2203 = vrot.slane %v2202, 1
      %v2204 = vadd.f32 %v2202, %v2203
      %v2205 = vsel %vm416, %v2116, 0.0
      %v2206 = vrot.slane %v2205, 4
      %v2207 = vadd.f32 %v2205, %v2206
      %v2208 = vrot.slane %v2207, 2
      %v2209 = vadd.f32 %v2207, %v2208
      %v2210 = vrot.slane %v2209, 1
      %v2211 = vadd.f32 %v2209, %v2210
      %v2212 = vsel %vm416, %v2118, 0.0
      %v2213 = vrot.slane %v2212, 4
      %v2214 = vadd.f32 %v2212, %v2213
      %v2215 = vrot.slane %v2214, 2
      %v2216 = vadd.f32 %v2214, %v2215
      %v2217 = vrot.slane %v2216, 1
      %v2218 = vadd.f32 %v2216, %v2217
      %v2219 = vsel %vm416, %v2120, 0.0
      %v2220 = vrot.slane %v2219, 4
      %v2221 = vadd.f32 %v2219, %v2220
      %v2222 = vrot.slane %v2221, 2
      %v2223 = vadd.f32 %v2221, %v2222
      %v2224 = vrot.slane %v2223, 1
      %v2225 = vadd.f32 %v2223, %v2224
      %v2226 = vsel %vm416, %v2122, 0.0
      %v2227 = vrot.slane %v2226, 4
      %v2228 = vadd.f32 %v2226, %v2227
      %v2229 = vrot.slane %v2228, 2
      %v2230 = vadd.f32 %v2228, %v2229
      %v2231 = vrot.slane %v2230, 1
      %v2232 = vadd.f32 %v2230, %v2231
      %v2233 = vsel %vm416, %v2124, 0.0
      %v2234 = vrot.slane %v2233, 4
      %v2235 = vadd.f32 %v2233, %v2234
      %v2236 = vrot.slane %v2235, 2
      %v2237 = vadd.f32 %v2235, %v2236
      %v2238 = vrot.slane %v2237, 1
      %v2239 = vadd.f32 %v2237, %v2238
      %v2240 = vsel %vm416, %v2126, 0.0
      %v2241 = vrot.slane %v2240, 4
      %v2242 = vadd.f32 %v2240, %v2241
      %v2243 = vrot.slane %v2242, 2
      %v2244 = vadd.f32 %v2242, %v2243
      %v2245 = vrot.slane %v2244, 1
      %v2246 = vadd.f32 %v2244, %v2245
      %v2247 = vrcp.pop %v2197
      %v2248 = vmul.f32 %v2141, %v2247
      %v2249 = vrcp.pop %v2204
      %v2250 = vmul.f32 %v2148, %v2249
      %v2251 = vrcp.pop %v2211
      %v2252 = vmul.f32 %v2155, %v2251
      %v2253 = vrcp.pop %v2218
      %v2254 = vmul.f32 %v2162, %v2253
      %v2255 = vrcp.pop %v2225
      %v2256 = vmul.f32 %v2169, %v2255
      %v2257 = vrcp.pop %v2232
      %v2258 = vmul.f32 %v2176, %v2257
      %v2259 = vrcp.pop %v2239
      %v2260 = vmul.f32 %v2183, %v2259
      %v2261 = vrcp.pop %v2246
      %v2262 = vmul.f32 %v2190, %v2261
      %v2263 = vmax.f32 %v1717, %v2248
      %v2264 = vmax.f32 %v1718, %v2250
      %v2265 = vmax.f32 %v1719, %v2252
      %v2266 = vmax.f32 %v1720, %v2254
      %v2267 = vmax.f32 %v1721, %v2256
      %v2268 = vmax.f32 %v1722, %v2258
      %v2269 = vmax.f32 %v1723, %v2260
      %v2270 = vmax.f32 %v1724, %v2262
      %v2271 = vsub.f32 %v1717, %v2263
      %v2272 = vsub.f32 %v1718, %v2264
      %v2273 = vsub.f32 %v1719, %v2265
      %v2274 = vsub.f32 %v1720, %v2266
      %v2275 = vsub.f32 %v1721, %v2267
      %v2276 = vsub.f32 %v1722, %v2268
      %v2277 = vsub.f32 %v1723, %v2269
      %v2278 = vsub.f32 %v1724, %v2270
      %v2279 = vmul.f32 %v2271, 100.0
      %v2280 = vmul.f32 %v2272, 100.0
      %v2281 = vmul.f32 %v2273, 100.0
      %v2282 = vmul.f32 %v2274, 100.0
      %v2283 = vmul.f32 %v2275, 100.0
      %v2284 = vmul.f32 %v2276, 100.0
      %v2285 = vmul.f32 %v2277, 100.0
      %v2286 = vmul.f32 %v2278, 100.0
      %v2287 = vmul.f32 %v2279, 1.442695
      %v2288 = vpow.pop %v2287
      %v2289 = vmul.f32 %v2280, 1.442695
      %v2290 = vpow.pop %v2289
      %v2291 = vmul.f32 %v2281, 1.442695
      %v2292 = vpow.pop %v2291
      %v2293 = vmul.f32 %v2282, 1.442695
      %v2294 = vpow.pop %v2293
      %v2295 = vmul.f32 %v2283, 1.442695
      %v2296 = vpow.pop %v2295
      %v2297 = vmul.f32 %v2284, 1.442695
      %v2298 = vpow.pop %v2297
      %v2299 = vmul.f32 %v2285, 1.442695
      %v2300 = vpow.pop %v2299
      %v2301 = vmul.f32 %v2286, 1.442695
      %v2302 = vpow.pop %v2301
      %v2303 = vsub.f32 %v2248, %v2263
      %v2304 = vsub.f32 %v2250, %v2264
      %v2305 = vsub.f32 %v2252, %v2265
      %v2306 = vsub.f32 %v2254, %v2266
      %v2307 = vsub.f32 %v2256, %v2267
      %v2308 = vsub.f32 %v2258, %v2268
      %v2309 = vsub.f32 %v2260, %v2269
      %v2310 = vsub.f32 %v2262, %v2270
      %v2311 = vmul.f32 %v2303, 100.0
      %v2312 = vmul.f32 %v2304, 100.0
      %v2313 = vmul.f32 %v2305, 100.0
      %v2314 = vmul.f32 %v2306, 100.0
      %v2315 = vmul.f32 %v2307, 100.0
      %v2316 = vmul.f32 %v2308, 100.0
      %v2317 = vmul.f32 %v2309, 100.0
      %v2318 = vmul.f32 %v2310, 100.0
      %v2319 = vmul.f32 %v2311, 1.442695
      %v2320 = vpow.pop %v2319
      %v2321 = vmul.f32 %v2312, 1.442695
      %v2322 = vpow.pop %v2321
      %v2323 = vmul.f32 %v2313, 1.442695
      %v2324 = vpow.pop %v2323
      %v2325 = vmul.f32 %v2314, 1.442695
      %v2326 = vpow.pop %v2325
      %v2327 = vmul.f32 %v2315, 1.442695
      %v2328 = vpow.pop %v2327
      %v2329 = vmul.f32 %v2316, 1.442695
      %v2330 = vpow.pop %v2329
      %v2331 = vmul.f32 %v2317, 1.442695
      %v2332 = vpow.pop %v2331
      %v2333 = vmul.f32 %v2318, 1.442695
      %v2334 = vpow.pop %v2333
      %v2335 = vmul.f32 %v1797, %v2288
      %v2336 = vmul.f32 %v1798, %v2290
      %v2337 = vmul.f32 %v1799, %v2292
      %v2338 = vmul.f32 %v1800, %v2294
      %v2339 = vmul.f32 %v1801, %v2296
      %v2340 = vmul.f32 %v1802, %v2298
      %v2341 = vmul.f32 %v1803, %v2300
      %v2342 = vmul.f32 %v1804, %v2302
      %v2343 = vadd.f32 %v2335, %v2320
      %v2344 = vadd.f32 %v2336, %v2322
      %v2345 = vadd.f32 %v2337, %v2324
      %v2346 = vadd.f32 %v2338, %v2326
      %v2347 = vadd.f32 %v2339, %v2328
      %v2348 = vadd.f32 %v2340, %v2330
      %v2349 = vadd.f32 %v2341, %v2332
      %v2350 = vadd.f32 %v2342, %v2334
      %v2351 = vmul.f32 %v1821, %v2288
      %v2352 = vmul.f32 %v1822, %v2290
      %v2353 = vmul.f32 %v1823, %v2292
      %v2354 = vmul.f32 %v1824, %v2294
      %v2355 = vmul.f32 %v1825, %v2296
      %v2356 = vmul.f32 %v1826, %v2298
      %v2357 = vmul.f32 %v1827, %v2300
      %v2358 = vmul.f32 %v1828, %v2302
      %v2359 = vmul.f32 %v2248, %v2320
      %v2360 = vmul.f32 %v2250, %v2322
      %v2361 = vmul.f32 %v2252, %v2324
      %v2362 = vmul.f32 %v2254, %v2326
      %v2363 = vmul.f32 %v2256, %v2328
      %v2364 = vmul.f32 %v2258, %v2330
      %v2365 = vmul.f32 %v2260, %v2332
      %v2366 = vmul.f32 %v2262, %v2334
      %v2367 = vadd.f32 %v2351, %v2359
      %v2368 = vadd.f32 %v2352, %v2360
      %v2369 = vadd.f32 %v2353, %v2361
      %v2370 = vadd.f32 %v2354, %v2362
      %v2371 = vadd.f32 %v2355, %v2363
      %v2372 = vadd.f32 %v2356, %v2364
      %v2373 = vadd.f32 %v2357, %v2365
      %v2374 = vadd.f32 %v2358, %v2366
      %s2375 = scalar_lea.vmem %s173, 64
      %v2376 = vld [vmem:[%s2375] sm:$0xf]
      %v2377 = vld [vmem:[%s2375 + $0x4] sm:$0xf]
      %v2378 = vld [vmem:[%s2375 + $0x8] sm:$0xf]
      %v2379 = vld [vmem:[%s2375 + $0xc] sm:$0xf]
      %v2384 = vunpack.c.l.b16 %v2376
      %v2385 = vunpack.c.l.b16 %v2377
      %v2386 = vunpack.c.l.b16 %v2378
      %v2387 = vunpack.c.l.b16 %v2379
      %v2388 = vpack.c.b16 %v2385, %v2384
      %v2389 = vpack.c.b16 %v2387, %v2386
      %2392 = vmatprep.subr.bf16.mxu0 0
      %2393 = vmatpush1.bf16.msra.mxu0 0
      %2394 = vmatprep.subr.bf16.mxu0 0
      %2395 = vmatpush1.bf16.msra.mxu0 0
      %2396 = vmatprep.subr.bf16.mxu0 0
      %2397 = vmatpush1.bf16.msra.mxu0 0
      %2398 = vmatprep.subr.bf16.mxu0 0
      %2399 = vmatpush1.bf16.msra.mxu0 0
      %2400 = vmatprep.subr.bf16.mxu0 0
      %2401 = vmatpush1.bf16.msra.mxu0 0
      %2402 = vmatprep.subr.bf16.mxu0 0
      %2403 = vmatpush1.bf16.msra.mxu0 0
      %2404 = vmatprep.subr.bf16.mxu0 0
      %2405 = vmatpush1.bf16.msra.mxu0 %v2389
      %2406 = vmatprep.subr.bf16.mxu0 0
      %2407 = vmatpush1.bf16.msra.mxu0 %v2388
      %2408 = vmatprep.subr.bf16.mxu0 0
      %2409 = vmatpush2.bf16.msra.mxu0 0
      %2410 = vmatprep.subr.bf16.mxu0 0
      %2411 = vmatpush2.bf16.msra.mxu0 0
      %2412 = vmatprep.subr.bf16.mxu0 0
      %2413 = vmatpush2.bf16.msra.mxu0 0
      %2414 = vmatprep.subr.bf16.mxu0 0
      %2415 = vmatpush2.bf16.msra.mxu0 0
      %2416 = vmatprep.subr.bf16.mxu0 0
      %2417 = vmatpush2.bf16.msra.mxu0 0
      %2418 = vmatprep.subr.bf16.mxu0 0
      %2419 = vmatpush2.bf16.msra.mxu0 0
      %2420 = vmatprep.subr.bf16.mxu0 0
      %2421 = vmatpush2.bf16.msra.mxu0 0
      %2422 = vmatprep.subr.bf16.mxu0 0
      %2423 = vmatpush2.bf16.msra.mxu0 0
      %2424 = vmatprep.mubr.bf16.mxu0 0
      %2425 = vmatmul.mubr.bf16.gmra.mxu0 %v228
      %v2426 = vpop.f32.mrf.mxu0
      %v2427 = vadd.f32 0.0, %v2426
      %v2428 = vpop.f32.mrf.mxu0
      %v2429 = vpop.f32.mrf.mxu0
      %v2430 = vadd.f32 0.0, %v2429
      %v2431 = vpop.f32.mrf.mxu0
      %2432 = vmatprep.mubr.bf16.mxu0 0
      %2433 = vmatmul.mubr.bf16.gmra.mxu0 %v231
      %v2434 = vpop.f32.mrf.mxu0
      %v2435 = vadd.f32 0.0, %v2434
      %v2436 = vpop.f32.mrf.mxu0
      %v2437 = vpop.f32.mrf.mxu0
      %v2438 = vadd.f32 0.0, %v2437
      %v2439 = vpop.f32.mrf.mxu0
      %2440 = vmatprep.mubr.bf16.mxu0 0
      %2441 = vmatmul.mubr.bf16.gmra.mxu0 %v234
      %v2442 = vpop.f32.mrf.mxu0
      %v2443 = vadd.f32 0.0, %v2442
      %v2444 = vpop.f32.mrf.mxu0
      %v2445 = vpop.f32.mrf.mxu0
      %v2446 = vadd.f32 0.0, %v2445
      %v2447 = vpop.f32.mrf.mxu0
      %2448 = vmatprep.mubr.bf16.mxu0 0
      %2449 = vmatmul.mubr.bf16.gmra.mxu0 %v237
      %v2450 = vpop.f32.mrf.mxu0
      %v2451 = vadd.f32 0.0, %v2450
      %v2452 = vpop.f32.mrf.mxu0
      %v2453 = vpop.f32.mrf.mxu0
      %v2454 = vadd.f32 0.0, %v2453
      %v2455 = vpop.f32.mrf.mxu0
      %2456 = vdwg.mxu0
      %v2457 = vmax.f32 %v1911, %v2427
      %v2458 = vmax.f32 %v1912, %v2430
      %v2459 = vmax.f32 %v1913, %v2435
      %v2460 = vmax.f32 %v1914, %v2438
      %v2461 = vmax.f32 %v1915, %v2443
      %v2462 = vmax.f32 %v1916, %v2446
      %v2463 = vmax.f32 %v1917, %v2451
      %v2464 = vmax.f32 %v1918, %v2454
      %v2465 = vsub.f32 %v1911, %v2457
      %v2466 = vsub.f32 %v1912, %v2458
      %v2467 = vsub.f32 %v1913, %v2459
      %v2468 = vsub.f32 %v1914, %v2460
      %v2469 = vsub.f32 %v1915, %v2461
      %v2470 = vsub.f32 %v1916, %v2462
      %v2471 = vsub.f32 %v1917, %v2463
      %v2472 = vsub.f32 %v1918, %v2464
      %v2473 = vmul.f32 %v2465, 100.0
      %v2474 = vmul.f32 %v2466, 100.0
      %v2475 = vmul.f32 %v2467, 100.0
      %v2476 = vmul.f32 %v2468, 100.0
      %v2477 = vmul.f32 %v2469, 100.0
      %v2478 = vmul.f32 %v2470, 100.0
      %v2479 = vmul.f32 %v2471, 100.0
      %v2480 = vmul.f32 %v2472, 100.0
      %v2481 = vmul.f32 %v2473, 1.442695
      %v2482 = vpow.pop %v2481
      %v2483 = vmul.f32 %v2474, 1.442695
      %v2484 = vpow.pop %v2483
      %v2485 = vmul.f32 %v2475, 1.442695
      %v2486 = vpow.pop %v2485
      %v2487 = vmul.f32 %v2476, 1.442695
      %v2488 = vpow.pop %v2487
      %v2489 = vmul.f32 %v2477, 1.442695
      %v2490 = vpow.pop %v2489
      %v2491 = vmul.f32 %v2478, 1.442695
      %v2492 = vpow.pop %v2491
      %v2493 = vmul.f32 %v2479, 1.442695
      %v2494 = vpow.pop %v2493
      %v2495 = vmul.f32 %v2480, 1.442695
      %v2496 = vpow.pop %v2495
      %v2497 = vsub.f32 %v2427, %v2457
      %v2498 = vsub.f32 %v2430, %v2458
      %v2499 = vsub.f32 %v2435, %v2459
      %v2500 = vsub.f32 %v2438, %v2460
      %v2501 = vsub.f32 %v2443, %v2461
      %v2502 = vsub.f32 %v2446, %v2462
      %v2503 = vsub.f32 %v2451, %v2463
      %v2504 = vsub.f32 %v2454, %v2464
      %v2505 = vmul.f32 %v2497, 100.0
      %v2506 = vmul.f32 %v2498, 100.0
      %v2507 = vmul.f32 %v2499, 100.0
      %v2508 = vmul.f32 %v2500, 100.0
      %v2509 = vmul.f32 %v2501, 100.0
      %v2510 = vmul.f32 %v2502, 100.0
      %v2511 = vmul.f32 %v2503, 100.0
      %v2512 = vmul.f32 %v2504, 100.0
      %v2513 = vmul.f32 %v2505, 1.442695
      %v2514 = vpow.pop %v2513
      %v2515 = vmul.f32 %v2506, 1.442695
      %v2516 = vpow.pop %v2515
      %v2517 = vmul.f32 %v2507, 1.442695
      %v2518 = vpow.pop %v2517
      %v2519 = vmul.f32 %v2508, 1.442695
      %v2520 = vpow.pop %v2519
      %v2521 = vmul.f32 %v2509, 1.442695
      %v2522 = vpow.pop %v2521
      %v2523 = vmul.f32 %v2510, 1.442695
      %v2524 = vpow.pop %v2523
      %v2525 = vmul.f32 %v2511, 1.442695
      %v2526 = vpow.pop %v2525
      %v2527 = vmul.f32 %v2512, 1.442695
      %v2528 = vpow.pop %v2527
      %v2529 = vmul.f32 %v1991, %v2482
      %v2530 = vmul.f32 %v1992, %v2484
      %v2531 = vmul.f32 %v1993, %v2486
      %v2532 = vmul.f32 %v1994, %v2488
      %v2533 = vmul.f32 %v1995, %v2490
      %v2534 = vmul.f32 %v1996, %v2492
      %v2535 = vmul.f32 %v1997, %v2494
      %v2536 = vmul.f32 %v1998, %v2496
      %v2537 = vadd.f32 %v2529, %v2514
      %v2538 = vadd.f32 %v2530, %v2516
      %v2539 = vadd.f32 %v2531, %v2518
      %v2540 = vadd.f32 %v2532, %v2520
      %v2541 = vadd.f32 %v2533, %v2522
      %v2542 = vadd.f32 %v2534, %v2524
      %v2543 = vadd.f32 %v2535, %v2526
      %v2544 = vadd.f32 %v2536, %v2528
      %v2545 = vmul.f32 %v2015, %v2482
      %v2546 = vmul.f32 %v2016, %v2484
      %v2547 = vmul.f32 %v2017, %v2486
      %v2548 = vmul.f32 %v2018, %v2488
      %v2549 = vmul.f32 %v2019, %v2490
      %v2550 = vmul.f32 %v2020, %v2492
      %v2551 = vmul.f32 %v2021, %v2494
      %v2552 = vmul.f32 %v2022, %v2496
      %v2553 = vmul.f32 %v2427, %v2514
      %v2554 = vmul.f32 %v2430, %v2516
      %v2555 = vmul.f32 %v2435, %v2518
      %v2556 = vmul.f32 %v2438, %v2520
      %v2557 = vmul.f32 %v2443, %v2522
      %v2558 = vmul.f32 %v2446, %v2524
      %v2559 = vmul.f32 %v2451, %v2526
      %v2560 = vmul.f32 %v2454, %v2528
      %v2561 = vadd.f32 %v2545, %v2553
      %v2562 = vadd.f32 %v2546, %v2554
      %v2563 = vadd.f32 %v2547, %v2555
      %v2564 = vadd.f32 %v2548, %v2556
      %v2565 = vadd.f32 %v2549, %v2557
      %v2566 = vadd.f32 %v2550, %v2558
      %v2567 = vadd.f32 %v2551, %v2559
      %v2568 = vadd.f32 %v2552, %v2560
      %vm2569 = vcmp.eq.f32.partialorder %v2427, 0.0
      %vm2570 = vcmp.eq.f32.partialorder %v2430, 0.0
      %vm2571 = vcmp.eq.f32.partialorder %v2435, 0.0
      %vm2572 = vcmp.eq.f32.partialorder %v2438, 0.0
      %vm2573 = vcmp.eq.f32.partialorder %v2443, 0.0
      %vm2574 = vcmp.eq.f32.partialorder %v2446, 0.0
      %vm2575 = vcmp.eq.f32.partialorder %v2451, 0.0
      %vm2576 = vcmp.eq.f32.partialorder %v2454, 0.0
      %v2577 = vsel %vm2569, -inf, %v2427
      %v2578 = vsel %vm2570, -inf, %v2430
      %v2579 = vsel %vm2571, -inf, %v2435
      %v2580 = vsel %vm2572, -inf, %v2438
      %v2581 = vsel %vm2573, -inf, %v2443
      %v2582 = vsel %vm2574, -inf, %v2446
      %v2583 = vsel %vm2575, -inf, %v2451
      %v2584 = vsel %vm2576, -inf, %v2454
      %v2585 = vsel %vm416, %v2577, -inf
      %v2586 = vrot.slane %v2585, 4
      %v2587 = vmax.f32 %v2585, %v2586
      %v2588 = vrot.slane %v2587, 2
      %v2589 = vmax.f32 %v2587, %v2588
      %v2590 = vrot.slane %v2589, 1
      %v2591 = vmax.f32 %v2589, %v2590
      %v2592 = vsel %vm416, %v2578, -inf
      %v2593 = vrot.slane %v2592, 4
      %v2594 = vmax.f32 %v2592, %v2593
      %v2595 = vrot.slane %v2594, 2
      %v2596 = vmax.f32 %v2594, %v2595
      %v2597 = vrot.slane %v2596, 1
      %v2598 = vmax.f32 %v2596, %v2597
      %v2599 = vsel %vm416, %v2579, -inf
      %v2600 = vrot.slane %v2599, 4
      %v2601 = vmax.f32 %v2599, %v2600
      %v2602 = vrot.slane %v2601, 2
      %v2603 = vmax.f32 %v2601, %v2602
      %v2604 = vrot.slane %v2603, 1
      %v2605 = vmax.f32 %v2603, %v2604
      %v2606 = vsel %vm416, %v2580, -inf
      %v2607 = vrot.slane %v2606, 4
      %v2608 = vmax.f32 %v2606, %v2607
      %v2609 = vrot.slane %v2608, 2
      %v2610 = vmax.f32 %v2608, %v2609
      %v2611 = vrot.slane %v2610, 1
      %v2612 = vmax.f32 %v2610, %v2611
      %v2613 = vsel %vm416, %v2581, -inf
      %v2614 = vrot.slane %v2613, 4
      %v2615 = vmax.f32 %v2613, %v2614
      %v2616 = vrot.slane %v2615, 2
      %v2617 = vmax.f32 %v2615, %v2616
      %v2618 = vrot.slane %v2617, 1
      %v2619 = vmax.f32 %v2617, %v2618
      %v2620 = vsel %vm416, %v2582, -inf
      %v2621 = vrot.slane %v2620, 4
      %v2622 = vmax.f32 %v2620, %v2621
      %v2623 = vrot.slane %v2622, 2
      %v2624 = vmax.f32 %v2622, %v2623
      %v2625 = vrot.slane %v2624, 1
      %v2626 = vmax.f32 %v2624, %v2625
      %v2627 = vsel %vm416, %v2583, -inf
      %v2628 = vrot.slane %v2627, 4
      %v2629 = vmax.f32 %v2627, %v2628
      %v2630 = vrot.slane %v2629, 2
      %v2631 = vmax.f32 %v2629, %v2630
      %v2632 = vrot.slane %v2631, 1
      %v2633 = vmax.f32 %v2631, %v2632
      %v2634 = vsel %vm416, %v2584, -inf
      %v2635 = vrot.slane %v2634, 4
      %v2636 = vmax.f32 %v2634, %v2635
      %v2637 = vrot.slane %v2636, 2
      %v2638 = vmax.f32 %v2636, %v2637
      %v2639 = vrot.slane %v2638, 1
      %v2640 = vmax.f32 %v2638, %v2639
      %v2641 = vsub.f32 %v2577, %v2591
      %v2642 = vsub.f32 %v2578, %v2598
      %v2643 = vsub.f32 %v2579, %v2605
      %v2644 = vsub.f32 %v2580, %v2612
      %v2645 = vsub.f32 %v2581, %v2619
      %v2646 = vsub.f32 %v2582, %v2626
      %v2647 = vsub.f32 %v2583, %v2633
      %v2648 = vsub.f32 %v2584, %v2640
      %v2649 = vmul.f32 %v2641, 100.0
      %v2650 = vmul.f32 %v2642, 100.0
      %v2651 = vmul.f32 %v2643, 100.0
      %v2652 = vmul.f32 %v2644, 100.0
      %v2653 = vmul.f32 %v2645, 100.0
      %v2654 = vmul.f32 %v2646, 100.0
      %v2655 = vmul.f32 %v2647, 100.0
      %v2656 = vmul.f32 %v2648, 100.0
      %v2657 = vmul.f32 %v2649, 1.442695
      %v2658 = vpow.pop %v2657
      %v2659 = vmul.f32 %v2650, 1.442695
      %v2660 = vpow.pop %v2659
      %v2661 = vmul.f32 %v2651, 1.442695
      %v2662 = vpow.pop %v2661
      %v2663 = vmul.f32 %v2652, 1.442695
      %v2664 = vpow.pop %v2663
      %v2665 = vmul.f32 %v2653, 1.442695
      %v2666 = vpow.pop %v2665
      %v2667 = vmul.f32 %v2654, 1.442695
      %v2668 = vpow.pop %v2667
      %v2669 = vmul.f32 %v2655, 1.442695
      %v2670 = vpow.pop %v2669
      %v2671 = vmul.f32 %v2656, 1.442695
      %v2672 = vpow.pop %v2671
      %v2673 = vmul.f32 %v2427, %v2658
      %v2674 = vmul.f32 %v2430, %v2660
      %v2675 = vmul.f32 %v2435, %v2662
      %v2676 = vmul.f32 %v2438, %v2664
      %v2677 = vmul.f32 %v2443, %v2666
      %v2678 = vmul.f32 %v2446, %v2668
      %v2679 = vmul.f32 %v2451, %v2670
      %v2680 = vmul.f32 %v2454, %v2672
      %v2681 = vsel %vm416, %v2673, 0.0
      %v2682 = vrot.slane %v2681, 4
      %v2683 = vadd.f32 %v2681, %v2682
      %v2684 = vrot.slane %v2683, 2
      %v2685 = vadd.f32 %v2683, %v2684
      %v2686 = vrot.slane %v2685, 1
      %v2687 = vadd.f32 %v2685, %v2686
      %v2688 = vsel %vm416, %v2674, 0.0
      %v2689 = vrot.slane %v2688, 4
      %v2690 = vadd.f32 %v2688, %v2689
      %v2691 = vrot.slane %v2690, 2
      %v2692 = vadd.f32 %v2690, %v2691
      %v2693 = vrot.slane %v2692, 1
      %v2694 = vadd.f32 %v2692, %v2693
      %v2695 = vsel %vm416, %v2675, 0.0
      %v2696 = vrot.slane %v2695, 4
      %v2697 = vadd.f32 %v2695, %v2696
      %v2698 = vrot.slane %v2697, 2
      %v2699 = vadd.f32 %v2697, %v2698
      %v2700 = vrot.slane %v2699, 1
      %v2701 = vadd.f32 %v2699, %v2700
      %v2702 = vsel %vm416, %v2676, 0.0
      %v2703 = vrot.slane %v2702, 4
      %v2704 = vadd.f32 %v2702, %v2703
      %v2705 = vrot.slane %v2704, 2
      %v2706 = vadd.f32 %v2704, %v2705
      %v2707 = vrot.slane %v2706, 1
      %v2708 = vadd.f32 %v2706, %v2707
      %v2709 = vsel %vm416, %v2677, 0.0
      %v2710 = vrot.slane %v2709, 4
      %v2711 = vadd.f32 %v2709, %v2710
      %v2712 = vrot.slane %v2711, 2
      %v2713 = vadd.f32 %v2711, %v2712
      %v2714 = vrot.slane %v2713, 1
      %v2715 = vadd.f32 %v2713, %v2714
      %v2716 = vsel %vm416, %v2678, 0.0
      %v2717 = vrot.slane %v2716, 4
      %v2718 = vadd.f32 %v2716, %v2717
      %v2719 = vrot.slane %v2718, 2
      %v2720 = vadd.f32 %v2718, %v2719
      %v2721 = vrot.slane %v2720, 1
      %v2722 = vadd.f32 %v2720, %v2721
      %v2723 = vsel %vm416, %v2679, 0.0
      %v2724 = vrot.slane %v2723, 4
      %v2725 = vadd.f32 %v2723, %v2724
      %v2726 = vrot.slane %v2725, 2
      %v2727 = vadd.f32 %v2725, %v2726
      %v2728 = vrot.slane %v2727, 1
      %v2729 = vadd.f32 %v2727, %v2728
      %v2730 = vsel %vm416, %v2680, 0.0
      %v2731 = vrot.slane %v2730, 4
      %v2732 = vadd.f32 %v2730, %v2731
      %v2733 = vrot.slane %v2732, 2
      %v2734 = vadd.f32 %v2732, %v2733
      %v2735 = vrot.slane %v2734, 1
      %v2736 = vadd.f32 %v2734, %v2735
      %v2737 = vsel %vm416, %v2658, 0.0
      %v2738 = vrot.slane %v2737, 4
      %v2739 = vadd.f32 %v2737, %v2738
      %v2740 = vrot.slane %v2739, 2
      %v2741 = vadd.f32 %v2739, %v2740
      %v2742 = vrot.slane %v2741, 1
      %v2743 = vadd.f32 %v2741, %v2742
      %v2744 = vsel %vm416, %v2660, 0.0
      %v2745 = vrot.slane %v2744, 4
      %v2746 = vadd.f32 %v2744, %v2745
      %v2747 = vrot.slane %v2746, 2
      %v2748 = vadd.f32 %v2746, %v2747
      %v2749 = vrot.slane %v2748, 1
      %v2750 = vadd.f32 %v2748, %v2749
      %v2751 = vsel %vm416, %v2662, 0.0
      %v2752 = vrot.slane %v2751, 4
      %v2753 = vadd.f32 %v2751, %v2752
      %v2754 = vrot.slane %v2753, 2
      %v2755 = vadd.f32 %v2753, %v2754
      %v2756 = vrot.slane %v2755, 1
      %v2757 = vadd.f32 %v2755, %v2756
      %v2758 = vsel %vm416, %v2664, 0.0
      %v2759 = vrot.slane %v2758, 4
      %v2760 = vadd.f32 %v2758, %v2759
      %v2761 = vrot.slane %v2760, 2
      %v2762 = vadd.f32 %v2760, %v2761
      %v2763 = vrot.slane %v2762, 1
      %v2764 = vadd.f32 %v2762, %v2763
      %v2765 = vsel %vm416, %v2666, 0.0
      %v2766 = vrot.slane %v2765, 4
      %v2767 = vadd.f32 %v2765, %v2766
      %v2768 = vrot.slane %v2767, 2
      %v2769 = vadd.f32 %v2767, %v2768
      %v2770 = vrot.slane %v2769, 1
      %v2771 = vadd.f32 %v2769, %v2770
      %v2772 = vsel %vm416, %v2668, 0.0
      %v2773 = vrot.slane %v2772, 4
      %v2774 = vadd.f32 %v2772, %v2773
      %v2775 = vrot.slane %v2774, 2
      %v2776 = vadd.f32 %v2774, %v2775
      %v2777 = vrot.slane %v2776, 1
      %v2778 = vadd.f32 %v2776, %v2777
      %v2779 = vsel %vm416, %v2670, 0.0
      %v2780 = vrot.slane %v2779, 4
      %v2781 = vadd.f32 %v2779, %v2780
      %v2782 = vrot.slane %v2781, 2
      %v2783 = vadd.f32 %v2781, %v2782
      %v2784 = vrot.slane %v2783, 1
      %v2785 = vadd.f32 %v2783, %v2784
      %v2786 = vsel %vm416, %v2672, 0.0
      %v2787 = vrot.slane %v2786, 4
      %v2788 = vadd.f32 %v2786, %v2787
      %v2789 = vrot.slane %v2788, 2
      %v2790 = vadd.f32 %v2788, %v2789
      %v2791 = vrot.slane %v2790, 1
      %v2792 = vadd.f32 %v2790, %v2791
      %v2793 = vrcp.pop %v2743
      %v2794 = vmul.f32 %v2687, %v2793
      %v2795 = vrcp.pop %v2750
      %v2796 = vmul.f32 %v2694, %v2795
      %v2797 = vrcp.pop %v2757
      %v2798 = vmul.f32 %v2701, %v2797
      %v2799 = vrcp.pop %v2764
      %v2800 = vmul.f32 %v2708, %v2799
      %v2801 = vrcp.pop %v2771
      %v2802 = vmul.f32 %v2715, %v2801
      %v2803 = vrcp.pop %v2778
      %v2804 = vmul.f32 %v2722, %v2803
      %v2805 = vrcp.pop %v2785
      %v2806 = vmul.f32 %v2729, %v2805
      %v2807 = vrcp.pop %v2792
      %v2808 = vmul.f32 %v2736, %v2807
      %v2809 = vmax.f32 %v2263, %v2794
      %v2810 = vmax.f32 %v2264, %v2796
      %v2811 = vmax.f32 %v2265, %v2798
      %v2812 = vmax.f32 %v2266, %v2800
      %v2813 = vmax.f32 %v2267, %v2802
      %v2814 = vmax.f32 %v2268, %v2804
      %v2815 = vmax.f32 %v2269, %v2806
      %v2816 = vmax.f32 %v2270, %v2808
      %v2817 = vsub.f32 %v2263, %v2809
      %v2818 = vsub.f32 %v2264, %v2810
      %v2819 = vsub.f32 %v2265, %v2811
      %v2820 = vsub.f32 %v2266, %v2812
      %v2821 = vsub.f32 %v2267, %v2813
      %v2822 = vsub.f32 %v2268, %v2814
      %v2823 = vsub.f32 %v2269, %v2815
      %v2824 = vsub.f32 %v2270, %v2816
      %v2825 = vmul.f32 %v2817, 100.0
      %v2826 = vmul.f32 %v2818, 100.0
      %v2827 = vmul.f32 %v2819, 100.0
      %v2828 = vmul.f32 %v2820, 100.0
      %v2829 = vmul.f32 %v2821, 100.0
      %v2830 = vmul.f32 %v2822, 100.0
      %v2831 = vmul.f32 %v2823, 100.0
      %v2832 = vmul.f32 %v2824, 100.0
      %v2833 = vmul.f32 %v2825, 1.442695
      %v2834 = vpow.pop %v2833
      %v2835 = vmul.f32 %v2826, 1.442695
      %v2836 = vpow.pop %v2835
      %v2837 = vmul.f32 %v2827, 1.442695
      %v2838 = vpow.pop %v2837
      %v2839 = vmul.f32 %v2828, 1.442695
      %v2840 = vpow.pop %v2839
      %v2841 = vmul.f32 %v2829, 1.442695
      %v2842 = vpow.pop %v2841
      %v2843 = vmul.f32 %v2830, 1.442695
      %v2844 = vpow.pop %v2843
      %v2845 = vmul.f32 %v2831, 1.442695
      %v2846 = vpow.pop %v2845
      %v2847 = vmul.f32 %v2832, 1.442695
      %v2848 = vpow.pop %v2847
      %v2849 = vsub.f32 %v2794, %v2809
      %v2850 = vsub.f32 %v2796, %v2810
      %v2851 = vsub.f32 %v2798, %v2811
      %v2852 = vsub.f32 %v2800, %v2812
      %v2853 = vsub.f32 %v2802, %v2813
      %v2854 = vsub.f32 %v2804, %v2814
      %v2855 = vsub.f32 %v2806, %v2815
      %v2856 = vsub.f32 %v2808, %v2816
      %v2857 = vmul.f32 %v2849, 100.0
      %v2858 = vmul.f32 %v2850, 100.0
      %v2859 = vmul.f32 %v2851, 100.0
      %v2860 = vmul.f32 %v2852, 100.0
      %v2861 = vmul.f32 %v2853, 100.0
      %v2862 = vmul.f32 %v2854, 100.0
      %v2863 = vmul.f32 %v2855, 100.0
      %v2864 = vmul.f32 %v2856, 100.0
      %v2865 = vmul.f32 %v2857, 1.442695
      %v2866 = vpow.pop %v2865
      %v2867 = vmul.f32 %v2858, 1.442695
      %v2868 = vpow.pop %v2867
      %v2869 = vmul.f32 %v2859, 1.442695
      %v2870 = vpow.pop %v2869
      %v2871 = vmul.f32 %v2860, 1.442695
      %v2872 = vpow.pop %v2871
      %v2873 = vmul.f32 %v2861, 1.442695
      %v2874 = vpow.pop %v2873
      %v2875 = vmul.f32 %v2862, 1.442695
      %v2876 = vpow.pop %v2875
      %v2877 = vmul.f32 %v2863, 1.442695
      %v2878 = vpow.pop %v2877
      %v2879 = vmul.f32 %v2864, 1.442695
      %v2880 = vpow.pop %v2879
      %v2881 = vmul.f32 %v2343, %v2834
      %v2882 = vmul.f32 %v2344, %v2836
      %v2883 = vmul.f32 %v2345, %v2838
      %v2884 = vmul.f32 %v2346, %v2840
      %v2885 = vmul.f32 %v2347, %v2842
      %v2886 = vmul.f32 %v2348, %v2844
      %v2887 = vmul.f32 %v2349, %v2846
      %v2888 = vmul.f32 %v2350, %v2848
      %v2889 = vadd.f32 %v2881, %v2866
      %v2890 = vadd.f32 %v2882, %v2868
      %v2891 = vadd.f32 %v2883, %v2870
      %v2892 = vadd.f32 %v2884, %v2872
      %v2893 = vadd.f32 %v2885, %v2874
      %v2894 = vadd.f32 %v2886, %v2876
      %v2895 = vadd.f32 %v2887, %v2878
      %v2896 = vadd.f32 %v2888, %v2880
      %v2897 = vmul.f32 %v2367, %v2834
      %v2898 = vmul.f32 %v2368, %v2836
      %v2899 = vmul.f32 %v2369, %v2838
      %v2900 = vmul.f32 %v2370, %v2840
      %v2901 = vmul.f32 %v2371, %v2842
      %v2902 = vmul.f32 %v2372, %v2844
      %v2903 = vmul.f32 %v2373, %v2846
      %v2904 = vmul.f32 %v2374, %v2848
      %v2905 = vmul.f32 %v2794, %v2866
      %v2906 = vmul.f32 %v2796, %v2868
      %v2907 = vmul.f32 %v2798, %v2870
      %v2908 = vmul.f32 %v2800, %v2872
      %v2909 = vmul.f32 %v2802, %v2874
      %v2910 = vmul.f32 %v2804, %v2876
      %v2911 = vmul.f32 %v2806, %v2878
      %v2912 = vmul.f32 %v2808, %v2880
      %v2913 = vadd.f32 %v2897, %v2905
      %v2914 = vadd.f32 %v2898, %v2906
      %v2915 = vadd.f32 %v2899, %v2907
      %v2916 = vadd.f32 %v2900, %v2908
      %v2917 = vadd.f32 %v2901, %v2909
      %v2918 = vadd.f32 %v2902, %v2910
      %v2919 = vadd.f32 %v2903, %v2911
      %v2920 = vadd.f32 %v2904, %v2912
      %s2921 = scalar_lea.vmem %s173, 80
      %v2922 = vld [vmem:[%s2921] sm:$0xf]
      %v2923 = vld [vmem:[%s2921 + $0x4] sm:$0xf]
      %v2924 = vld [vmem:[%s2921 + $0x8] sm:$0xf]
      %v2925 = vld [vmem:[%s2921 + $0xc] sm:$0xf]
      %v2930 = vunpack.c.l.b16 %v2922
      %v2931 = vunpack.c.l.b16 %v2923
      %v2932 = vunpack.c.l.b16 %v2924
      %v2933 = vunpack.c.l.b16 %v2925
      %v2934 = vpack.c.b16 %v2931, %v2930
      %v2935 = vpack.c.b16 %v2933, %v2932
      %2938 = vmatprep.subr.bf16.mxu0 0
      %2939 = vmatpush1.bf16.msra.mxu0 0
      %2940 = vmatprep.subr.bf16.mxu0 0
      %2941 = vmatpush1.bf16.msra.mxu0 0
      %2942 = vmatprep.subr.bf16.mxu0 0
      %2943 = vmatpush1.bf16.msra.mxu0 0
      %2944 = vmatprep.subr.bf16.mxu0 0
      %2945 = vmatpush1.bf16.msra.mxu0 0
      %2946 = vmatprep.subr.bf16.mxu0 0
      %2947 = vmatpush1.bf16.msra.mxu0 0
      %2948 = vmatprep.subr.bf16.mxu0 0
      %2949 = vmatpush1.bf16.msra.mxu0 0
      %2950 = vmatprep.subr.bf16.mxu0 0
      %2951 = vmatpush1.bf16.msra.mxu0 %v2935
      %2952 = vmatprep.subr.bf16.mxu0 0
      %2953 = vmatpush1.bf16.msra.mxu0 %v2934
      %2954 = vmatprep.subr.bf16.mxu0 0
      %2955 = vmatpush2.bf16.msra.mxu0 0
      %2956 = vmatprep.subr.bf16.mxu0 0
      %2957 = vmatpush2.bf16.msra.mxu0 0
      %2958 = vmatprep.subr.bf16.mxu0 0
      %2959 = vmatpush2.bf16.msra.mxu0 0
      %2960 = vmatprep.subr.bf16.mxu0 0
      %2961 = vmatpush2.bf16.msra.mxu0 0
      %2962 = vmatprep.subr.bf16.mxu0 0
      %2963 = vmatpush2.bf16.msra.mxu0 0
      %2964 = vmatprep.subr.bf16.mxu0 0
      %2965 = vmatpush2.bf16.msra.mxu0 0
      %2966 = vmatprep.subr.bf16.mxu0 0
      %2967 = vmatpush2.bf16.msra.mxu0 0
      %2968 = vmatprep.subr.bf16.mxu0 0
      %2969 = vmatpush2.bf16.msra.mxu0 0
      %2970 = vmatprep.mubr.bf16.mxu0 0
      %2971 = vmatmul.mubr.bf16.gmra.mxu0 %v228
      %v2972 = vpop.f32.mrf.mxu0
      %v2973 = vadd.f32 0.0, %v2972
      %v2974 = vpop.f32.mrf.mxu0
      %v2975 = vpop.f32.mrf.mxu0
      %v2976 = vadd.f32 0.0, %v2975
      %v2977 = vpop.f32.mrf.mxu0
      %2978 = vmatprep.mubr.bf16.mxu0 0
      %2979 = vmatmul.mubr.bf16.gmra.mxu0 %v231
      %v2980 = vpop.f32.mrf.mxu0
      %v2981 = vadd.f32 0.0, %v2980
      %v2982 = vpop.f32.mrf.mxu0
      %v2983 = vpop.f32.mrf.mxu0
      %v2984 = vadd.f32 0.0, %v2983
      %v2985 = vpop.f32.mrf.mxu0
      %2986 = vmatprep.mubr.bf16.mxu0 0
      %2987 = vmatmul.mubr.bf16.gmra.mxu0 %v234
      %v2988 = vpop.f32.mrf.mxu0
      %v2989 = vadd.f32 0.0, %v2988
      %v2990 = vpop.f32.mrf.mxu0
      %v2991 = vpop.f32.mrf.mxu0
      %v2992 = vadd.f32 0.0, %v2991
      %v2993 = vpop.f32.mrf.mxu0
      %2994 = vmatprep.mubr.bf16.mxu0 0
      %2995 = vmatmul.mubr.bf16.gmra.mxu0 %v237
      %v2996 = vpop.f32.mrf.mxu0
      %v2997 = vadd.f32 0.0, %v2996
      %v2998 = vpop.f32.mrf.mxu0
      %v2999 = vpop.f32.mrf.mxu0
      %v3000 = vadd.f32 0.0, %v2999
      %v3001 = vpop.f32.mrf.mxu0
      %3002 = vdwg.mxu0
      %v3003 = vmax.f32 %v2457, %v2973
      %v3004 = vmax.f32 %v2458, %v2976
      %v3005 = vmax.f32 %v2459, %v2981
      %v3006 = vmax.f32 %v2460, %v2984
      %v3007 = vmax.f32 %v2461, %v2989
      %v3008 = vmax.f32 %v2462, %v2992
      %v3009 = vmax.f32 %v2463, %v2997
      %v3010 = vmax.f32 %v2464, %v3000
      %v3011 = vsub.f32 %v2457, %v3003
      %v3012 = vsub.f32 %v2458, %v3004
      %v3013 = vsub.f32 %v2459, %v3005
      %v3014 = vsub.f32 %v2460, %v3006
      %v3015 = vsub.f32 %v2461, %v3007
      %v3016 = vsub.f32 %v2462, %v3008
      %v3017 = vsub.f32 %v2463, %v3009
      %v3018 = vsub.f32 %v2464, %v3010
      %v3019 = vmul.f32 %v3011, 100.0
      %v3020 = vmul.f32 %v3012, 100.0
      %v3021 = vmul.f32 %v3013, 100.0
      %v3022 = vmul.f32 %v3014, 100.0
      %v3023 = vmul.f32 %v3015, 100.0
      %v3024 = vmul.f32 %v3016, 100.0
      %v3025 = vmul.f32 %v3017, 100.0
      %v3026 = vmul.f32 %v3018, 100.0
      %v3027 = vmul.f32 %v3019, 1.442695
      %v3028 = vpow.pop %v3027
      %v3029 = vmul.f32 %v3020, 1.442695
      %v3030 = vpow.pop %v3029
      %v3031 = vmul.f32 %v3021, 1.442695
      %v3032 = vpow.pop %v3031
      %v3033 = vmul.f32 %v3022, 1.442695
      %v3034 = vpow.pop %v3033
      %v3035 = vmul.f32 %v3023, 1.442695
      %v3036 = vpow.pop %v3035
      %v3037 = vmul.f32 %v3024, 1.442695
      %v3038 = vpow.pop %v3037
      %v3039 = vmul.f32 %v3025, 1.442695
      %v3040 = vpow.pop %v3039
      %v3041 = vmul.f32 %v3026, 1.442695
      %v3042 = vpow.pop %v3041
      %v3043 = vsub.f32 %v2973, %v3003
      %v3044 = vsub.f32 %v2976, %v3004
      %v3045 = vsub.f32 %v2981, %v3005
      %v3046 = vsub.f32 %v2984, %v3006
      %v3047 = vsub.f32 %v2989, %v3007
      %v3048 = vsub.f32 %v2992, %v3008
      %v3049 = vsub.f32 %v2997, %v3009
      %v3050 = vsub.f32 %v3000, %v3010
      %v3051 = vmul.f32 %v3043, 100.0
      %v3052 = vmul.f32 %v3044, 100.0
      %v3053 = vmul.f32 %v3045, 100.0
      %v3054 = vmul.f32 %v3046, 100.0
      %v3055 = vmul.f32 %v3047, 100.0
      %v3056 = vmul.f32 %v3048, 100.0
      %v3057 = vmul.f32 %v3049, 100.0
      %v3058 = vmul.f32 %v3050, 100.0
      %v3059 = vmul.f32 %v3051, 1.442695
      %v3060 = vpow.pop %v3059
      %v3061 = vmul.f32 %v3052, 1.442695
      %v3062 = vpow.pop %v3061
      %v3063 = vmul.f32 %v3053, 1.442695
      %v3064 = vpow.pop %v3063
      %v3065 = vmul.f32 %v3054, 1.442695
      %v3066 = vpow.pop %v3065
      %v3067 = vmul.f32 %v3055, 1.442695
      %v3068 = vpow.pop %v3067
      %v3069 = vmul.f32 %v3056, 1.442695
      %v3070 = vpow.pop %v3069
      %v3071 = vmul.f32 %v3057, 1.442695
      %v3072 = vpow.pop %v3071
      %v3073 = vmul.f32 %v3058, 1.442695
      %v3074 = vpow.pop %v3073
      %v3075 = vmul.f32 %v2537, %v3028
      %v3076 = vmul.f32 %v2538, %v3030
      %v3077 = vmul.f32 %v2539, %v3032
      %v3078 = vmul.f32 %v2540, %v3034
      %v3079 = vmul.f32 %v2541, %v3036
      %v3080 = vmul.f32 %v2542, %v3038
      %v3081 = vmul.f32 %v2543, %v3040
      %v3082 = vmul.f32 %v2544, %v3042
      %v3083 = vadd.f32 %v3075, %v3060
      %v3084 = vadd.f32 %v3076, %v3062
      %v3085 = vadd.f32 %v3077, %v3064
      %v3086 = vadd.f32 %v3078, %v3066
      %v3087 = vadd.f32 %v3079, %v3068
      %v3088 = vadd.f32 %v3080, %v3070
      %v3089 = vadd.f32 %v3081, %v3072
      %v3090 = vadd.f32 %v3082, %v3074
      %v3091 = vmul.f32 %v2561, %v3028
      %v3092 = vmul.f32 %v2562, %v3030
      %v3093 = vmul.f32 %v2563, %v3032
      %v3094 = vmul.f32 %v2564, %v3034
      %v3095 = vmul.f32 %v2565, %v3036
      %v3096 = vmul.f32 %v2566, %v3038
      %v3097 = vmul.f32 %v2567, %v3040
      %v3098 = vmul.f32 %v2568, %v3042
      %v3099 = vmul.f32 %v2973, %v3060
      %v3100 = vmul.f32 %v2976, %v3062
      %v3101 = vmul.f32 %v2981, %v3064
      %v3102 = vmul.f32 %v2984, %v3066
      %v3103 = vmul.f32 %v2989, %v3068
      %v3104 = vmul.f32 %v2992, %v3070
      %v3105 = vmul.f32 %v2997, %v3072
      %v3106 = vmul.f32 %v3000, %v3074
      %v3107 = vadd.f32 %v3091, %v3099
      %v3108 = vadd.f32 %v3092, %v3100
      %v3109 = vadd.f32 %v3093, %v3101
      %v3110 = vadd.f32 %v3094, %v3102
      %v3111 = vadd.f32 %v3095, %v3103
      %v3112 = vadd.f32 %v3096, %v3104
      %v3113 = vadd.f32 %v3097, %v3105
      %v3114 = vadd.f32 %v3098, %v3106
      %vm3115 = vcmp.eq.f32.partialorder %v2973, 0.0
      %vm3116 = vcmp.eq.f32.partialorder %v2976, 0.0
      %vm3117 = vcmp.eq.f32.partialorder %v2981, 0.0
      %vm3118 = vcmp.eq.f32.partialorder %v2984, 0.0
      %vm3119 = vcmp.eq.f32.partialorder %v2989, 0.0
      %vm3120 = vcmp.eq.f32.partialorder %v2992, 0.0
      %vm3121 = vcmp.eq.f32.partialorder %v2997, 0.0
      %vm3122 = vcmp.eq.f32.partialorder %v3000, 0.0
      %v3123 = vsel %vm3115, -inf, %v2973
      %v3124 = vsel %vm3116, -inf, %v2976
      %v3125 = vsel %vm3117, -inf, %v2981
      %v3126 = vsel %vm3118, -inf, %v2984
      %v3127 = vsel %vm3119, -inf, %v2989
      %v3128 = vsel %vm3120, -inf, %v2992
      %v3129 = vsel %vm3121, -inf, %v2997
      %v3130 = vsel %vm3122, -inf, %v3000
      %v3131 = vsel %vm416, %v3123, -inf
      %v3132 = vrot.slane %v3131, 4
      %v3133 = vmax.f32 %v3131, %v3132
      %v3134 = vrot.slane %v3133, 2
      %v3135 = vmax.f32 %v3133, %v3134
      %v3136 = vrot.slane %v3135, 1
      %v3137 = vmax.f32 %v3135, %v3136
      %v3138 = vsel %vm416, %v3124, -inf
      %v3139 = vrot.slane %v3138, 4
      %v3140 = vmax.f32 %v3138, %v3139
      %v3141 = vrot.slane %v3140, 2
      %v3142 = vmax.f32 %v3140, %v3141
      %v3143 = vrot.slane %v3142, 1
      %v3144 = vmax.f32 %v3142, %v3143
      %v3145 = vsel %vm416, %v3125, -inf
      %v3146 = vrot.slane %v3145, 4
      %v3147 = vmax.f32 %v3145, %v3146
      %v3148 = vrot.slane %v3147, 2
      %v3149 = vmax.f32 %v3147, %v3148
      %v3150 = vrot.slane %v3149, 1
      %v3151 = vmax.f32 %v3149, %v3150
      %v3152 = vsel %vm416, %v3126, -inf
      %v3153 = vrot.slane %v3152, 4
      %v3154 = vmax.f32 %v3152, %v3153
      %v3155 = vrot.slane %v3154, 2
      %v3156 = vmax.f32 %v3154, %v3155
      %v3157 = vrot.slane %v3156, 1
      %v3158 = vmax.f32 %v3156, %v3157
      %v3159 = vsel %vm416, %v3127, -inf
      %v3160 = vrot.slane %v3159, 4
      %v3161 = vmax.f32 %v3159, %v3160
      %v3162 = vrot.slane %v3161, 2
      %v3163 = vmax.f32 %v3161, %v3162
      %v3164 = vrot.slane %v3163, 1
      %v3165 = vmax.f32 %v3163, %v3164
      %v3166 = vsel %vm416, %v3128, -inf
      %v3167 = vrot.slane %v3166, 4
      %v3168 = vmax.f32 %v3166, %v3167
      %v3169 = vrot.slane %v3168, 2
      %v3170 = vmax.f32 %v3168, %v3169
      %v3171 = vrot.slane %v3170, 1
      %v3172 = vmax.f32 %v3170, %v3171
      %v3173 = vsel %vm416, %v3129, -inf
      %v3174 = vrot.slane %v3173, 4
      %v3175 = vmax.f32 %v3173, %v3174
      %v3176 = vrot.slane %v3175, 2
      %v3177 = vmax.f32 %v3175, %v3176
      %v3178 = vrot.slane %v3177, 1
      %v3179 = vmax.f32 %v3177, %v3178
      %v3180 = vsel %vm416, %v3130, -inf
      %v3181 = vrot.slane %v3180, 4
      %v3182 = vmax.f32 %v3180, %v3181
      %v3183 = vrot.slane %v3182, 2
      %v3184 = vmax.f32 %v3182, %v3183
      %v3185 = vrot.slane %v3184, 1
      %v3186 = vmax.f32 %v3184, %v3185
      %v3187 = vsub.f32 %v3123, %v3137
      %v3188 = vsub.f32 %v3124, %v3144
      %v3189 = vsub.f32 %v3125, %v3151
      %v3190 = vsub.f32 %v3126, %v3158
      %v3191 = vsub.f32 %v3127, %v3165
      %v3192 = vsub.f32 %v3128, %v3172
      %v3193 = vsub.f32 %v3129, %v3179
      %v3194 = vsub.f32 %v3130, %v3186
      %v3195 = vmul.f32 %v3187, 100.0
      %v3196 = vmul.f32 %v3188, 100.0
      %v3197 = vmul.f32 %v3189, 100.0
      %v3198 = vmul.f32 %v3190, 100.0
      %v3199 = vmul.f32 %v3191, 100.0
      %v3200 = vmul.f32 %v3192, 100.0
      %v3201 = vmul.f32 %v3193, 100.0
      %v3202 = vmul.f32 %v3194, 100.0
      %v3203 = vmul.f32 %v3195, 1.442695
      %v3204 = vpow.pop %v3203
      %v3205 = vmul.f32 %v3196, 1.442695
      %v3206 = vpow.pop %v3205
      %v3207 = vmul.f32 %v3197, 1.442695
      %v3208 = vpow.pop %v3207
      %v3209 = vmul.f32 %v3198, 1.442695
      %v3210 = vpow.pop %v3209
      %v3211 = vmul.f32 %v3199, 1.442695
      %v3212 = vpow.pop %v3211
      %v3213 = vmul.f32 %v3200, 1.442695
      %v3214 = vpow.pop %v3213
      %v3215 = vmul.f32 %v3201, 1.442695
      %v3216 = vpow.pop %v3215
      %v3217 = vmul.f32 %v3202, 1.442695
      %v3218 = vpow.pop %v3217
      %v3219 = vmul.f32 %v2973, %v3204
      %v3220 = vmul.f32 %v2976, %v3206
      %v3221 = vmul.f32 %v2981, %v3208
      %v3222 = vmul.f32 %v2984, %v3210
      %v3223 = vmul.f32 %v2989, %v3212
      %v3224 = vmul.f32 %v2992, %v3214
      %v3225 = vmul.f32 %v2997, %v3216
      %v3226 = vmul.f32 %v3000, %v3218
      %v3227 = vsel %vm416, %v3219, 0.0
      %v3228 = vrot.slane %v3227, 4
      %v3229 = vadd.f32 %v3227, %v3228
      %v3230 = vrot.slane %v3229, 2
      %v3231 = vadd.f32 %v3229, %v3230
      %v3232 = vrot.slane %v3231, 1
      %v3233 = vadd.f32 %v3231, %v3232
      %v3234 = vsel %vm416, %v3220, 0.0
      %v3235 = vrot.slane %v3234, 4
      %v3236 = vadd.f32 %v3234, %v3235
      %v3237 = vrot.slane %v3236, 2
      %v3238 = vadd.f32 %v3236, %v3237
      %v3239 = vrot.slane %v3238, 1
      %v3240 = vadd.f32 %v3238, %v3239
      %v3241 = vsel %vm416, %v3221, 0.0
      %v3242 = vrot.slane %v3241, 4
      %v3243 = vadd.f32 %v3241, %v3242
      %v3244 = vrot.slane %v3243, 2
      %v3245 = vadd.f32 %v3243, %v3244
      %v3246 = vrot.slane %v3245, 1
      %v3247 = vadd.f32 %v3245, %v3246
      %v3248 = vsel %vm416, %v3222, 0.0
      %v3249 = vrot.slane %v3248, 4
      %v3250 = vadd.f32 %v3248, %v3249
      %v3251 = vrot.slane %v3250, 2
      %v3252 = vadd.f32 %v3250, %v3251
      %v3253 = vrot.slane %v3252, 1
      %v3254 = vadd.f32 %v3252, %v3253
      %v3255 = vsel %vm416, %v3223, 0.0
      %v3256 = vrot.slane %v3255, 4
      %v3257 = vadd.f32 %v3255, %v3256
      %v3258 = vrot.slane %v3257, 2
      %v3259 = vadd.f32 %v3257, %v3258
      %v3260 = vrot.slane %v3259, 1
      %v3261 = vadd.f32 %v3259, %v3260
      %v3262 = vsel %vm416, %v3224, 0.0
      %v3263 = vrot.slane %v3262, 4
      %v3264 = vadd.f32 %v3262, %v3263
      %v3265 = vrot.slane %v3264, 2
      %v3266 = vadd.f32 %v3264, %v3265
      %v3267 = vrot.slane %v3266, 1
      %v3268 = vadd.f32 %v3266, %v3267
      %v3269 = vsel %vm416, %v3225, 0.0
      %v3270 = vrot.slane %v3269, 4
      %v3271 = vadd.f32 %v3269, %v3270
      %v3272 = vrot.slane %v3271, 2
      %v3273 = vadd.f32 %v3271, %v3272
      %v3274 = vrot.slane %v3273, 1
      %v3275 = vadd.f32 %v3273, %v3274
      %v3276 = vsel %vm416, %v3226, 0.0
      %v3277 = vrot.slane %v3276, 4
      %v3278 = vadd.f32 %v3276, %v3277
      %v3279 = vrot.slane %v3278, 2
      %v3280 = vadd.f32 %v3278, %v3279
      %v3281 = vrot.slane %v3280, 1
      %v3282 = vadd.f32 %v3280, %v3281
      %v3283 = vsel %vm416, %v3204, 0.0
      %v3284 = vrot.slane %v3283, 4
      %v3285 = vadd.f32 %v3283, %v3284
      %v3286 = vrot.slane %v3285, 2
      %v3287 = vadd.f32 %v3285, %v3286
      %v3288 = vrot.slane %v3287, 1
      %v3289 = vadd.f32 %v3287, %v3288
      %v3290 = vsel %vm416, %v3206, 0.0
      %v3291 = vrot.slane %v3290, 4
      %v3292 = vadd.f32 %v3290, %v3291
      %v3293 = vrot.slane %v3292, 2
      %v3294 = vadd.f32 %v3292, %v3293
      %v3295 = vrot.slane %v3294, 1
      %v3296 = vadd.f32 %v3294, %v3295
      %v3297 = vsel %vm416, %v3208, 0.0
      %v3298 = vrot.slane %v3297, 4
      %v3299 = vadd.f32 %v3297, %v3298
      %v3300 = vrot.slane %v3299, 2
      %v3301 = vadd.f32 %v3299, %v3300
      %v3302 = vrot.slane %v3301, 1
      %v3303 = vadd.f32 %v3301, %v3302
      %v3304 = vsel %vm416, %v3210, 0.0
      %v3305 = vrot.slane %v3304, 4
      %v3306 = vadd.f32 %v3304, %v3305
      %v3307 = vrot.slane %v3306, 2
      %v3308 = vadd.f32 %v3306, %v3307
      %v3309 = vrot.slane %v3308, 1
      %v3310 = vadd.f32 %v3308, %v3309
      %v3311 = vsel %vm416, %v3212, 0.0
      %v3312 = vrot.slane %v3311, 4
      %v3313 = vadd.f32 %v3311, %v3312
      %v3314 = vrot.slane %v3313, 2
      %v3315 = vadd.f32 %v3313, %v3314
      %v3316 = vrot.slane %v3315, 1
      %v3317 = vadd.f32 %v3315, %v3316
      %v3318 = vsel %vm416, %v3214, 0.0
      %v3319 = vrot.slane %v3318, 4
      %v3320 = vadd.f32 %v3318, %v3319
      %v3321 = vrot.slane %v3320, 2
      %v3322 = vadd.f32 %v3320, %v3321
      %v3323 = vrot.slane %v3322, 1
      %v3324 = vadd.f32 %v3322, %v3323
      %v3325 = vsel %vm416, %v3216, 0.0
      %v3326 = vrot.slane %v3325, 4
      %v3327 = vadd.f32 %v3325, %v3326
      %v3328 = vrot.slane %v3327, 2
      %v3329 = vadd.f32 %v3327, %v3328
      %v3330 = vrot.slane %v3329, 1
      %v3331 = vadd.f32 %v3329, %v3330
      %v3332 = vsel %vm416, %v3218, 0.0
      %v3333 = vrot.slane %v3332, 4
      %v3334 = vadd.f32 %v3332, %v3333
      %v3335 = vrot.slane %v3334, 2
      %v3336 = vadd.f32 %v3334, %v3335
      %v3337 = vrot.slane %v3336, 1
      %v3338 = vadd.f32 %v3336, %v3337
      %v3339 = vrcp.pop %v3289
      %v3340 = vmul.f32 %v3233, %v3339
      %v3341 = vrcp.pop %v3296
      %v3342 = vmul.f32 %v3240, %v3341
      %v3343 = vrcp.pop %v3303
      %v3344 = vmul.f32 %v3247, %v3343
      %v3345 = vrcp.pop %v3310
      %v3346 = vmul.f32 %v3254, %v3345
      %v3347 = vrcp.pop %v3317
      %v3348 = vmul.f32 %v3261, %v3347
      %v3349 = vrcp.pop %v3324
      %v3350 = vmul.f32 %v3268, %v3349
      %v3351 = vrcp.pop %v3331
      %v3352 = vmul.f32 %v3275, %v3351
      %v3353 = vrcp.pop %v3338
      %v3354 = vmul.f32 %v3282, %v3353
      %v3355 = vmax.f32 %v2809, %v3340
      %v3356 = vmax.f32 %v2810, %v3342
      %v3357 = vmax.f32 %v2811, %v3344
      %v3358 = vmax.f32 %v2812, %v3346
      %v3359 = vmax.f32 %v2813, %v3348
      %v3360 = vmax.f32 %v2814, %v3350
      %v3361 = vmax.f32 %v2815, %v3352
      %v3362 = vmax.f32 %v2816, %v3354
      %v3363 = vsub.f32 %v2809, %v3355
      %v3364 = vsub.f32 %v2810, %v3356
      %v3365 = vsub.f32 %v2811, %v3357
      %v3366 = vsub.f32 %v2812, %v3358
      %v3367 = vsub.f32 %v2813, %v3359
      %v3368 = vsub.f32 %v2814, %v3360
      %v3369 = vsub.f32 %v2815, %v3361
      %v3370 = vsub.f32 %v2816, %v3362
      %v3371 = vmul.f32 %v3363, 100.0
      %v3372 = vmul.f32 %v3364, 100.0
      %v3373 = vmul.f32 %v3365, 100.0
      %v3374 = vmul.f32 %v3366, 100.0
      %v3375 = vmul.f32 %v3367, 100.0
      %v3376 = vmul.f32 %v3368, 100.0
      %v3377 = vmul.f32 %v3369, 100.0
      %v3378 = vmul.f32 %v3370, 100.0
      %v3379 = vmul.f32 %v3371, 1.442695
      %v3380 = vpow.pop %v3379
      %v3381 = vmul.f32 %v3372, 1.442695
      %v3382 = vpow.pop %v3381
      %v3383 = vmul.f32 %v3373, 1.442695
      %v3384 = vpow.pop %v3383
      %v3385 = vmul.f32 %v3374, 1.442695
      %v3386 = vpow.pop %v3385
      %v3387 = vmul.f32 %v3375, 1.442695
      %v3388 = vpow.pop %v3387
      %v3389 = vmul.f32 %v3376, 1.442695
      %v3390 = vpow.pop %v3389
      %v3391 = vmul.f32 %v3377, 1.442695
      %v3392 = vpow.pop %v3391
      %v3393 = vmul.f32 %v3378, 1.442695
      %v3394 = vpow.pop %v3393
      %v3395 = vsub.f32 %v3340, %v3355
      %v3396 = vsub.f32 %v3342, %v3356
      %v3397 = vsub.f32 %v3344, %v3357
      %v3398 = vsub.f32 %v3346, %v3358
      %v3399 = vsub.f32 %v3348, %v3359
      %v3400 = vsub.f32 %v3350, %v3360
      %v3401 = vsub.f32 %v3352, %v3361
      %v3402 = vsub.f32 %v3354, %v3362
      %v3403 = vmul.f32 %v3395, 100.0
      %v3404 = vmul.f32 %v3396, 100.0
      %v3405 = vmul.f32 %v3397, 100.0
      %v3406 = vmul.f32 %v3398, 100.0
      %v3407 = vmul.f32 %v3399, 100.0
      %v3408 = vmul.f32 %v3400, 100.0
      %v3409 = vmul.f32 %v3401, 100.0
      %v3410 = vmul.f32 %v3402, 100.0
      %v3411 = vmul.f32 %v3403, 1.442695
      %v3412 = vpow.pop %v3411
      %v3413 = vmul.f32 %v3404, 1.442695
      %v3414 = vpow.pop %v3413
      %v3415 = vmul.f32 %v3405, 1.442695
      %v3416 = vpow.pop %v3415
      %v3417 = vmul.f32 %v3406, 1.442695
      %v3418 = vpow.pop %v3417
      %v3419 = vmul.f32 %v3407, 1.442695
      %v3420 = vpow.pop %v3419
      %v3421 = vmul.f32 %v3408, 1.442695
      %v3422 = vpow.pop %v3421
      %v3423 = vmul.f32 %v3409, 1.442695
      %v3424 = vpow.pop %v3423
      %v3425 = vmul.f32 %v3410, 1.442695
      %v3426 = vpow.pop %v3425
      %v3427 = vmul.f32 %v2889, %v3380
      %v3428 = vmul.f32 %v2890, %v3382
      %v3429 = vmul.f32 %v2891, %v3384
      %v3430 = vmul.f32 %v2892, %v3386
      %v3431 = vmul.f32 %v2893, %v3388
      %v3432 = vmul.f32 %v2894, %v3390
      %v3433 = vmul.f32 %v2895, %v3392
      %v3434 = vmul.f32 %v2896, %v3394
      %v3435 = vadd.f32 %v3427, %v3412
      %v3436 = vadd.f32 %v3428, %v3414
      %v3437 = vadd.f32 %v3429, %v3416
      %v3438 = vadd.f32 %v3430, %v3418
      %v3439 = vadd.f32 %v3431, %v3420
      %v3440 = vadd.f32 %v3432, %v3422
      %v3441 = vadd.f32 %v3433, %v3424
      %v3442 = vadd.f32 %v3434, %v3426
      %v3443 = vmul.f32 %v2913, %v3380
      %v3444 = vmul.f32 %v2914, %v3382
      %v3445 = vmul.f32 %v2915, %v3384
      %v3446 = vmul.f32 %v2916, %v3386
      %v3447 = vmul.f32 %v2917, %v3388
      %v3448 = vmul.f32 %v2918, %v3390
      %v3449 = vmul.f32 %v2919, %v3392
      %v3450 = vmul.f32 %v2920, %v3394
      %v3451 = vmul.f32 %v3340, %v3412
      %v3452 = vmul.f32 %v3342, %v3414
      %v3453 = vmul.f32 %v3344, %v3416
      %v3454 = vmul.f32 %v3346, %v3418
      %v3455 = vmul.f32 %v3348, %v3420
      %v3456 = vmul.f32 %v3350, %v3422
      %v3457 = vmul.f32 %v3352, %v3424
      %v3458 = vmul.f32 %v3354, %v3426
      %v3459 = vadd.f32 %v3443, %v3451
      %v3460 = vadd.f32 %v3444, %v3452
      %v3461 = vadd.f32 %v3445, %v3453
      %v3462 = vadd.f32 %v3446, %v3454
      %v3463 = vadd.f32 %v3447, %v3455
      %v3464 = vadd.f32 %v3448, %v3456
      %v3465 = vadd.f32 %v3449, %v3457
      %v3466 = vadd.f32 %v3450, %v3458
      %v3467 = vrcp.pop %v3083
      %v3468 = vrcp.pop %v3084
      %v3469 = vrcp.pop %v3085
      %v3470 = vrcp.pop %v3086
      %v3471 = vrcp.pop %v3087
      %v3472 = vrcp.pop %v3088
      %v3473 = vrcp.pop %v3089
      %v3474 = vrcp.pop %v3090
      %v3475 = vmul.f32 %v3107, %v3467
      %v3476 = vmul.f32 %v3108, %v3468
      %v3477 = vmul.f32 %v3109, %v3469
      %v3478 = vmul.f32 %v3110, %v3470
      %v3479 = vmul.f32 %v3111, %v3471
      %v3480 = vmul.f32 %v3112, %v3472
      %v3481 = vmul.f32 %v3113, %v3473
      %v3482 = vmul.f32 %v3114, %v3474
      %vm3483 = vcmp.eq.f32.partialorder %v3475, 0.0
      %vm3484 = vcmp.eq.f32.partialorder %v3476, 0.0
      %vm3485 = vcmp.eq.f32.partialorder %v3477, 0.0
      %vm3486 = vcmp.eq.f32.partialorder %v3478, 0.0
      %vm3487 = vcmp.eq.f32.partialorder %v3479, 0.0
      %vm3488 = vcmp.eq.f32.partialorder %v3480, 0.0
      %vm3489 = vcmp.eq.f32.partialorder %v3481, 0.0
      %vm3490 = vcmp.eq.f32.partialorder %v3482, 0.0
      %v3491 = vsel %vm3483, -inf, %v3475
      %v3492 = vsel %vm3484, -inf, %v3476
      %v3493 = vsel %vm3485, -inf, %v3477
      %v3494 = vsel %vm3486, -inf, %v3478
      %v3495 = vsel %vm3487, -inf, %v3479
      %v3496 = vsel %vm3488, -inf, %v3480
      %v3497 = vsel %vm3489, -inf, %v3481
      %v3498 = vsel %vm3490, -inf, %v3482
      %v3499 = vsel %vm416, %v3491, -inf
      %v3500 = vrot.slane %v3499, 4
      %v3501 = vmax.f32 %v3499, %v3500
      %v3502 = vrot.slane %v3501, 2
      %v3503 = vmax.f32 %v3501, %v3502
      %v3504 = vrot.slane %v3503, 1
      %v3505 = vmax.f32 %v3503, %v3504
      %v3506 = vsel %vm416, %v3492, -inf
      %v3507 = vrot.slane %v3506, 4
      %v3508 = vmax.f32 %v3506, %v3507
      %v3509 = vrot.slane %v3508, 2
      %v3510 = vmax.f32 %v3508, %v3509
      %v3511 = vrot.slane %v3510, 1
      %v3512 = vmax.f32 %v3510, %v3511
      %v3513 = vsel %vm416, %v3493, -inf
      %v3514 = vrot.slane %v3513, 4
      %v3515 = vmax.f32 %v3513, %v3514
      %v3516 = vrot.slane %v3515, 2
      %v3517 = vmax.f32 %v3515, %v3516
      %v3518 = vrot.slane %v3517, 1
      %v3519 = vmax.f32 %v3517, %v3518
      %v3520 = vsel %vm416, %v3494, -inf
      %v3521 = vrot.slane %v3520, 4
      %v3522 = vmax.f32 %v3520, %v3521
      %v3523 = vrot.slane %v3522, 2
      %v3524 = vmax.f32 %v3522, %v3523
      %v3525 = vrot.slane %v3524, 1
      %v3526 = vmax.f32 %v3524, %v3525
      %v3527 = vsel %vm416, %v3495, -inf
      %v3528 = vrot.slane %v3527, 4
      %v3529 = vmax.f32 %v3527, %v3528
      %v3530 = vrot.slane %v3529, 2
      %v3531 = vmax.f32 %v3529, %v3530
      %v3532 = vrot.slane %v3531, 1
      %v3533 = vmax.f32 %v3531, %v3532
      %v3534 = vsel %vm416, %v3496, -inf
      %v3535 = vrot.slane %v3534, 4
      %v3536 = vmax.f32 %v3534, %v3535
      %v3537 = vrot.slane %v3536, 2
      %v3538 = vmax.f32 %v3536, %v3537
      %v3539 = vrot.slane %v3538, 1
      %v3540 = vmax.f32 %v3538, %v3539
      %v3541 = vsel %vm416, %v3497, -inf
      %v3542 = vrot.slane %v3541, 4
      %v3543 = vmax.f32 %v3541, %v3542
      %v3544 = vrot.slane %v3543, 2
      %v3545 = vmax.f32 %v3543, %v3544
      %v3546 = vrot.slane %v3545, 1
      %v3547 = vmax.f32 %v3545, %v3546
      %v3548 = vsel %vm416, %v3498, -inf
      %v3549 = vrot.slane %v3548, 4
      %v3550 = vmax.f32 %v3548, %v3549
      %v3551 = vrot.slane %v3550, 2
      %v3552 = vmax.f32 %v3550, %v3551
      %v3553 = vrot.slane %v3552, 1
      %v3554 = vmax.f32 %v3552, %v3553
      %v3555 = vsub.f32 %v3491, %v3505
      %v3556 = vsub.f32 %v3492, %v3512
      %v3557 = vsub.f32 %v3493, %v3519
      %v3558 = vsub.f32 %v3494, %v3526
      %v3559 = vsub.f32 %v3495, %v3533
      %v3560 = vsub.f32 %v3496, %v3540
      %v3561 = vsub.f32 %v3497, %v3547
      %v3562 = vsub.f32 %v3498, %v3554
      %v3563 = vmul.f32 %v3555, 100.0
      %v3564 = vmul.f32 %v3556, 100.0
      %v3565 = vmul.f32 %v3557, 100.0
      %v3566 = vmul.f32 %v3558, 100.0
      %v3567 = vmul.f32 %v3559, 100.0
      %v3568 = vmul.f32 %v3560, 100.0
      %v3569 = vmul.f32 %v3561, 100.0
      %v3570 = vmul.f32 %v3562, 100.0
      %v3571 = vmul.f32 %v3563, 1.442695
      %v3572 = vpow.pop %v3571
      %v3573 = vmul.f32 %v3564, 1.442695
      %v3574 = vpow.pop %v3573
      %v3575 = vmul.f32 %v3565, 1.442695
      %v3576 = vpow.pop %v3575
      %v3577 = vmul.f32 %v3566, 1.442695
      %v3578 = vpow.pop %v3577
      %v3579 = vmul.f32 %v3567, 1.442695
      %v3580 = vpow.pop %v3579
      %v3581 = vmul.f32 %v3568, 1.442695
      %v3582 = vpow.pop %v3581
      %v3583 = vmul.f32 %v3569, 1.442695
      %v3584 = vpow.pop %v3583
      %v3585 = vmul.f32 %v3570, 1.442695
      %v3586 = vpow.pop %v3585
      %v3587 = vmul.f32 %v3475, %v3572
      %v3588 = vmul.f32 %v3476, %v3574
      %v3589 = vmul.f32 %v3477, %v3576
      %v3590 = vmul.f32 %v3478, %v3578
      %v3591 = vmul.f32 %v3479, %v3580
      %v3592 = vmul.f32 %v3480, %v3582
      %v3593 = vmul.f32 %v3481, %v3584
      %v3594 = vmul.f32 %v3482, %v3586
      %v3595 = vsel %vm416, %v3587, 0.0
      %v3596 = vrot.slane %v3595, 4
      %v3597 = vadd.f32 %v3595, %v3596
      %v3598 = vrot.slane %v3597, 2
      %v3599 = vadd.f32 %v3597, %v3598
      %v3600 = vrot.slane %v3599, 1
      %v3601 = vadd.f32 %v3599, %v3600
      %v3602 = vsel %vm416, %v3588, 0.0
      %v3603 = vrot.slane %v3602, 4
      %v3604 = vadd.f32 %v3602, %v3603
      %v3605 = vrot.slane %v3604, 2
      %v3606 = vadd.f32 %v3604, %v3605
      %v3607 = vrot.slane %v3606, 1
      %v3608 = vadd.f32 %v3606, %v3607
      %v3609 = vsel %vm416, %v3589, 0.0
      %v3610 = vrot.slane %v3609, 4
      %v3611 = vadd.f32 %v3609, %v3610
      %v3612 = vrot.slane %v3611, 2
      %v3613 = vadd.f32 %v3611, %v3612
      %v3614 = vrot.slane %v3613, 1
      %v3615 = vadd.f32 %v3613, %v3614
      %v3616 = vsel %vm416, %v3590, 0.0
      %v3617 = vrot.slane %v3616, 4
      %v3618 = vadd.f32 %v3616, %v3617
      %v3619 = vrot.slane %v3618, 2
      %v3620 = vadd.f32 %v3618, %v3619
      %v3621 = vrot.slane %v3620, 1
      %v3622 = vadd.f32 %v3620, %v3621
      %v3623 = vsel %vm416, %v3591, 0.0
      %v3624 = vrot.slane %v3623, 4
      %v3625 = vadd.f32 %v3623, %v3624
      %v3626 = vrot.slane %v3625, 2
      %v3627 = vadd.f32 %v3625, %v3626
      %v3628 = vrot.slane %v3627, 1
      %v3629 = vadd.f32 %v3627, %v3628
      %v3630 = vsel %vm416, %v3592, 0.0
      %v3631 = vrot.slane %v3630, 4
      %v3632 = vadd.f32 %v3630, %v3631
      %v3633 = vrot.slane %v3632, 2
      %v3634 = vadd.f32 %v3632, %v3633
      %v3635 = vrot.slane %v3634, 1
      %v3636 = vadd.f32 %v3634, %v3635
      %v3637 = vsel %vm416, %v3593, 0.0
      %v3638 = vrot.slane %v3637, 4
      %v3639 = vadd.f32 %v3637, %v3638
      %v3640 = vrot.slane %v3639, 2
      %v3641 = vadd.f32 %v3639, %v3640
      %v3642 = vrot.slane %v3641, 1
      %v3643 = vadd.f32 %v3641, %v3642
      %v3644 = vsel %vm416, %v3594, 0.0
      %v3645 = vrot.slane %v3644, 4
      %v3646 = vadd.f32 %v3644, %v3645
      %v3647 = vrot.slane %v3646, 2
      %v3648 = vadd.f32 %v3646, %v3647
      %v3649 = vrot.slane %v3648, 1
      %v3650 = vadd.f32 %v3648, %v3649
      %v3651 = vsel %vm416, %v3572, 0.0
      %v3652 = vrot.slane %v3651, 4
      %v3653 = vadd.f32 %v3651, %v3652
      %v3654 = vrot.slane %v3653, 2
      %v3655 = vadd.f32 %v3653, %v3654
      %v3656 = vrot.slane %v3655, 1
      %v3657 = vadd.f32 %v3655, %v3656
      %v3658 = vsel %vm416, %v3574, 0.0
      %v3659 = vrot.slane %v3658, 4
      %v3660 = vadd.f32 %v3658, %v3659
      %v3661 = vrot.slane %v3660, 2
      %v3662 = vadd.f32 %v3660, %v3661
      %v3663 = vrot.slane %v3662, 1
      %v3664 = vadd.f32 %v3662, %v3663
      %v3665 = vsel %vm416, %v3576, 0.0
      %v3666 = vrot.slane %v3665, 4
      %v3667 = vadd.f32 %v3665, %v3666
      %v3668 = vrot.slane %v3667, 2
      %v3669 = vadd.f32 %v3667, %v3668
      %v3670 = vrot.slane %v3669, 1
      %v3671 = vadd.f32 %v3669, %v3670
      %v3672 = vsel %vm416, %v3578, 0.0
      %v3673 = vrot.slane %v3672, 4
      %v3674 = vadd.f32 %v3672, %v3673
      %v3675 = vrot.slane %v3674, 2
      %v3676 = vadd.f32 %v3674, %v3675
      %v3677 = vrot.slane %v3676, 1
      %v3678 = vadd.f32 %v3676, %v3677
      %v3679 = vsel %vm416, %v3580, 0.0
      %v3680 = vrot.slane %v3679, 4
      %v3681 = vadd.f32 %v3679, %v3680
      %v3682 = vrot.slane %v3681, 2
      %v3683 = vadd.f32 %v3681, %v3682
      %v3684 = vrot.slane %v3683, 1
      %v3685 = vadd.f32 %v3683, %v3684
      %v3686 = vsel %vm416, %v3582, 0.0
      %v3687 = vrot.slane %v3686, 4
      %v3688 = vadd.f32 %v3686, %v3687
      %v3689 = vrot.slane %v3688, 2
      %v3690 = vadd.f32 %v3688, %v3689
      %v3691 = vrot.slane %v3690, 1
      %v3692 = vadd.f32 %v3690, %v3691
      %v3693 = vsel %vm416, %v3584, 0.0
      %v3694 = vrot.slane %v3693, 4
      %v3695 = vadd.f32 %v3693, %v3694
      %v3696 = vrot.slane %v3695, 2
      %v3697 = vadd.f32 %v3695, %v3696
      %v3698 = vrot.slane %v3697, 1
      %v3699 = vadd.f32 %v3697, %v3698
      %v3700 = vsel %vm416, %v3586, 0.0
      %v3701 = vrot.slane %v3700, 4
      %v3702 = vadd.f32 %v3700, %v3701
      %v3703 = vrot.slane %v3702, 2
      %v3704 = vadd.f32 %v3702, %v3703
      %v3705 = vrot.slane %v3704, 1
      %v3706 = vadd.f32 %v3704, %v3705
      %v3707 = vrcp.pop %v3657
      %v3708 = vmul.f32 %v3601, %v3707
      %v3709 = vrcp.pop %v3664
      %v3710 = vmul.f32 %v3608, %v3709
      %v3711 = vrcp.pop %v3671
      %v3712 = vmul.f32 %v3615, %v3711
      %v3713 = vrcp.pop %v3678
      %v3714 = vmul.f32 %v3622, %v3713
      %v3715 = vrcp.pop %v3685
      %v3716 = vmul.f32 %v3629, %v3715
      %v3717 = vrcp.pop %v3692
      %v3718 = vmul.f32 %v3636, %v3717
      %v3719 = vrcp.pop %v3699
      %v3720 = vmul.f32 %v3643, %v3719
      %v3721 = vrcp.pop %v3706
      %v3722 = vmul.f32 %v3650, %v3721
      %v3723 = vrcp.pop %v3435
      %v3724 = vmul.f32 %v3459, %v3723
      %v3725 = vrcp.pop %v3436
      %v3726 = vmul.f32 %v3460, %v3725
      %v3727 = vrcp.pop %v3437
      %v3728 = vmul.f32 %v3461, %v3727
      %v3729 = vrcp.pop %v3438
      %v3730 = vmul.f32 %v3462, %v3729
      %v3731 = vrcp.pop %v3439
      %v3732 = vmul.f32 %v3463, %v3731
      %v3733 = vrcp.pop %v3440
      %v3734 = vmul.f32 %v3464, %v3733
      %v3735 = vrcp.pop %v3441
      %v3736 = vmul.f32 %v3465, %v3735
      %v3737 = vrcp.pop %v3442
      %v3738 = vmul.f32 %v3466, %v3737
      %v3739 = vadd.f32 %v3708, %v3724
      %v3740 = vadd.f32 %v3710, %v3726
      %v3741 = vadd.f32 %v3712, %v3728
      %v3742 = vadd.f32 %v3714, %v3730
      %v3743 = vadd.f32 %v3716, %v3732
      %v3744 = vadd.f32 %v3718, %v3734
      %v3745 = vadd.f32 %v3720, %v3736
      %v3746 = vadd.f32 %v3722, %v3738
      %v3747 = vmul.f32 %v3739, 0.5
      %v3748 = vmul.f32 %v3740, 0.5
      %v3749 = vmul.f32 %v3741, 0.5
      %v3750 = vmul.f32 %v3742, 0.5
      %v3751 = vmul.f32 %v3743, 0.5
      %v3752 = vmul.f32 %v3744, 0.5
      %v3753 = vmul.f32 %v3745, 0.5
      %v3754 = vmul.f32 %v3746, 0.5
      %vm3763 = vcmask 1041409
      %v3764 = vsel %vm3763, %v3748, %v3747
      %vm3765 = vcmask 1042434
      %v3766 = vsel %vm3765, %v3749, %v3764
      %vm3767 = vcmask 1043459
      %v3768 = vsel %vm3767, %v3750, %v3766
      %vm3769 = vcmask 1044484
      %v3770 = vsel %vm3769, %v3751, %v3768
      %vm3771 = vcmask 1045509
      %v3772 = vsel %vm3771, %v3752, %v3770
      %vm3773 = vcmask 1046534
      %v3774 = vsel %vm3773, %v3753, %v3772
      %vm3775 = vcmask 1047559
      %v3776 = vsel %vm3775, %v3754, %v3774
      %3778 = vst.msk [vmem:[%s180] sm:$0xff] %vm416, %v3776
      %p3779 = scmp.lt.s32.totalorder %s17, 1
      %s3780 = scalar_select %p3779, %s17, 1
      %p3781 = scmp.lt.s32.totalorder %s18, 0
      %s3782 = scalar_select %p3781, %s18, 0
      %s3783 = sadd.s32 %s3782, %s3780
      %s3784 = smul.addr %s3783, 8
      %s3785 = scalar_lea.vmem %s2, %s3784
      // Predicated region
      $region29: #{tpu_custom_call.1} parent=27 // pred_check
        %p3786 = pneg %p97
      $region30: #{tpu_custom_call.1} parent=27 // pred_check_branch
        %3788 = sbr.rel (%p3786) target = $region32
      $region31: #{tpu_custom_call.1} parent=27 // pred_region
        _
      $region32: #{tpu_custom_call.1} parent=27 // pred_fallthru
        _
    $region28: #{tpu_custom_call.1} parent=5 // pred_fallthru
      _
    %p3789 = scmp.le.s32.totalorder 2, %s8
    // Predicated region
    $region33: #{tpu_custom_call.1} parent=5 // pred_check
      %p3790 = pneg %p3789
    $region34: #{tpu_custom_call.1} parent=5 // pred_check_branch
      %3792 = sbr.rel (%p3790) target = $region36
    $region35: #{tpu_custom_call.1} parent=5 // pred_region
      %s3793 = ssub.s32 %s8, 2
      // Predicated region
      $region37: #{tpu_custom_call.1} parent=35 // pred_check
        %p3794 = pneg %p103
      $region38: #{tpu_custom_call.1} parent=35 // pred_check_branch
        %3796 = sbr.rel (%p3794) target = $region40
      $region39: #{tpu_custom_call.1} parent=35 // pred_region
        %p3797 = scmp.lt.s32.totalorder %s19, 1
        %s3798 = scalar_select %p3797, %s19, 1
        %p3799 = scmp.lt.s32.totalorder %s20, 0
        %s3800 = scalar_select %p3799, %s20, 0
        %s3801 = sadd.s32 %s3800, %s3798
        %s3802 = smul.addr %s3801, 8
        %s3803 = scalar_lea.vmem %s2, %s3802
      $region40: #{tpu_custom_call.1} parent=35 // pred_fallthru
        _
    $region36: #{tpu_custom_call.1} parent=5 // pred_fallthru
      _
  $region6: #{tpu_custom_call.1} parent=0 // loop_footer
    %s12 = sadd.s32 1, %s8
  $region7: #{tpu_custom_call.1} parent=0 // loop_footer_branch
    %7 = sbr.rel target = $region3
  $region8: #{tpu_custom_call.1} parent=0 // loop_exit
    _

</llo_original>
